<compile_context>
chip_gen: v5e
topology: v5e:2x2
jax: 0.10.0
libtpu: 0.0.40
codegen_flags: <defaults>
</compile_context>

<pallas_src>
import math

import jax
import jax.numpy as jnp
from jax.experimental import pallas as pl
from jax.experimental.pallas import tpu as pltpu


# ----------------------------------------------------------------------------
# Pallas kernel: one grid step == TB batch elements; two lane-dense MXU matmuls.
# ----------------------------------------------------------------------------
def _res_graph_conv_kernel(
    x_ref,                  # (TB, J*Cin)   f32, lane-dense
    m1_ref, b1_ref,         # (J*Cin, J*H)  bf16 fused operator, (1, J*H) f32 fused bias
    m2_ref, b2_ref,         # (J*H, J*Cout) bf16 fused operator, (1, J*Cout) f32 fused bias
    o_ref,                  # (TB, J*Cout)  f32, lane-dense
):
    x = x_ref[...]                                            # f32, kept for residual

    # Layer 1: gconv + BN folded into one matmul; bias/ReLU in f32.
    g = jnp.dot(x.astype(jnp.bfloat16), m1_ref[...],
                preferred_element_type=jnp.float32)           # (TB, J*H)
    g = jnp.maximum(g + b1_ref[...], 0.0)                     # ReLU (Dropout = identity, eval)

    # Layer 2.
    y = jnp.dot(g.astype(jnp.bfloat16), m2_ref[...],
                preferred_element_type=jnp.float32)           # (TB, J*Cout)
    y = jnp.maximum(y + b2_ref[...], 0.0)

    # Residual add in f32 with the un-quantized input.
    o_ref[...] = x + y


def _pick_tb(B, cap=512):
    """Rows per grid step: large (amortize ~0.35us/step overhead), sublane-aligned,
    and <= ceil(B/2) so the 'parallel' axis has >=2 steps for v7x's two TCs."""
    tb = max(1, (B + 1) // 2)
    tb = min(cap, tb)
    return max(8, ((tb + 7) // 8) * 8)


def res_graph_conv_pallas(x, m1, b1, m2, b2, *, tb_cap=512):
    B, J, Cin = x.shape
    JC = J * Cin
    JH = m1.shape[1]
    JCo = m2.shape[1]
    assert m1.shape[0] == JC and m2.shape[0] == JH
    assert JCo == JC, "residual add requires input_dim == output_dim"

    TB = _pick_tb(B, tb_cap)
    Bp = -(-B // TB) * TB                       # pad batch to a multiple of TB
    x2 = x.reshape(B, JC)                       # lane-dense HBM layout (last dim J*Cin)
    if Bp != B:
        x2 = jnp.pad(x2, ((0, Bp - B), (0, 0)))

    grid = (Bp // TB,)
    full2 = lambda shape: pl.BlockSpec(shape, lambda i: (0, 0))   # resident params

    flops = 2 * Bp * (JC * JH + JH * JCo)
    bytes_accessed = (4 * Bp * (JC + JCo)                 # x in / out (f32)
                      + 2 * (JC * JH + JH * JCo)          # bf16 fused weights
                      + 4 * (JH + JCo))                   # fused biases

    out2 = pl.pallas_call(
        _res_graph_conv_kernel,
        out_shape=jax.ShapeDtypeStruct((Bp, JCo), jnp.float32),
        grid_spec=pltpu.PrefetchScalarGridSpec(
            num_scalar_prefetch=0,
            grid=grid,
            in_specs=[
                pl.BlockSpec((TB, JC), lambda i: (i, 0)),  # x tile (lane-dense)
                full2((JC, JH)), full2((1, JH)),           # fused layer-1 weight / bias
                full2((JH, JCo)), full2((1, JCo)),         # fused layer-2 weight / bias
            ],
            out_specs=pl.BlockSpec((TB, JCo), lambda i: (i, 0)),
        ),
        compiler_params=pltpu.CompilerParams(dimension_semantics=("parallel",)),
        cost_estimate=pl.CostEstimate(flops=flops, transcendentals=0,
                                      bytes_accessed=bytes_accessed),
    )(x2, m1, b1, m2, b2)

    return out2[:B].reshape(B, J, JCo // J)


# ----------------------------------------------------------------------------
# Offline folding: SemGraphConv + BatchNorm(eval) -> one dense (J*Cin, J*Cout)
# operator and a fused bias.  Pure algebra; preserves the module semantics.
# ----------------------------------------------------------------------------
def fold_gconv_bn(soft_adj, W, bias, bn_scale, bn_shift):
    J = soft_adj.shape[0]
    eye = jnp.eye(J, dtype=jnp.float32)
    a_diag = soft_adj * eye
    a_off = soft_adj * (1.0 - eye)
    # M[(j,c),(i,h)] = a_diag[i,j]*W0[c,h] + a_off[i,j]*W1[c,h]
    M = (jnp.einsum('ij,ch->jcih', a_diag, W[0])
         + jnp.einsum('ij,ch->jcih', a_off, W[1]))
    Cin, Cout = W.shape[1], W.shape[2]
    M = M.reshape(J * Cin, J * Cout) * jnp.tile(bn_scale, J)[None, :]   # fold BN scale
    b = jnp.tile(bias * bn_scale + bn_shift, J)[None, :]                # fused bias/shift
    return M.astype(jnp.bfloat16), b.astype(jnp.float32)


# ----------------------------------------------------------------------------
# Parameter setup (deterministic, mirrors the PyTorch module __init__ shapes).
# ----------------------------------------------------------------------------
def _xavier_uniform(key, shape, gain=1.414):
    fan_in = shape[1] * shape[2]
    fan_out = shape[0] * shape[2]
    bound = gain * math.sqrt(6.0 / (fan_in + fan_out))
    return jax.random.uniform(key, shape, jnp.float32, -bound, bound)


def _sem_graph_conv_params(key, in_dim, out_dim):
    kw, kb = jax.random.split(key)
    W = _xavier_uniform(kw, (2, in_dim, out_dim))
    stdv = 1.0 / math.sqrt(out_dim)
    bias = jax.random.uniform(kb, (out_dim,), jnp.float32, -stdv, stdv)
    return W, bias


def _softmax_adj(adj):
    mask = adj > 0
    logits = jnp.where(mask, jnp.float32(1.0), jnp.float32(-9e15))
    return jax.nn.softmax(logits, axis=1)


def _bn_eval_scale_shift(out_dim, eps=1e-5):
    gamma = jnp.ones((out_dim,), jnp.float32)
    beta = jnp.zeros((out_dim,), jnp.float32)
    mean = jnp.zeros((out_dim,), jnp.float32)
    var = jnp.ones((out_dim,), jnp.float32)
    scale = gamma / jnp.sqrt(var + eps)
    shift = beta - mean * scale
    return scale, shift


# ----------------------------------------------------------------------------
# Pure-JAX f32 reference using the ORIGINAL (unfused) parameterization.
# ----------------------------------------------------------------------------
def _reference(x, soft1, soft2, W1, bias1, s1, t1, W2, bias2, s2, t2):
    J = x.shape[1]
    eye = jnp.eye(J, dtype=jnp.float32)

    def graph_conv(z, soft, W, bias, scale, shift):
        h0 = jnp.einsum('bjc,ch->bjh', z, W[0])
        h1 = jnp.einsum('bjc,ch->bjh', z, W[1])
        g = (jnp.einsum('ij,bjh->bih', soft * eye, h0)
             + jnp.einsum('ij,bjh->bih', soft * (1.0 - eye), h1) + bias)
        g = g * scale + shift
        return jnp.maximum(g, 0.0)

    out = graph_conv(x, soft1, W1, bias1, s1, t1)
    out = graph_conv(out, soft2, W2, bias2, s2, t2)
    return x + out


if __name__ == "__main__":
    B, J, C, H = 2, 16, 32, 64   # batch, joints, input_dim==output_dim, hid_dim

    key = jax.random.PRNGKey(0)
    kx, k1, k2 = jax.random.split(key, 3)

    x = jax.random.normal(kx, (B, J, C), jnp.float32)

    # Synthetic skeleton-like adjacency (chain + self loops), symmetric.
    eye = jnp.eye(J, dtype=jnp.float32)
    chain = jnp.zeros((J, J), jnp.float32)
    idx = jnp.arange(J - 1)
    chain = chain.at[idx, idx + 1].set(1.0).at[idx + 1, idx].set(1.0)
    adj_n = chain + eye

    soft1 = _softmax_adj(adj_n)
    soft2 = _softmax_adj(adj_n)
    W1, bias1 = _sem_graph_conv_params(k1, C, H)
    W2, bias2 = _sem_graph_conv_params(k2, H, C)
    s1, t1 = _bn_eval_scale_shift(H)
    s2, t2 = _bn_eval_scale_shift(C)

    # Fold each (SemGraphConv + BN-eval) into one dense operator + fused bias.
    m1, b1f = fold_gconv_bn(soft1, W1, bias1, s1, t1)
    m2, b2f = fold_gconv_bn(soft2, W2, bias2, s2, t2)

    out = res_graph_conv_pallas(x, m1, b1f, m2, b2f)
    out = jax.block_until_ready(out)

    ref = _reference(x, soft1, soft2, W1, bias1, s1, t1, W2, bias2, s2, t2)
    assert out.shape == (B, J, C)
    # Matmul operands are bf16 (f32 accumulation); observed error ~1e-3, so 2e-2 is ample.
    assert jnp.allclose(out, ref, atol=2e-2, rtol=2e-2), "mismatch vs JAX reference"

    print("KERNEL_OK")
</pallas_src>

<mosaic_0001>
module attributes {stable_mosaic.version = 11 : i64} {
  func.func @_res_graph_conv_kernel(%arg0: i32, %arg1: memref<8x512xf32, #tpu.memory_space<vmem>>, %arg2: memref<512x1024xbf16, #tpu.memory_space<vmem>>, %arg3: memref<1x1024xf32, #tpu.memory_space<vmem>>, %arg4: memref<1024x512xbf16, #tpu.memory_space<vmem>>, %arg5: memref<1x512xf32, #tpu.memory_space<vmem>>, %arg6: memref<8x512xf32, #tpu.memory_space<vmem>>) attributes {dimension_semantics = [#tpu.dimension_semantics<parallel>], iteration_bounds = array<i64: 1>, scalar_prefetch = 0 : i64, scratch_operands = 0 : i64, tpu.core_type = #tpu.core_type<tc>, window_params = [{transform_indices = @transform_0, window_bounds = array<i64: 8, 512>}, {pipeline_mode = #tpu.pipeline_mode<synchronous>, transform_indices = @transform_1, window_bounds = array<i64: 512, 1024>}, {pipeline_mode = #tpu.pipeline_mode<synchronous>, transform_indices = @transform_2, window_bounds = array<i64: 1, 1024>}, {pipeline_mode = #tpu.pipeline_mode<synchronous>, transform_indices = @transform_3, window_bounds = array<i64: 1024, 512>}, {pipeline_mode = #tpu.pipeline_mode<synchronous>, transform_indices = @transform_4, window_bounds = array<i64: 1, 512>}, {transform_indices = @transform_5, window_bounds = array<i64: 8, 512>}]} {
    %c0 = arith.constant 0 : index
    %c0_0 = arith.constant 0 : index
    %0 = vector.load %arg1[%c0, %c0_0] : memref<8x512xf32, #tpu.memory_space<vmem>>, vector<8x512xf32>
    %1 = arith.truncf %0 : vector<8x512xf32> to vector<8x512xbf16>
    %c0_1 = arith.constant 0 : index
    %c0_2 = arith.constant 0 : index
    %2 = vector.load %arg2[%c0_1, %c0_2] : memref<512x1024xbf16, #tpu.memory_space<vmem>>, vector<512x1024xbf16>
    %cst = arith.constant dense<0.000000e+00> : vector<8x1024xf32>
    %3 = tpu.matmul %1, %2, %cst {dimension_numbers = #tpu.dot_dimension_numbers<[1], [0], [0], [1], [0, 0, 1, 1], [], []>} : vector<8x512xbf16>, vector<512x1024xbf16>, vector<8x1024xf32> -> vector<8x1024xf32>
    %c0_3 = arith.constant 0 : index
    %c0_4 = arith.constant 0 : index
    %4 = vector.load %arg3[%c0_3, %c0_4] : memref<1x1024xf32, #tpu.memory_space<vmem>>, vector<1x1024xf32>
    %5 = vector.broadcast %4 : vector<1x1024xf32> to vector<8x1024xf32>
    %6 = arith.addf %3, %5 : vector<8x1024xf32>
    %cst_5 = arith.constant 0.000000e+00 : f32
    %7 = vector.broadcast %cst_5 : f32 to vector<8x1024xf32>
    %8 = arith.maximumf %6, %7 : vector<8x1024xf32>
    %9 = arith.truncf %8 : vector<8x1024xf32> to vector<8x1024xbf16>
    %c0_6 = arith.constant 0 : index
    %c0_7 = arith.constant 0 : index
    %10 = vector.load %arg4[%c0_6, %c0_7] : memref<1024x512xbf16, #tpu.memory_space<vmem>>, vector<1024x512xbf16>
    %cst_8 = arith.constant dense<0.000000e+00> : vector<8x512xf32>
    %11 = tpu.matmul %9, %10, %cst_8 {dimension_numbers = #tpu.dot_dimension_numbers<[1], [0], [0], [1], [0, 0, 1, 1], [], []>} : vector<8x1024xbf16>, vector<1024x512xbf16>, vector<8x512xf32> -> vector<8x512xf32>
    %c0_9 = arith.constant 0 : index
    %c0_10 = arith.constant 0 : index
    %12 = vector.load %arg5[%c0_9, %c0_10] : memref<1x512xf32, #tpu.memory_space<vmem>>, vector<1x512xf32>
    %13 = vector.broadcast %12 : vector<1x512xf32> to vector<8x512xf32>
    %14 = arith.addf %11, %13 : vector<8x512xf32>
    %cst_11 = arith.constant 0.000000e+00 : f32
    %15 = vector.broadcast %cst_11 : f32 to vector<8x512xf32>
    %16 = arith.maximumf %14, %15 : vector<8x512xf32>
    %17 = arith.addf %0, %16 : vector<8x512xf32>
    %c0_12 = arith.constant 0 : index
    %c0_13 = arith.constant 0 : index
    %18 = vector.load %arg6[%c0_12, %c0_13] : memref<8x512xf32, #tpu.memory_space<vmem>>, vector<8x512xf32>
    tpu.vector_store %arg6[%c0_12, %c0_13], %17 {strides = array<i32>} : memref<8x512xf32, #tpu.memory_space<vmem>>, vector<8x512xf32>,
    return
  }
  func.func @transform_0(%arg0: i32) -> (i32, i32) {
    %c0_i32 = arith.constant 0 : i32
    %c0_i32_0 = arith.constant 0 : i32
    return %arg0, %c0_i32 : i32, i32
  }
  func.func @transform_1(%arg0: i32) -> (i32, i32) {
    %c0_i32 = arith.constant 0 : i32
    %c0_i32_0 = arith.constant 0 : i32
    %c0_i32_1 = arith.constant 0 : i32
    return %c0_i32, %c0_i32_0 : i32, i32
  }
  func.func @transform_2(%arg0: i32) -> (i32, i32) {
    %c0_i32 = arith.constant 0 : i32
    %c0_i32_0 = arith.constant 0 : i32
    %c0_i32_1 = arith.constant 0 : i32
    return %c0_i32, %c0_i32_0 : i32, i32
  }
  func.func @transform_3(%arg0: i32) -> (i32, i32) {
    %c0_i32 = arith.constant 0 : i32
    %c0_i32_0 = arith.constant 0 : i32
    %c0_i32_1 = arith.constant 0 : i32
    return %c0_i32, %c0_i32_0 : i32, i32
  }
  func.func @transform_4(%arg0: i32) -> (i32, i32) {
    %c0_i32 = arith.constant 0 : i32
    %c0_i32_0 = arith.constant 0 : i32
    %c0_i32_1 = arith.constant 0 : i32
    return %c0_i32, %c0_i32_0 : i32, i32
  }
  func.func @transform_5(%arg0: i32) -> (i32, i32) {
    %c0_i32 = arith.constant 0 : i32
    %c0_i32_0 = arith.constant 0 : i32
    return %arg0, %c0_i32 : i32, i32
  }
}

</mosaic_0001>

<llo_original>
// kernel: tpu_custom_call.1
$region0: #{tpu_custom_call.1}
  #allocation0 [shape = 'u32[]', space=smem, size = 0x4, offset = 0x4, fixed_abs, tag = 'smem constant byte address 0x4 - core index']
  #allocation1 [shape = 'u32[72,128]{1,0:T(1,128)}', space=vmem, size = 0x9000, scoped, tag = 'internal scratch']
  %s0 = inlined_call_operand.hbm [shape: f32[8,512], index: 0, kind: input, shape index: {}]
  %s1 = inlined_call_operand.hbm [shape: bf16[512,1024], index: 1, kind: input, shape index: {}]
  %s2 = inlined_call_operand.hbm [shape: f32[1,1024], index: 2, kind: input, shape index: {}]
  %s3 = inlined_call_operand.hbm [shape: bf16[1024,512], index: 3, kind: input, shape index: {}]
  %s4 = inlined_call_operand.hbm [shape: f32[1,512], index: 4, kind: input, shape index: {}]
  %s5 = inlined_call_operand.hbm [shape: f32[8,512], index: 5, kind: output, shape index: {}]
  %s6 = sld [smem:[#allocation0]]
  $region50: #{tpu_custom_call.1} parent=0
    _
  %s8 = ssub.s32 1, %s6
  %s9 = scalar_select 0, %s8, %s6
  $region1: #{tpu_custom_call.1} parent=0
    #allocation2 [shape = 'u8[16384]{0}', space=vmem, size = 0x4000, scoped, tag = 'input window, operand 0, single buffered']
    #allocation3 [shape = 's32[1]{0}', space=sflag, size = 0x4, scoped, tag = 'scoped memory for tpu_custom_call.1']
    #allocation4 [shape = 's32[1]{0}', space=sflag, size = 0x4, scoped, tag = 'scoped memory for tpu_custom_call.1']
    #allocation5 [shape = 'u8[1048576]{0}', space=vmem, size = 0x100000, scoped, tag = 'input window, operand 1, single buffered']
    #allocation6 [shape = 's32[1]{0}', space=sflag, size = 0x4, scoped, tag = 'scoped memory for tpu_custom_call.1']
    #allocation7 [shape = 'u8[4096]{0}', space=vmem, size = 0x1000, scoped, tag = 'input window, operand 2, single buffered']
    #allocation8 [shape = 'u8[1048576]{0}', space=vmem, size = 0x100000, scoped, tag = 'input window, operand 3, single buffered']
    #allocation9 [shape = 's32[1]{0}', space=sflag, size = 0x4, scoped, tag = 'scoped memory for tpu_custom_call.1']
    #allocation10 [shape = 'u8[2048]{0}', space=vmem, size = 0x800, scoped, tag = 'input window, operand 4, single buffered']
    #allocation11 [shape = 'u8[16384]{0}', space=vmem, size = 0x4000, scoped, tag = 'output window, operand 0, single buffered']
    %10 = vsyncpa [#allocation3], 0
    %11 = vsyncpa [#allocation6], 0
    %12 = vsyncpa [#allocation9], 0
    %13 = vsyncpa [#allocation4], 0
    // Predicated region
    $region2: #{tpu_custom_call.1} parent=1 // pred_check
      _
    $region3: #{tpu_custom_call.1} parent=1 // pred_check_branch
      %15 = sbr.rel (0) target = $region5
    $region4: #{tpu_custom_call.1} parent=1 // pred_region
      %17 = vsyncadd [#allocation3], 0
      %s19 = sshll.u32 %s0, 4
      %s20 = int_to_ptr.hbm [resolvable:$true] %s19
      %s21 = sshll.u32 [#allocation2], 4
      %s22 = int_to_ptr.vmem [resolvable:$true] %s21
      %24 = dma.hbm_to_vmem [thread:$0]  %s20, 512, %s22, [#allocation3]
    $region5: #{tpu_custom_call.1} parent=1 // pred_fallthru
      _
    // Predicated region
    $region6: #{tpu_custom_call.1} parent=1 // pred_check
      _
    $region7: #{tpu_custom_call.1} parent=1 // pred_check_branch
      %26 = sbr.rel (0) target = $region9
    $region8: #{tpu_custom_call.1} parent=1 // pred_region
      %28 = vsyncadd [#allocation6], 0
      %s29 = sshll.u32 %s1, 4
      %s30 = int_to_ptr.hbm [resolvable:$true] %s29
      %s31 = sshll.u32 [#allocation5], 4
      %s32 = int_to_ptr.vmem [resolvable:$true] %s31
      %37 = dma.hbm_to_vmem [thread:$0]  %s30, 32768, %s32, [#allocation6], 512, 512, 32
    $region9: #{tpu_custom_call.1} parent=1 // pred_fallthru
      _
    // Predicated region
    $region10: #{tpu_custom_call.1} parent=1 // pred_check
      _
    $region11: #{tpu_custom_call.1} parent=1 // pred_check_branch
      %39 = sbr.rel (0) target = $region13
    $region12: #{tpu_custom_call.1} parent=1 // pred_region
      %41 = vsyncadd [#allocation6], 0
      %s43 = sshll.u32 %s2, 4
      %s44 = int_to_ptr.hbm [resolvable:$true] %s43
      %s45 = sshll.u32 [#allocation7], 4
      %s46 = int_to_ptr.vmem [resolvable:$true] %s45
      %48 = dma.hbm_to_vmem [thread:$0]  %s44, 128, %s46, [#allocation6]
    $region13: #{tpu_custom_call.1} parent=1 // pred_fallthru
      _
    // Predicated region
    $region14: #{tpu_custom_call.1} parent=1 // pred_check
      _
    $region15: #{tpu_custom_call.1} parent=1 // pred_check_branch
      %50 = sbr.rel (0) target = $region17
    $region16: #{tpu_custom_call.1} parent=1 // pred_region
      %52 = vsyncadd [#allocation9], 0
      %s53 = sshll.u32 %s3, 4
      %s54 = int_to_ptr.hbm [resolvable:$true] %s53
      %s55 = sshll.u32 [#allocation8], 4
      %s56 = int_to_ptr.vmem [resolvable:$true] %s55
      %61 = dma.hbm_to_vmem [thread:$0]  %s54, 32768, %s56, [#allocation9], 256, 256, 16
    $region17: #{tpu_custom_call.1} parent=1 // pred_fallthru
      _
    // Predicated region
    $region18: #{tpu_custom_call.1} parent=1 // pred_check
      _
    $region19: #{tpu_custom_call.1} parent=1 // pred_check_branch
      %63 = sbr.rel (0) target = $region21
    $region20: #{tpu_custom_call.1} parent=1 // pred_region
      %65 = vsyncadd [#allocation9], 0
      %s67 = sshll.u32 %s4, 4
      %s68 = int_to_ptr.hbm [resolvable:$true] %s67
      %s69 = sshll.u32 [#allocation10], 4
      %s70 = int_to_ptr.vmem [resolvable:$true] %s69
      %72 = dma.hbm_to_vmem [thread:$0]  %s68, 64, %s70, [#allocation9]
    $region21: #{tpu_custom_call.1} parent=1 // pred_fallthru
      _
    // Predicated region
    $region22: #{tpu_custom_call.1} parent=1 // pred_check
      _
    $region23: #{tpu_custom_call.1} parent=1 // pred_check_branch
      %74 = sbr.rel (0) target = $region25
    $region24: #{tpu_custom_call.1} parent=1 // pred_region
      %76 = dma.done [#allocation3], 512
    $region25: #{tpu_custom_call.1} parent=1 // pred_fallthru
      _
    // Predicated region
    $region26: #{tpu_custom_call.1} parent=1 // pred_check
      _
    $region27: #{tpu_custom_call.1} parent=1 // pred_check_branch
      %78 = sbr.rel (0) target = $region29
    $region28: #{tpu_custom_call.1} parent=1 // pred_region
      %80 = dma.done [#allocation6], 32768
    $region29: #{tpu_custom_call.1} parent=1 // pred_fallthru
      _
    // Predicated region
    $region30: #{tpu_custom_call.1} parent=1 // pred_check
      _
    $region31: #{tpu_custom_call.1} parent=1 // pred_check_branch
      %82 = sbr.rel (0) target = $region33
    $region32: #{tpu_custom_call.1} parent=1 // pred_region
      %84 = dma.done [#allocation6], 128
    $region33: #{tpu_custom_call.1} parent=1 // pred_fallthru
      _
    // Predicated region
    $region34: #{tpu_custom_call.1} parent=1 // pred_check
      _
    $region35: #{tpu_custom_call.1} parent=1 // pred_check_branch
      %86 = sbr.rel (0) target = $region37
    $region36: #{tpu_custom_call.1} parent=1 // pred_region
      %88 = dma.done [#allocation9], 32768
    $region37: #{tpu_custom_call.1} parent=1 // pred_fallthru
      _
    // Predicated region
    $region38: #{tpu_custom_call.1} parent=1 // pred_check
      _
    $region39: #{tpu_custom_call.1} parent=1 // pred_check_branch
      %90 = sbr.rel (0) target = $region41
    $region40: #{tpu_custom_call.1} parent=1 // pred_region
      %92 = dma.done [#allocation9], 64
    $region41: #{tpu_custom_call.1} parent=1 // pred_fallthru
      _
    %v93 = vld [vmem:[#allocation2] sm:$0xff]
    %v94 = vld [vmem:[#allocation2 + $0x8] sm:$0xff]
    %v95 = vld [vmem:[#allocation2 + $0x10] sm:$0xff]
    %v96 = vld [vmem:[#allocation2 + $0x18] sm:$0xff]
    %v97 = vpack.c.bf16 %v93, %v93
    %v98 = vpack.c.bf16 %v94, %v94
    %v99 = vpack.c.bf16 %v95, %v95
    %v100 = vpack.c.bf16 %v96, %v96
    %v101 = vld [vmem:[#allocation5] sm:$0xff]
    %v102 = vld [vmem:[#allocation5 + $0x8] sm:$0xff]
    %v103 = vld [vmem:[#allocation5 + $0x10] sm:$0xff]
    %v104 = vld [vmem:[#allocation5 + $0x18] sm:$0xff]
    %v105 = vld [vmem:[#allocation5 + $0x20] sm:$0xff]
    %v106 = vld [vmem:[#allocation5 + $0x28] sm:$0xff]
    %v107 = vld [vmem:[#allocation5 + $0x30] sm:$0xff]
    %v108 = vld [vmem:[#allocation5 + $0x38] sm:$0xff]
    %v109 = vld [vmem:[#allocation5 + $0x40] sm:$0xff]
    %v110 = vld [vmem:[#allocation5 + $0x48] sm:$0xff]
    %v111 = vld [vmem:[#allocation5 + $0x50] sm:$0xff]
    %v112 = vld [vmem:[#allocation5 + $0x58] sm:$0xff]
    %v113 = vld [vmem:[#allocation5 + $0x60] sm:$0xff]
    %v114 = vld [vmem:[#allocation5 + $0x68] sm:$0xff]
    %v115 = vld [vmem:[#allocation5 + $0x70] sm:$0xff]
    %v116 = vld [vmem:[#allocation5 + $0x78] sm:$0xff]
    %v117 = vld [vmem:[#allocation5 + $0x80] sm:$0xff]
    %v118 = vld [vmem:[#allocation5 + $0x88] sm:$0xff]
    %v119 = vld [vmem:[#allocation5 + $0x90] sm:$0xff]
    %v120 = vld [vmem:[#allocation5 + $0x98] sm:$0xff]
    %v121 = vld [vmem:[#allocation5 + $0xa0] sm:$0xff]
    %v122 = vld [vmem:[#allocation5 + $0xa8] sm:$0xff]
    %v123 = vld [vmem:[#allocation5 + $0xb0] sm:$0xff]
    %v124 = vld [vmem:[#allocation5 + $0xb8] sm:$0xff]
    %v125 = vld [vmem:[#allocation5 + $0xc0] sm:$0xff]
    %v126 = vld [vmem:[#allocation5 + $0xc8] sm:$0xff]
    %v127 = vld [vmem:[#allocation5 + $0xd0] sm:$0xff]
    %v128 = vld [vmem:[#allocation5 + $0xd8] sm:$0xff]
    %v129 = vld [vmem:[#allocation5 + $0xe0] sm:$0xff]
    %v130 = vld [vmem:[#allocation5 + $0xe8] sm:$0xff]
    %v131 = vld [vmem:[#allocation5 + $0xf0] sm:$0xff]
    %v132 = vld [vmem:[#allocation5 + $0xf8] sm:$0xff]
    %v133 = vld [vmem:[#allocation5 + $0x100] sm:$0xff]
    %v134 = vld [vmem:[#allocation5 + $0x108] sm:$0xff]
    %v135 = vld [vmem:[#allocation5 + $0x110] sm:$0xff]
    %v136 = vld [vmem:[#allocation5 + $0x118] sm:$0xff]
    %v137 = vld [vmem:[#allocation5 + $0x120] sm:$0xff]
    %v138 = vld [vmem:[#allocation5 + $0x128] sm:$0xff]
    %v139 = vld [vmem:[#allocation5 + $0x130] sm:$0xff]
    %v140 = vld [vmem:[#allocation5 + $0x138] sm:$0xff]
    %v141 = vld [vmem:[#allocation5 + $0x140] sm:$0xff]
    %v142 = vld [vmem:[#allocation5 + $0x148] sm:$0xff]
    %v143 = vld [vmem:[#allocation5 + $0x150] sm:$0xff]
    %v144 = vld [vmem:[#allocation5 + $0x158] sm:$0xff]
    %v145 = vld [vmem:[#allocation5 + $0x160] sm:$0xff]
    %v146 = vld [vmem:[#allocation5 + $0x168] sm:$0xff]
    %v147 = vld [vmem:[#allocation5 + $0x170] sm:$0xff]
    %v148 = vld [vmem:[#allocation5 + $0x178] sm:$0xff]
    %v149 = vld [vmem:[#allocation5 + $0x180] sm:$0xff]
    %v150 = vld [vmem:[#allocation5 + $0x188] sm:$0xff]
    %v151 = vld [vmem:[#allocation5 + $0x190] sm:$0xff]
    %v152 = vld [vmem:[#allocation5 + $0x198] sm:$0xff]
    %v153 = vld [vmem:[#allocation5 + $0x1a0] sm:$0xff]
    %v154 = vld [vmem:[#allocation5 + $0x1a8] sm:$0xff]
    %v155 = vld [vmem:[#allocation5 + $0x1b0] sm:$0xff]
    %v156 = vld [vmem:[#allocation5 + $0x1b8] sm:$0xff]
    %v157 = vld [vmem:[#allocation5 + $0x1c0] sm:$0xff]
    %v158 = vld [vmem:[#allocation5 + $0x1c8] sm:$0xff]
    %v159 = vld [vmem:[#allocation5 + $0x1d0] sm:$0xff]
    %v160 = vld [vmem:[#allocation5 + $0x1d8] sm:$0xff]
    %v161 = vld [vmem:[#allocation5 + $0x1e0] sm:$0xff]
    %v162 = vld [vmem:[#allocation5 + $0x1e8] sm:$0xff]
    %v163 = vld [vmem:[#allocation5 + $0x1f0] sm:$0xff]
    %v164 = vld [vmem:[#allocation5 + $0x1f8] sm:$0xff]
    %v165 = vld [vmem:[#allocation5 + $0x200] sm:$0xff]
    %v166 = vld [vmem:[#allocation5 + $0x208] sm:$0xff]
    %v167 = vld [vmem:[#allocation5 + $0x210] sm:$0xff]
    %v168 = vld [vmem:[#allocation5 + $0x218] sm:$0xff]
    %v169 = vld [vmem:[#allocation5 + $0x220] sm:$0xff]
    %v170 = vld [vmem:[#allocation5 + $0x228] sm:$0xff]
    %v171 = vld [vmem:[#allocation5 + $0x230] sm:$0xff]
    %v172 = vld [vmem:[#allocation5 + $0x238] sm:$0xff]
    %v173 = vld [vmem:[#allocation5 + $0x240] sm:$0xff]
    %v174 = vld [vmem:[#allocation5 + $0x248] sm:$0xff]
    %v175 = vld [vmem:[#allocation5 + $0x250] sm:$0xff]
    %v176 = vld [vmem:[#allocation5 + $0x258] sm:$0xff]
    %v177 = vld [vmem:[#allocation5 + $0x260] sm:$0xff]
    %v178 = vld [vmem:[#allocation5 + $0x268] sm:$0xff]
    %v179 = vld [vmem:[#allocation5 + $0x270] sm:$0xff]
    %v180 = vld [vmem:[#allocation5 + $0x278] sm:$0xff]
    %v181 = vld [vmem:[#allocation5 + $0x280] sm:$0xff]
    %v182 = vld [vmem:[#allocation5 + $0x288] sm:$0xff]
    %v183 = vld [vmem:[#allocation5 + $0x290] sm:$0xff]
    %v184 = vld [vmem:[#allocation5 + $0x298] sm:$0xff]
    %v185 = vld [vmem:[#allocation5 + $0x2a0] sm:$0xff]
    %v186 = vld [vmem:[#allocation5 + $0x2a8] sm:$0xff]
    %v187 = vld [vmem:[#allocation5 + $0x2b0] sm:$0xff]
    %v188 = vld [vmem:[#allocation5 + $0x2b8] sm:$0xff]
    %v189 = vld [vmem:[#allocation5 + $0x2c0] sm:$0xff]
    %v190 = vld [vmem:[#allocation5 + $0x2c8] sm:$0xff]
    %v191 = vld [vmem:[#allocation5 + $0x2d0] sm:$0xff]
    %v192 = vld [vmem:[#allocation5 + $0x2d8] sm:$0xff]
    %v193 = vld [vmem:[#allocation5 + $0x2e0] sm:$0xff]
    %v194 = vld [vmem:[#allocation5 + $0x2e8] sm:$0xff]
    %v195 = vld [vmem:[#allocation5 + $0x2f0] sm:$0xff]
    %v196 = vld [vmem:[#allocation5 + $0x2f8] sm:$0xff]
    %v197 = vld [vmem:[#allocation5 + $0x300] sm:$0xff]
    %v198 = vld [vmem:[#allocation5 + $0x308] sm:$0xff]
    %v199 = vld [vmem:[#allocation5 + $0x310] sm:$0xff]
    %v200 = vld [vmem:[#allocation5 + $0x318] sm:$0xff]
    %v201 = vld [vmem:[#allocation5 + $0x320] sm:$0xff]
    %v202 = vld [vmem:[#allocation5 + $0x328] sm:$0xff]
    %v203 = vld [vmem:[#allocation5 + $0x330] sm:$0xff]
    %v204 = vld [vmem:[#allocation5 + $0x338] sm:$0xff]
    %v205 = vld [vmem:[#allocation5 + $0x340] sm:$0xff]
    %v206 = vld [vmem:[#allocation5 + $0x348] sm:$0xff]
    %v207 = vld [vmem:[#allocation5 + $0x350] sm:$0xff]
    %v208 = vld [vmem:[#allocation5 + $0x358] sm:$0xff]
    %v209 = vld [vmem:[#allocation5 + $0x360] sm:$0xff]
    %v210 = vld [vmem:[#allocation5 + $0x368] sm:$0xff]
    %v211 = vld [vmem:[#allocation5 + $0x370] sm:$0xff]
    %v212 = vld [vmem:[#allocation5 + $0x378] sm:$0xff]
    %v213 = vld [vmem:[#allocation5 + $0x380] sm:$0xff]
    %v214 = vld [vmem:[#allocation5 + $0x388] sm:$0xff]
    %v215 = vld [vmem:[#allocation5 + $0x390] sm:$0xff]
    %v216 = vld [vmem:[#allocation5 + $0x398] sm:$0xff]
    %v217 = vld [vmem:[#allocation5 + $0x3a0] sm:$0xff]
    %v218 = vld [vmem:[#allocation5 + $0x3a8] sm:$0xff]
    %v219 = vld [vmem:[#allocation5 + $0x3b0] sm:$0xff]
    %v220 = vld [vmem:[#allocation5 + $0x3b8] sm:$0xff]
    %v221 = vld [vmem:[#allocation5 + $0x3c0] sm:$0xff]
    %v222 = vld [vmem:[#allocation5 + $0x3c8] sm:$0xff]
    %v223 = vld [vmem:[#allocation5 + $0x3d0] sm:$0xff]
    %v224 = vld [vmem:[#allocation5 + $0x3d8] sm:$0xff]
    %v225 = vld [vmem:[#allocation5 + $0x3e0] sm:$0xff]
    %v226 = vld [vmem:[#allocation5 + $0x3e8] sm:$0xff]
    %v227 = vld [vmem:[#allocation5 + $0x3f0] sm:$0xff]
    %v228 = vld [vmem:[#allocation5 + $0x3f8] sm:$0xff]
    %v229 = vld [vmem:[#allocation5 + $0x400] sm:$0xff]
    %v230 = vld [vmem:[#allocation5 + $0x408] sm:$0xff]
    %v231 = vld [vmem:[#allocation5 + $0x410] sm:$0xff]
    %v232 = vld [vmem:[#allocation5 + $0x418] sm:$0xff]
    %v233 = vld [vmem:[#allocation5 + $0x420] sm:$0xff]
    %v234 = vld [vmem:[#allocation5 + $0x428] sm:$0xff]
    %v235 = vld [vmem:[#allocation5 + $0x430] sm:$0xff]
    %v236 = vld [vmem:[#allocation5 + $0x438] sm:$0xff]
    %v237 = vld [vmem:[#allocation5 + $0x440] sm:$0xff]
    %v238 = vld [vmem:[#allocation5 + $0x448] sm:$0xff]
    %v239 = vld [vmem:[#allocation5 + $0x450] sm:$0xff]
    %v240 = vld [vmem:[#allocation5 + $0x458] sm:$0xff]
    %v241 = vld [vmem:[#allocation5 + $0x460] sm:$0xff]
    %v242 = vld [vmem:[#allocation5 + $0x468] sm:$0xff]
    %v243 = vld [vmem:[#allocation5 + $0x470] sm:$0xff]
    %v244 = vld [vmem:[#allocation5 + $0x478] sm:$0xff]
    %v245 = vld [vmem:[#allocation5 + $0x480] sm:$0xff]
    %v246 = vld [vmem:[#allocation5 + $0x488] sm:$0xff]
    %v247 = vld [vmem:[#allocation5 + $0x490] sm:$0xff]
    %v248 = vld [vmem:[#allocation5 + $0x498] sm:$0xff]
    %v249 = vld [vmem:[#allocation5 + $0x4a0] sm:$0xff]
    %v250 = vld [vmem:[#allocation5 + $0x4a8] sm:$0xff]
    %v251 = vld [vmem:[#allocation5 + $0x4b0] sm:$0xff]
    %v252 = vld [vmem:[#allocation5 + $0x4b8] sm:$0xff]
    %v253 = vld [vmem:[#allocation5 + $0x4c0] sm:$0xff]
    %v254 = vld [vmem:[#allocation5 + $0x4c8] sm:$0xff]
    %v255 = vld [vmem:[#allocation5 + $0x4d0] sm:$0xff]
    %v256 = vld [vmem:[#allocation5 + $0x4d8] sm:$0xff]
    %v257 = vld [vmem:[#allocation5 + $0x4e0] sm:$0xff]
    %v258 = vld [vmem:[#allocation5 + $0x4e8] sm:$0xff]
    %v259 = vld [vmem:[#allocation5 + $0x4f0] sm:$0xff]
    %v260 = vld [vmem:[#allocation5 + $0x4f8] sm:$0xff]
    %v261 = vld [vmem:[#allocation5 + $0x500] sm:$0xff]
    %v262 = vld [vmem:[#allocation5 + $0x508] sm:$0xff]
    %v263 = vld [vmem:[#allocation5 + $0x510] sm:$0xff]
    %v264 = vld [vmem:[#allocation5 + $0x518] sm:$0xff]
    %v265 = vld [vmem:[#allocation5 + $0x520] sm:$0xff]
    %v266 = vld [vmem:[#allocation5 + $0x528] sm:$0xff]
    %v267 = vld [vmem:[#allocation5 + $0x530] sm:$0xff]
    %v268 = vld [vmem:[#allocation5 + $0x538] sm:$0xff]
    %v269 = vld [vmem:[#allocation5 + $0x540] sm:$0xff]
    %v270 = vld [vmem:[#allocation5 + $0x548] sm:$0xff]
    %v271 = vld [vmem:[#allocation5 + $0x550] sm:$0xff]
    %v272 = vld [vmem:[#allocation5 + $0x558] sm:$0xff]
    %v273 = vld [vmem:[#allocation5 + $0x560] sm:$0xff]
    %v274 = vld [vmem:[#allocation5 + $0x568] sm:$0xff]
    %v275 = vld [vmem:[#allocation5 + $0x570] sm:$0xff]
    %v276 = vld [vmem:[#allocation5 + $0x578] sm:$0xff]
    %v277 = vld [vmem:[#allocation5 + $0x580] sm:$0xff]
    %v278 = vld [vmem:[#allocation5 + $0x588] sm:$0xff]
    %v279 = vld [vmem:[#allocation5 + $0x590] sm:$0xff]
    %v280 = vld [vmem:[#allocation5 + $0x598] sm:$0xff]
    %v281 = vld [vmem:[#allocation5 + $0x5a0] sm:$0xff]
    %v282 = vld [vmem:[#allocation5 + $0x5a8] sm:$0xff]
    %v283 = vld [vmem:[#allocation5 + $0x5b0] sm:$0xff]
    %v284 = vld [vmem:[#allocation5 + $0x5b8] sm:$0xff]
    %v285 = vld [vmem:[#allocation5 + $0x5c0] sm:$0xff]
    %v286 = vld [vmem:[#allocation5 + $0x5c8] sm:$0xff]
    %v287 = vld [vmem:[#allocation5 + $0x5d0] sm:$0xff]
    %v288 = vld [vmem:[#allocation5 + $0x5d8] sm:$0xff]
    %v289 = vld [vmem:[#allocation5 + $0x5e0] sm:$0xff]
    %v290 = vld [vmem:[#allocation5 + $0x5e8] sm:$0xff]
    %v291 = vld [vmem:[#allocation5 + $0x5f0] sm:$0xff]
    %v292 = vld [vmem:[#allocation5 + $0x5f8] sm:$0xff]
    %v293 = vld [vmem:[#allocation5 + $0x600] sm:$0xff]
    %v294 = vld [vmem:[#allocation5 + $0x608] sm:$0xff]
    %v295 = vld [vmem:[#allocation5 + $0x610] sm:$0xff]
    %v296 = vld [vmem:[#allocation5 + $0x618] sm:$0xff]
    %v297 = vld [vmem:[#allocation5 + $0x620] sm:$0xff]
    %v298 = vld [vmem:[#allocation5 + $0x628] sm:$0xff]
    %v299 = vld [vmem:[#allocation5 + $0x630] sm:$0xff]
    %v300 = vld [vmem:[#allocation5 + $0x638] sm:$0xff]
    %v301 = vld [vmem:[#allocation5 + $0x640] sm:$0xff]
    %v302 = vld [vmem:[#allocation5 + $0x648] sm:$0xff]
    %v303 = vld [vmem:[#allocation5 + $0x650] sm:$0xff]
    %v304 = vld [vmem:[#allocation5 + $0x658] sm:$0xff]
    %v305 = vld [vmem:[#allocation5 + $0x660] sm:$0xff]
    %v306 = vld [vmem:[#allocation5 + $0x668] sm:$0xff]
    %v307 = vld [vmem:[#allocation5 + $0x670] sm:$0xff]
    %v308 = vld [vmem:[#allocation5 + $0x678] sm:$0xff]
    %v309 = vld [vmem:[#allocation5 + $0x680] sm:$0xff]
    %v310 = vld [vmem:[#allocation5 + $0x688] sm:$0xff]
    %v311 = vld [vmem:[#allocation5 + $0x690] sm:$0xff]
    %v312 = vld [vmem:[#allocation5 + $0x698] sm:$0xff]
    %v313 = vld [vmem:[#allocation5 + $0x6a0] sm:$0xff]
    %v314 = vld [vmem:[#allocation5 + $0x6a8] sm:$0xff]
    %v315 = vld [vmem:[#allocation5 + $0x6b0] sm:$0xff]
    %v316 = vld [vmem:[#allocation5 + $0x6b8] sm:$0xff]
    %v317 = vld [vmem:[#allocation5 + $0x6c0] sm:$0xff]
    %v318 = vld [vmem:[#allocation5 + $0x6c8] sm:$0xff]
    %v319 = vld [vmem:[#allocation5 + $0x6d0] sm:$0xff]
    %v320 = vld [vmem:[#allocation5 + $0x6d8] sm:$0xff]
    %v321 = vld [vmem:[#allocation5 + $0x6e0] sm:$0xff]
    %v322 = vld [vmem:[#allocation5 + $0x6e8] sm:$0xff]
    %v323 = vld [vmem:[#allocation5 + $0x6f0] sm:$0xff]
    %v324 = vld [vmem:[#allocation5 + $0x6f8] sm:$0xff]
    %v325 = vld [vmem:[#allocation5 + $0x700] sm:$0xff]
    %v326 = vld [vmem:[#allocation5 + $0x708] sm:$0xff]
    %v327 = vld [vmem:[#allocation5 + $0x710] sm:$0xff]
    %v328 = vld [vmem:[#allocation5 + $0x718] sm:$0xff]
    %v329 = vld [vmem:[#allocation5 + $0x720] sm:$0xff]
    %v330 = vld [vmem:[#allocation5 + $0x728] sm:$0xff]
    %v331 = vld [vmem:[#allocation5 + $0x730] sm:$0xff]
    %v332 = vld [vmem:[#allocation5 + $0x738] sm:$0xff]
    %v333 = vld [vmem:[#allocation5 + $0x740] sm:$0xff]
    %v334 = vld [vmem:[#allocation5 + $0x748] sm:$0xff]
    %v335 = vld [vmem:[#allocation5 + $0x750] sm:$0xff]
    %v336 = vld [vmem:[#allocation5 + $0x758] sm:$0xff]
    %v337 = vld [vmem:[#allocation5 + $0x760] sm:$0xff]
    %v338 = vld [vmem:[#allocation5 + $0x768] sm:$0xff]
    %v339 = vld [vmem:[#allocation5 + $0x770] sm:$0xff]
    %v340 = vld [vmem:[#allocation5 + $0x778] sm:$0xff]
    %v341 = vld [vmem:[#allocation5 + $0x780] sm:$0xff]
    %v342 = vld [vmem:[#allocation5 + $0x788] sm:$0xff]
    %v343 = vld [vmem:[#allocation5 + $0x790] sm:$0xff]
    %v344 = vld [vmem:[#allocation5 + $0x798] sm:$0xff]
    %v345 = vld [vmem:[#allocation5 + $0x7a0] sm:$0xff]
    %v346 = vld [vmem:[#allocation5 + $0x7a8] sm:$0xff]
    %v347 = vld [vmem:[#allocation5 + $0x7b0] sm:$0xff]
    %v348 = vld [vmem:[#allocation5 + $0x7b8] sm:$0xff]
    %v349 = vld [vmem:[#allocation5 + $0x7c0] sm:$0xff]
    %v350 = vld [vmem:[#allocation5 + $0x7c8] sm:$0xff]
    %v351 = vld [vmem:[#allocation5 + $0x7d0] sm:$0xff]
    %v352 = vld [vmem:[#allocation5 + $0x7d8] sm:$0xff]
    %v353 = vld [vmem:[#allocation5 + $0x7e0] sm:$0xff]
    %v354 = vld [vmem:[#allocation5 + $0x7e8] sm:$0xff]
    %v355 = vld [vmem:[#allocation5 + $0x7f0] sm:$0xff]
    %v356 = vld [vmem:[#allocation5 + $0x7f8] sm:$0xff]
    %v357 = vld [vmem:[#allocation7] sm:$0xff]
    %v359 = vperm.slane %v357, 0
    %v360 = vperm.slane %v357, 1
    %v361 = vperm.slane %v357, 2
    %v362 = vperm.slane %v357, 3
    %v363 = vperm.slane %v357, 4
    %v364 = vperm.slane %v357, 5
    %v365 = vperm.slane %v357, 6
    %v366 = vperm.slane %v357, 7
    %v631 = vunpack.c.l.b16 %v101
    %v632 = vunpack.c.h.b16 %v101
    %v633 = vunpack.c.l.b16 %v102
    %v634 = vunpack.c.h.b16 %v102
    %v635 = vunpack.c.l.b16 %v103
    %v636 = vunpack.c.h.b16 %v103
    %v637 = vunpack.c.l.b16 %v104
    %v638 = vunpack.c.h.b16 %v104
    %v639 = vunpack.c.l.b16 %v105
    %v640 = vunpack.c.h.b16 %v105
    %v641 = vunpack.c.l.b16 %v106
    %v642 = vunpack.c.h.b16 %v106
    %v643 = vunpack.c.l.b16 %v107
    %v644 = vunpack.c.h.b16 %v107
    %v645 = vunpack.c.l.b16 %v108
    %v646 = vunpack.c.h.b16 %v108
    %v647 = vunpack.c.l.b16 %v109
    %v648 = vunpack.c.h.b16 %v109
    %v649 = vunpack.c.l.b16 %v110
    %v650 = vunpack.c.h.b16 %v110
    %v651 = vunpack.c.l.b16 %v111
    %v652 = vunpack.c.h.b16 %v111
    %v653 = vunpack.c.l.b16 %v112
    %v654 = vunpack.c.h.b16 %v112
    %v655 = vunpack.c.l.b16 %v113
    %v656 = vunpack.c.h.b16 %v113
    %v657 = vunpack.c.l.b16 %v114
    %v658 = vunpack.c.h.b16 %v114
    %v659 = vunpack.c.l.b16 %v115
    %v660 = vunpack.c.h.b16 %v115
    %v661 = vunpack.c.l.b16 %v116
    %v662 = vunpack.c.h.b16 %v116
    %v663 = vunpack.c.l.b16 %v117
    %v664 = vunpack.c.h.b16 %v117
    %v665 = vunpack.c.l.b16 %v118
    %v666 = vunpack.c.h.b16 %v118
    %v667 = vunpack.c.l.b16 %v119
    %v668 = vunpack.c.h.b16 %v119
    %v669 = vunpack.c.l.b16 %v120
    %v670 = vunpack.c.h.b16 %v120
    %v671 = vunpack.c.l.b16 %v121
    %v672 = vunpack.c.h.b16 %v121
    %v673 = vunpack.c.l.b16 %v122
    %v674 = vunpack.c.h.b16 %v122
    %v675 = vunpack.c.l.b16 %v123
    %v676 = vunpack.c.h.b16 %v123
    %v677 = vunpack.c.l.b16 %v124
    %v678 = vunpack.c.h.b16 %v124
    %v679 = vunpack.c.l.b16 %v125
    %v680 = vunpack.c.h.b16 %v125
    %v681 = vunpack.c.l.b16 %v126
    %v682 = vunpack.c.h.b16 %v126
    %v683 = vunpack.c.l.b16 %v127
    %v684 = vunpack.c.h.b16 %v127
    %v685 = vunpack.c.l.b16 %v128
    %v686 = vunpack.c.h.b16 %v128
    %v687 = vunpack.c.l.b16 %v129
    %v688 = vunpack.c.h.b16 %v129
    %v689 = vunpack.c.l.b16 %v130
    %v690 = vunpack.c.h.b16 %v130
    %v691 = vunpack.c.l.b16 %v131
    %v692 = vunpack.c.h.b16 %v131
    %v693 = vunpack.c.l.b16 %v132
    %v694 = vunpack.c.h.b16 %v132
    %v695 = vunpack.c.l.b16 %v133
    %v696 = vunpack.c.h.b16 %v133
    %v697 = vunpack.c.l.b16 %v134
    %v698 = vunpack.c.h.b16 %v134
    %v699 = vunpack.c.l.b16 %v135
    %v700 = vunpack.c.h.b16 %v135
    %v701 = vunpack.c.l.b16 %v136
    %v702 = vunpack.c.h.b16 %v136
    %v703 = vunpack.c.l.b16 %v137
    %v704 = vunpack.c.h.b16 %v137
    %v705 = vunpack.c.l.b16 %v138
    %v706 = vunpack.c.h.b16 %v138
    %v707 = vunpack.c.l.b16 %v139
    %v708 = vunpack.c.h.b16 %v139
    %v709 = vunpack.c.l.b16 %v140
    %v710 = vunpack.c.h.b16 %v140
    %v711 = vunpack.c.l.b16 %v141
    %v712 = vunpack.c.h.b16 %v141
    %v713 = vunpack.c.l.b16 %v142
    %v714 = vunpack.c.h.b16 %v142
    %v715 = vunpack.c.l.b16 %v143
    %v716 = vunpack.c.h.b16 %v143
    %v717 = vunpack.c.l.b16 %v144
    %v718 = vunpack.c.h.b16 %v144
    %v719 = vunpack.c.l.b16 %v145
    %v720 = vunpack.c.h.b16 %v145
    %v721 = vunpack.c.l.b16 %v146
    %v722 = vunpack.c.h.b16 %v146
    %v723 = vunpack.c.l.b16 %v147
    %v724 = vunpack.c.h.b16 %v147
    %v725 = vunpack.c.l.b16 %v148
    %v726 = vunpack.c.h.b16 %v148
    %v727 = vunpack.c.l.b16 %v149
    %v728 = vunpack.c.h.b16 %v149
    %v729 = vunpack.c.l.b16 %v150
    %v730 = vunpack.c.h.b16 %v150
    %v731 = vunpack.c.l.b16 %v151
    %v732 = vunpack.c.h.b16 %v151
    %v733 = vunpack.c.l.b16 %v152
    %v734 = vunpack.c.h.b16 %v152
    %v735 = vunpack.c.l.b16 %v153
    %v736 = vunpack.c.h.b16 %v153
    %v737 = vunpack.c.l.b16 %v154
    %v738 = vunpack.c.h.b16 %v154
    %v739 = vunpack.c.l.b16 %v155
    %v740 = vunpack.c.h.b16 %v155
    %v741 = vunpack.c.l.b16 %v156
    %v742 = vunpack.c.h.b16 %v156
    %v743 = vunpack.c.l.b16 %v157
    %v744 = vunpack.c.h.b16 %v157
    %v745 = vunpack.c.l.b16 %v158
    %v746 = vunpack.c.h.b16 %v158
    %v747 = vunpack.c.l.b16 %v159
    %v748 = vunpack.c.h.b16 %v159
    %v749 = vunpack.c.l.b16 %v160
    %v750 = vunpack.c.h.b16 %v160
    %v751 = vunpack.c.l.b16 %v161
    %v752 = vunpack.c.h.b16 %v161
    %v753 = vunpack.c.l.b16 %v162
    %v754 = vunpack.c.h.b16 %v162
    %v755 = vunpack.c.l.b16 %v163
    %v756 = vunpack.c.h.b16 %v163
    %v757 = vunpack.c.l.b16 %v164
    %v758 = vunpack.c.h.b16 %v164
    %v759 = vunpack.c.l.b16 %v165
    %v760 = vunpack.c.h.b16 %v165
    %v761 = vunpack.c.l.b16 %v166
    %v762 = vunpack.c.h.b16 %v166
    %v763 = vunpack.c.l.b16 %v167
    %v764 = vunpack.c.h.b16 %v167
    %v765 = vunpack.c.l.b16 %v168
    %v766 = vunpack.c.h.b16 %v168
    %v767 = vunpack.c.l.b16 %v169
    %v768 = vunpack.c.h.b16 %v169
    %v769 = vunpack.c.l.b16 %v170
    %v770 = vunpack.c.h.b16 %v170
    %v771 = vunpack.c.l.b16 %v171
    %v772 = vunpack.c.h.b16 %v171
    %v773 = vunpack.c.l.b16 %v172
    %v774 = vunpack.c.h.b16 %v172
    %v775 = vunpack.c.l.b16 %v173
    %v776 = vunpack.c.h.b16 %v173
    %v777 = vunpack.c.l.b16 %v174
    %v778 = vunpack.c.h.b16 %v174
    %v779 = vunpack.c.l.b16 %v175
    %v780 = vunpack.c.h.b16 %v175
    %v781 = vunpack.c.l.b16 %v176
    %v782 = vunpack.c.h.b16 %v176
    %v783 = vunpack.c.l.b16 %v177
    %v784 = vunpack.c.h.b16 %v177
    %v785 = vunpack.c.l.b16 %v178
    %v786 = vunpack.c.h.b16 %v178
    %v787 = vunpack.c.l.b16 %v179
    %v788 = vunpack.c.h.b16 %v179
    %v789 = vunpack.c.l.b16 %v180
    %v790 = vunpack.c.h.b16 %v180
    %v791 = vunpack.c.l.b16 %v181
    %v792 = vunpack.c.h.b16 %v181
    %v793 = vunpack.c.l.b16 %v182
    %v794 = vunpack.c.h.b16 %v182
    %v795 = vunpack.c.l.b16 %v183
    %v796 = vunpack.c.h.b16 %v183
    %v797 = vunpack.c.l.b16 %v184
    %v798 = vunpack.c.h.b16 %v184
    %v799 = vunpack.c.l.b16 %v185
    %v800 = vunpack.c.h.b16 %v185
    %v801 = vunpack.c.l.b16 %v186
    %v802 = vunpack.c.h.b16 %v186
    %v803 = vunpack.c.l.b16 %v187
    %v804 = vunpack.c.h.b16 %v187
    %v805 = vunpack.c.l.b16 %v188
    %v806 = vunpack.c.h.b16 %v188
    %v807 = vunpack.c.l.b16 %v189
    %v808 = vunpack.c.h.b16 %v189
    %v809 = vunpack.c.l.b16 %v190
    %v810 = vunpack.c.h.b16 %v190
    %v811 = vunpack.c.l.b16 %v191
    %v812 = vunpack.c.h.b16 %v191
    %v813 = vunpack.c.l.b16 %v192
    %v814 = vunpack.c.h.b16 %v192
    %v815 = vunpack.c.l.b16 %v193
    %v816 = vunpack.c.h.b16 %v193
    %v817 = vunpack.c.l.b16 %v194
    %v818 = vunpack.c.h.b16 %v194
    %v819 = vunpack.c.l.b16 %v195
    %v820 = vunpack.c.h.b16 %v195
    %v821 = vunpack.c.l.b16 %v196
    %v822 = vunpack.c.h.b16 %v196
    %v823 = vunpack.c.l.b16 %v197
    %v824 = vunpack.c.h.b16 %v197
    %v825 = vunpack.c.l.b16 %v198
    %v826 = vunpack.c.h.b16 %v198
    %v827 = vunpack.c.l.b16 %v199
    %v828 = vunpack.c.h.b16 %v199
    %v829 = vunpack.c.l.b16 %v200
    %v830 = vunpack.c.h.b16 %v200
    %v831 = vunpack.c.l.b16 %v201
    %v832 = vunpack.c.h.b16 %v201
    %v833 = vunpack.c.l.b16 %v202
    %v834 = vunpack.c.h.b16 %v202
    %v835 = vunpack.c.l.b16 %v203
    %v836 = vunpack.c.h.b16 %v203
    %v837 = vunpack.c.l.b16 %v204
    %v838 = vunpack.c.h.b16 %v204
    %v839 = vunpack.c.l.b16 %v205
    %v840 = vunpack.c.h.b16 %v205
    %v841 = vunpack.c.l.b16 %v206
    %v842 = vunpack.c.h.b16 %v206
    %v843 = vunpack.c.l.b16 %v207
    %v844 = vunpack.c.h.b16 %v207
    %v845 = vunpack.c.l.b16 %v208
    %v846 = vunpack.c.h.b16 %v208
    %v847 = vunpack.c.l.b16 %v209
    %v848 = vunpack.c.h.b16 %v209
    %v849 = vunpack.c.l.b16 %v210
    %v850 = vunpack.c.h.b16 %v210
    %v851 = vunpack.c.l.b16 %v211
    %v852 = vunpack.c.h.b16 %v211
    %v853 = vunpack.c.l.b16 %v212
    %v854 = vunpack.c.h.b16 %v212
    %v855 = vunpack.c.l.b16 %v213
    %v856 = vunpack.c.h.b16 %v213
    %v857 = vunpack.c.l.b16 %v214
    %v858 = vunpack.c.h.b16 %v214
    %v859 = vunpack.c.l.b16 %v215
    %v860 = vunpack.c.h.b16 %v215
    %v861 = vunpack.c.l.b16 %v216
    %v862 = vunpack.c.h.b16 %v216
    %v863 = vunpack.c.l.b16 %v217
    %v864 = vunpack.c.h.b16 %v217
    %v865 = vunpack.c.l.b16 %v218
    %v866 = vunpack.c.h.b16 %v218
    %v867 = vunpack.c.l.b16 %v219
    %v868 = vunpack.c.h.b16 %v219
    %v869 = vunpack.c.l.b16 %v220
    %v870 = vunpack.c.h.b16 %v220
    %v871 = vunpack.c.l.b16 %v221
    %v872 = vunpack.c.h.b16 %v221
    %v873 = vunpack.c.l.b16 %v222
    %v874 = vunpack.c.h.b16 %v222
    %v875 = vunpack.c.l.b16 %v223
    %v876 = vunpack.c.h.b16 %v223
    %v877 = vunpack.c.l.b16 %v224
    %v878 = vunpack.c.h.b16 %v224
    %v879 = vunpack.c.l.b16 %v225
    %v880 = vunpack.c.h.b16 %v225
    %v881 = vunpack.c.l.b16 %v226
    %v882 = vunpack.c.h.b16 %v226
    %v883 = vunpack.c.l.b16 %v227
    %v884 = vunpack.c.h.b16 %v227
    %v885 = vunpack.c.l.b16 %v228
    %v886 = vunpack.c.h.b16 %v228
    %v887 = vunpack.c.l.b16 %v229
    %v888 = vunpack.c.h.b16 %v229
    %v889 = vunpack.c.l.b16 %v230
    %v890 = vunpack.c.h.b16 %v230
    %v891 = vunpack.c.l.b16 %v231
    %v892 = vunpack.c.h.b16 %v231
    %v893 = vunpack.c.l.b16 %v232
    %v894 = vunpack.c.h.b16 %v232
    %v895 = vunpack.c.l.b16 %v233
    %v896 = vunpack.c.h.b16 %v233
    %v897 = vunpack.c.l.b16 %v234
    %v898 = vunpack.c.h.b16 %v234
    %v899 = vunpack.c.l.b16 %v235
    %v900 = vunpack.c.h.b16 %v235
    %v901 = vunpack.c.l.b16 %v236
    %v902 = vunpack.c.h.b16 %v236
    %v903 = vunpack.c.l.b16 %v237
    %v904 = vunpack.c.h.b16 %v237
    %v905 = vunpack.c.l.b16 %v238
    %v906 = vunpack.c.h.b16 %v238
    %v907 = vunpack.c.l.b16 %v239
    %v908 = vunpack.c.h.b16 %v239
    %v909 = vunpack.c.l.b16 %v240
    %v910 = vunpack.c.h.b16 %v240
    %v911 = vunpack.c.l.b16 %v241
    %v912 = vunpack.c.h.b16 %v241
    %v913 = vunpack.c.l.b16 %v242
    %v914 = vunpack.c.h.b16 %v242
    %v915 = vunpack.c.l.b16 %v243
    %v916 = vunpack.c.h.b16 %v243
    %v917 = vunpack.c.l.b16 %v244
    %v918 = vunpack.c.h.b16 %v244
    %v919 = vunpack.c.l.b16 %v245
    %v920 = vunpack.c.h.b16 %v245
    %v921 = vunpack.c.l.b16 %v246
    %v922 = vunpack.c.h.b16 %v246
    %v923 = vunpack.c.l.b16 %v247
    %v924 = vunpack.c.h.b16 %v247
    %v925 = vunpack.c.l.b16 %v248
    %v926 = vunpack.c.h.b16 %v248
    %v927 = vunpack.c.l.b16 %v249
    %v928 = vunpack.c.h.b16 %v249
    %v929 = vunpack.c.l.b16 %v250
    %v930 = vunpack.c.h.b16 %v250
    %v931 = vunpack.c.l.b16 %v251
    %v932 = vunpack.c.h.b16 %v251
    %v933 = vunpack.c.l.b16 %v252
    %v934 = vunpack.c.h.b16 %v252
    %v935 = vunpack.c.l.b16 %v253
    %v936 = vunpack.c.h.b16 %v253
    %v937 = vunpack.c.l.b16 %v254
    %v938 = vunpack.c.h.b16 %v254
    %v939 = vunpack.c.l.b16 %v255
    %v940 = vunpack.c.h.b16 %v255
    %v941 = vunpack.c.l.b16 %v256
    %v942 = vunpack.c.h.b16 %v256
    %v943 = vunpack.c.l.b16 %v257
    %v944 = vunpack.c.h.b16 %v257
    %v945 = vunpack.c.l.b16 %v258
    %v946 = vunpack.c.h.b16 %v258
    %v947 = vunpack.c.l.b16 %v259
    %v948 = vunpack.c.h.b16 %v259
    %v949 = vunpack.c.l.b16 %v260
    %v950 = vunpack.c.h.b16 %v260
    %v951 = vunpack.c.l.b16 %v261
    %v952 = vunpack.c.h.b16 %v261
    %v953 = vunpack.c.l.b16 %v262
    %v954 = vunpack.c.h.b16 %v262
    %v955 = vunpack.c.l.b16 %v263
    %v956 = vunpack.c.h.b16 %v263
    %v957 = vunpack.c.l.b16 %v264
    %v958 = vunpack.c.h.b16 %v264
    %v959 = vunpack.c.l.b16 %v265
    %v960 = vunpack.c.h.b16 %v265
    %v961 = vunpack.c.l.b16 %v266
    %v962 = vunpack.c.h.b16 %v266
    %v963 = vunpack.c.l.b16 %v267
    %v964 = vunpack.c.h.b16 %v267
    %v965 = vunpack.c.l.b16 %v268
    %v966 = vunpack.c.h.b16 %v268
    %v967 = vunpack.c.l.b16 %v269
    %v968 = vunpack.c.h.b16 %v269
    %v969 = vunpack.c.l.b16 %v270
    %v970 = vunpack.c.h.b16 %v270
    %v971 = vunpack.c.l.b16 %v271
    %v972 = vunpack.c.h.b16 %v271
    %v973 = vunpack.c.l.b16 %v272
    %v974 = vunpack.c.h.b16 %v272
    %v975 = vunpack.c.l.b16 %v273
    %v976 = vunpack.c.h.b16 %v273
    %v977 = vunpack.c.l.b16 %v274
    %v978 = vunpack.c.h.b16 %v274
    %v979 = vunpack.c.l.b16 %v275
    %v980 = vunpack.c.h.b16 %v275
    %v981 = vunpack.c.l.b16 %v276
    %v982 = vunpack.c.h.b16 %v276
    %v983 = vunpack.c.l.b16 %v277
    %v984 = vunpack.c.h.b16 %v277
    %v985 = vunpack.c.l.b16 %v278
    %v986 = vunpack.c.h.b16 %v278
    %v987 = vunpack.c.l.b16 %v279
    %v988 = vunpack.c.h.b16 %v279
    %v989 = vunpack.c.l.b16 %v280
    %v990 = vunpack.c.h.b16 %v280
    %v991 = vunpack.c.l.b16 %v281
    %v992 = vunpack.c.h.b16 %v281
    %v993 = vunpack.c.l.b16 %v282
    %v994 = vunpack.c.h.b16 %v282
    %v995 = vunpack.c.l.b16 %v283
    %v996 = vunpack.c.h.b16 %v283
    %v997 = vunpack.c.l.b16 %v284
    %v998 = vunpack.c.h.b16 %v284
    %v999 = vunpack.c.l.b16 %v285
    %v1000 = vunpack.c.h.b16 %v285
    %v1001 = vunpack.c.l.b16 %v286
    %v1002 = vunpack.c.h.b16 %v286
    %v1003 = vunpack.c.l.b16 %v287
    %v1004 = vunpack.c.h.b16 %v287
    %v1005 = vunpack.c.l.b16 %v288
    %v1006 = vunpack.c.h.b16 %v288
    %v1007 = vunpack.c.l.b16 %v289
    %v1008 = vunpack.c.h.b16 %v289
    %v1009 = vunpack.c.l.b16 %v290
    %v1010 = vunpack.c.h.b16 %v290
    %v1011 = vunpack.c.l.b16 %v291
    %v1012 = vunpack.c.h.b16 %v291
    %v1013 = vunpack.c.l.b16 %v292
    %v1014 = vunpack.c.h.b16 %v292
    %v1015 = vunpack.c.l.b16 %v293
    %v1016 = vunpack.c.h.b16 %v293
    %v1017 = vunpack.c.l.b16 %v294
    %v1018 = vunpack.c.h.b16 %v294
    %v1019 = vunpack.c.l.b16 %v295
    %v1020 = vunpack.c.h.b16 %v295
    %v1021 = vunpack.c.l.b16 %v296
    %v1022 = vunpack.c.h.b16 %v296
    %v1023 = vunpack.c.l.b16 %v297
    %v1024 = vunpack.c.h.b16 %v297
    %v1025 = vunpack.c.l.b16 %v298
    %v1026 = vunpack.c.h.b16 %v298
    %v1027 = vunpack.c.l.b16 %v299
    %v1028 = vunpack.c.h.b16 %v299
    %v1029 = vunpack.c.l.b16 %v300
    %v1030 = vunpack.c.h.b16 %v300
    %v1031 = vunpack.c.l.b16 %v301
    %v1032 = vunpack.c.h.b16 %v301
    %v1033 = vunpack.c.l.b16 %v302
    %v1034 = vunpack.c.h.b16 %v302
    %v1035 = vunpack.c.l.b16 %v303
    %v1036 = vunpack.c.h.b16 %v303
    %v1037 = vunpack.c.l.b16 %v304
    %v1038 = vunpack.c.h.b16 %v304
    %v1039 = vunpack.c.l.b16 %v305
    %v1040 = vunpack.c.h.b16 %v305
    %v1041 = vunpack.c.l.b16 %v306
    %v1042 = vunpack.c.h.b16 %v306
    %v1043 = vunpack.c.l.b16 %v307
    %v1044 = vunpack.c.h.b16 %v307
    %v1045 = vunpack.c.l.b16 %v308
    %v1046 = vunpack.c.h.b16 %v308
    %v1047 = vunpack.c.l.b16 %v309
    %v1048 = vunpack.c.h.b16 %v309
    %v1049 = vunpack.c.l.b16 %v310
    %v1050 = vunpack.c.h.b16 %v310
    %v1051 = vunpack.c.l.b16 %v311
    %v1052 = vunpack.c.h.b16 %v311
    %v1053 = vunpack.c.l.b16 %v312
    %v1054 = vunpack.c.h.b16 %v312
    %v1055 = vunpack.c.l.b16 %v313
    %v1056 = vunpack.c.h.b16 %v313
    %v1057 = vunpack.c.l.b16 %v314
    %v1058 = vunpack.c.h.b16 %v314
    %v1059 = vunpack.c.l.b16 %v315
    %v1060 = vunpack.c.h.b16 %v315
    %v1061 = vunpack.c.l.b16 %v316
    %v1062 = vunpack.c.h.b16 %v316
    %v1063 = vunpack.c.l.b16 %v317
    %v1064 = vunpack.c.h.b16 %v317
    %v1065 = vunpack.c.l.b16 %v318
    %v1066 = vunpack.c.h.b16 %v318
    %v1067 = vunpack.c.l.b16 %v319
    %v1068 = vunpack.c.h.b16 %v319
    %v1069 = vunpack.c.l.b16 %v320
    %v1070 = vunpack.c.h.b16 %v320
    %v1071 = vunpack.c.l.b16 %v321
    %v1072 = vunpack.c.h.b16 %v321
    %v1073 = vunpack.c.l.b16 %v322
    %v1074 = vunpack.c.h.b16 %v322
    %v1075 = vunpack.c.l.b16 %v323
    %v1076 = vunpack.c.h.b16 %v323
    %v1077 = vunpack.c.l.b16 %v324
    %v1078 = vunpack.c.h.b16 %v324
    %v1079 = vunpack.c.l.b16 %v325
    %v1080 = vunpack.c.h.b16 %v325
    %v1081 = vunpack.c.l.b16 %v326
    %v1082 = vunpack.c.h.b16 %v326
    %v1083 = vunpack.c.l.b16 %v327
    %v1084 = vunpack.c.h.b16 %v327
    %v1085 = vunpack.c.l.b16 %v328
    %v1086 = vunpack.c.h.b16 %v328
    %v1087 = vunpack.c.l.b16 %v329
    %v1088 = vunpack.c.h.b16 %v329
    %v1089 = vunpack.c.l.b16 %v330
    %v1090 = vunpack.c.h.b16 %v330
    %v1091 = vunpack.c.l.b16 %v331
    %v1092 = vunpack.c.h.b16 %v331
    %v1093 = vunpack.c.l.b16 %v332
    %v1094 = vunpack.c.h.b16 %v332
    %v1095 = vunpack.c.l.b16 %v333
    %v1096 = vunpack.c.h.b16 %v333
    %v1097 = vunpack.c.l.b16 %v334
    %v1098 = vunpack.c.h.b16 %v334
    %v1099 = vunpack.c.l.b16 %v335
    %v1100 = vunpack.c.h.b16 %v335
    %v1101 = vunpack.c.l.b16 %v336
    %v1102 = vunpack.c.h.b16 %v336
    %v1103 = vunpack.c.l.b16 %v337
    %v1104 = vunpack.c.h.b16 %v337
    %v1105 = vunpack.c.l.b16 %v338
    %v1106 = vunpack.c.h.b16 %v338
    %v1107 = vunpack.c.l.b16 %v339
    %v1108 = vunpack.c.h.b16 %v339
    %v1109 = vunpack.c.l.b16 %v340
    %v1110 = vunpack.c.h.b16 %v340
    %v1111 = vunpack.c.l.b16 %v341
    %v1112 = vunpack.c.h.b16 %v341
    %v1113 = vunpack.c.l.b16 %v342
    %v1114 = vunpack.c.h.b16 %v342
    %v1115 = vunpack.c.l.b16 %v343
    %v1116 = vunpack.c.h.b16 %v343
    %v1117 = vunpack.c.l.b16 %v344
    %v1118 = vunpack.c.h.b16 %v344
    %v1119 = vunpack.c.l.b16 %v345
    %v1120 = vunpack.c.h.b16 %v345
    %v1121 = vunpack.c.l.b16 %v346
    %v1122 = vunpack.c.h.b16 %v346
    %v1123 = vunpack.c.l.b16 %v347
    %v1124 = vunpack.c.h.b16 %v347
    %v1125 = vunpack.c.l.b16 %v348
    %v1126 = vunpack.c.h.b16 %v348
    %v1127 = vunpack.c.l.b16 %v349
    %v1128 = vunpack.c.h.b16 %v349
    %v1129 = vunpack.c.l.b16 %v350
    %v1130 = vunpack.c.h.b16 %v350
    %v1131 = vunpack.c.l.b16 %v351
    %v1132 = vunpack.c.h.b16 %v351
    %v1133 = vunpack.c.l.b16 %v352
    %v1134 = vunpack.c.h.b16 %v352
    %v1135 = vunpack.c.l.b16 %v353
    %v1136 = vunpack.c.h.b16 %v353
    %v1137 = vunpack.c.l.b16 %v354
    %v1138 = vunpack.c.h.b16 %v354
    %v1139 = vunpack.c.l.b16 %v355
    %v1140 = vunpack.c.h.b16 %v355
    %v1141 = vunpack.c.l.b16 %v356
    %v1142 = vunpack.c.h.b16 %v356
    %v1143 = vpack.c.b16 %v639, %v631
    %v1144 = vpack.c.b16 %v640, %v632
    %v1145 = vpack.c.b16 %v641, %v633
    %v1146 = vpack.c.b16 %v642, %v634
    %v1147 = vpack.c.b16 %v643, %v635
    %v1148 = vpack.c.b16 %v644, %v636
    %v1149 = vpack.c.b16 %v645, %v637
    %v1150 = vpack.c.b16 %v646, %v638
    %v1151 = vpack.c.b16 %v655, %v647
    %v1152 = vpack.c.b16 %v656, %v648
    %v1153 = vpack.c.b16 %v657, %v649
    %v1154 = vpack.c.b16 %v658, %v650
    %v1155 = vpack.c.b16 %v659, %v651
    %v1156 = vpack.c.b16 %v660, %v652
    %v1157 = vpack.c.b16 %v661, %v653
    %v1158 = vpack.c.b16 %v662, %v654
    %v1159 = vpack.c.b16 %v671, %v663
    %v1160 = vpack.c.b16 %v672, %v664
    %v1161 = vpack.c.b16 %v673, %v665
    %v1162 = vpack.c.b16 %v674, %v666
    %v1163 = vpack.c.b16 %v675, %v667
    %v1164 = vpack.c.b16 %v676, %v668
    %v1165 = vpack.c.b16 %v677, %v669
    %v1166 = vpack.c.b16 %v678, %v670
    %v1167 = vpack.c.b16 %v687, %v679
    %v1168 = vpack.c.b16 %v688, %v680
    %v1169 = vpack.c.b16 %v689, %v681
    %v1170 = vpack.c.b16 %v690, %v682
    %v1171 = vpack.c.b16 %v691, %v683
    %v1172 = vpack.c.b16 %v692, %v684
    %v1173 = vpack.c.b16 %v693, %v685
    %v1174 = vpack.c.b16 %v694, %v686
    %v1175 = vpack.c.b16 %v703, %v695
    %v1176 = vpack.c.b16 %v704, %v696
    %v1177 = vpack.c.b16 %v705, %v697
    %v1178 = vpack.c.b16 %v706, %v698
    %v1179 = vpack.c.b16 %v707, %v699
    %v1180 = vpack.c.b16 %v708, %v700
    %v1181 = vpack.c.b16 %v709, %v701
    %v1182 = vpack.c.b16 %v710, %v702
    %v1183 = vpack.c.b16 %v719, %v711
    %v1184 = vpack.c.b16 %v720, %v712
    %v1185 = vpack.c.b16 %v721, %v713
    %v1186 = vpack.c.b16 %v722, %v714
    %v1187 = vpack.c.b16 %v723, %v715
    %v1188 = vpack.c.b16 %v724, %v716
    %v1189 = vpack.c.b16 %v725, %v717
    %v1190 = vpack.c.b16 %v726, %v718
    %v1191 = vpack.c.b16 %v735, %v727
    %v1192 = vpack.c.b16 %v736, %v728
    %v1193 = vpack.c.b16 %v737, %v729
    %v1194 = vpack.c.b16 %v738, %v730
    %v1195 = vpack.c.b16 %v739, %v731
    %v1196 = vpack.c.b16 %v740, %v732
    %v1197 = vpack.c.b16 %v741, %v733
    %v1198 = vpack.c.b16 %v742, %v734
    %v1199 = vpack.c.b16 %v751, %v743
    %v1200 = vpack.c.b16 %v752, %v744
    %v1201 = vpack.c.b16 %v753, %v745
    %v1202 = vpack.c.b16 %v754, %v746
    %v1203 = vpack.c.b16 %v755, %v747
    %v1204 = vpack.c.b16 %v756, %v748
    %v1205 = vpack.c.b16 %v757, %v749
    %v1206 = vpack.c.b16 %v758, %v750
    %v1207 = vpack.c.b16 %v767, %v759
    %v1208 = vpack.c.b16 %v768, %v760
    %v1209 = vpack.c.b16 %v769, %v761
    %v1210 = vpack.c.b16 %v770, %v762
    %v1211 = vpack.c.b16 %v771, %v763
    %v1212 = vpack.c.b16 %v772, %v764
    %v1213 = vpack.c.b16 %v773, %v765
    %v1214 = vpack.c.b16 %v774, %v766
    %v1215 = vpack.c.b16 %v783, %v775
    %v1216 = vpack.c.b16 %v784, %v776
    %v1217 = vpack.c.b16 %v785, %v777
    %v1218 = vpack.c.b16 %v786, %v778
    %v1219 = vpack.c.b16 %v787, %v779
    %v1220 = vpack.c.b16 %v788, %v780
    %v1221 = vpack.c.b16 %v789, %v781
    %v1222 = vpack.c.b16 %v790, %v782
    %v1223 = vpack.c.b16 %v799, %v791
    %v1224 = vpack.c.b16 %v800, %v792
    %v1225 = vpack.c.b16 %v801, %v793
    %v1226 = vpack.c.b16 %v802, %v794
    %v1227 = vpack.c.b16 %v803, %v795
    %v1228 = vpack.c.b16 %v804, %v796
    %v1229 = vpack.c.b16 %v805, %v797
    %v1230 = vpack.c.b16 %v806, %v798
    %v1231 = vpack.c.b16 %v815, %v807
    %v1232 = vpack.c.b16 %v816, %v808
    %v1233 = vpack.c.b16 %v817, %v809
    %v1234 = vpack.c.b16 %v818, %v810
    %v1235 = vpack.c.b16 %v819, %v811
    %v1236 = vpack.c.b16 %v820, %v812
    %v1237 = vpack.c.b16 %v821, %v813
    %v1238 = vpack.c.b16 %v822, %v814
    %v1239 = vpack.c.b16 %v831, %v823
    %v1240 = vpack.c.b16 %v832, %v824
    %v1241 = vpack.c.b16 %v833, %v825
    %v1242 = vpack.c.b16 %v834, %v826
    %v1243 = vpack.c.b16 %v835, %v827
    %v1244 = vpack.c.b16 %v836, %v828
    %v1245 = vpack.c.b16 %v837, %v829
    %v1246 = vpack.c.b16 %v838, %v830
    %v1247 = vpack.c.b16 %v847, %v839
    %v1248 = vpack.c.b16 %v848, %v840
    %v1249 = vpack.c.b16 %v849, %v841
    %v1250 = vpack.c.b16 %v850, %v842
    %v1251 = vpack.c.b16 %v851, %v843
    %v1252 = vpack.c.b16 %v852, %v844
    %v1253 = vpack.c.b16 %v853, %v845
    %v1254 = vpack.c.b16 %v854, %v846
    %v1255 = vpack.c.b16 %v863, %v855
    %v1256 = vpack.c.b16 %v864, %v856
    %v1257 = vpack.c.b16 %v865, %v857
    %v1258 = vpack.c.b16 %v866, %v858
    %v1259 = vpack.c.b16 %v867, %v859
    %v1260 = vpack.c.b16 %v868, %v860
    %v1261 = vpack.c.b16 %v869, %v861
    %v1262 = vpack.c.b16 %v870, %v862
    %v1263 = vpack.c.b16 %v879, %v871
    %v1264 = vpack.c.b16 %v880, %v872
    %v1265 = vpack.c.b16 %v881, %v873
    %v1266 = vpack.c.b16 %v882, %v874
    %v1267 = vpack.c.b16 %v883, %v875
    %v1268 = vpack.c.b16 %v884, %v876
    %v1269 = vpack.c.b16 %v885, %v877
    %v1270 = vpack.c.b16 %v886, %v878
    %v1271 = vpack.c.b16 %v895, %v887
    %v1272 = vpack.c.b16 %v896, %v888
    %v1273 = vpack.c.b16 %v897, %v889
    %v1274 = vpack.c.b16 %v898, %v890
    %v1275 = vpack.c.b16 %v899, %v891
    %v1276 = vpack.c.b16 %v900, %v892
    %v1277 = vpack.c.b16 %v901, %v893
    %v1278 = vpack.c.b16 %v902, %v894
    %v1279 = vpack.c.b16 %v911, %v903
    %v1280 = vpack.c.b16 %v912, %v904
    %v1281 = vpack.c.b16 %v913, %v905
    %v1282 = vpack.c.b16 %v914, %v906
    %v1283 = vpack.c.b16 %v915, %v907
    %v1284 = vpack.c.b16 %v916, %v908
    %v1285 = vpack.c.b16 %v917, %v909
    %v1286 = vpack.c.b16 %v918, %v910
    %v1287 = vpack.c.b16 %v927, %v919
    %v1288 = vpack.c.b16 %v928, %v920
    %v1289 = vpack.c.b16 %v929, %v921
    %v1290 = vpack.c.b16 %v930, %v922
    %v1291 = vpack.c.b16 %v931, %v923
    %v1292 = vpack.c.b16 %v932, %v924
    %v1293 = vpack.c.b16 %v933, %v925
    %v1294 = vpack.c.b16 %v934, %v926
    %v1295 = vpack.c.b16 %v943, %v935
    %v1296 = vpack.c.b16 %v944, %v936
    %v1297 = vpack.c.b16 %v945, %v937
    %v1298 = vpack.c.b16 %v946, %v938
    %v1299 = vpack.c.b16 %v947, %v939
    %v1300 = vpack.c.b16 %v948, %v940
    %v1301 = vpack.c.b16 %v949, %v941
    %v1302 = vpack.c.b16 %v950, %v942
    %v1303 = vpack.c.b16 %v959, %v951
    %v1304 = vpack.c.b16 %v960, %v952
    %v1305 = vpack.c.b16 %v961, %v953
    %v1306 = vpack.c.b16 %v962, %v954
    %v1307 = vpack.c.b16 %v963, %v955
    %v1308 = vpack.c.b16 %v964, %v956
    %v1309 = vpack.c.b16 %v965, %v957
    %v1310 = vpack.c.b16 %v966, %v958
    %v1311 = vpack.c.b16 %v975, %v967
    %v1312 = vpack.c.b16 %v976, %v968
    %v1313 = vpack.c.b16 %v977, %v969
    %v1314 = vpack.c.b16 %v978, %v970
    %v1315 = vpack.c.b16 %v979, %v971
    %v1316 = vpack.c.b16 %v980, %v972
    %v1317 = vpack.c.b16 %v981, %v973
    %v1318 = vpack.c.b16 %v982, %v974
    %v1319 = vpack.c.b16 %v991, %v983
    %v1320 = vpack.c.b16 %v992, %v984
    %v1321 = vpack.c.b16 %v993, %v985
    %v1322 = vpack.c.b16 %v994, %v986
    %v1323 = vpack.c.b16 %v995, %v987
    %v1324 = vpack.c.b16 %v996, %v988
    %v1325 = vpack.c.b16 %v997, %v989
    %v1326 = vpack.c.b16 %v998, %v990
    %v1327 = vpack.c.b16 %v1007, %v999
    %v1328 = vpack.c.b16 %v1008, %v1000
    %v1329 = vpack.c.b16 %v1009, %v1001
    %v1330 = vpack.c.b16 %v1010, %v1002
    %v1331 = vpack.c.b16 %v1011, %v1003
    %v1332 = vpack.c.b16 %v1012, %v1004
    %v1333 = vpack.c.b16 %v1013, %v1005
    %v1334 = vpack.c.b16 %v1014, %v1006
    %v1335 = vpack.c.b16 %v1023, %v1015
    %v1336 = vpack.c.b16 %v1024, %v1016
    %v1337 = vpack.c.b16 %v1025, %v1017
    %v1338 = vpack.c.b16 %v1026, %v1018
    %v1339 = vpack.c.b16 %v1027, %v1019
    %v1340 = vpack.c.b16 %v1028, %v1020
    %v1341 = vpack.c.b16 %v1029, %v1021
    %v1342 = vpack.c.b16 %v1030, %v1022
    %v1343 = vpack.c.b16 %v1039, %v1031
    %v1344 = vpack.c.b16 %v1040, %v1032
    %v1345 = vpack.c.b16 %v1041, %v1033
    %v1346 = vpack.c.b16 %v1042, %v1034
    %v1347 = vpack.c.b16 %v1043, %v1035
    %v1348 = vpack.c.b16 %v1044, %v1036
    %v1349 = vpack.c.b16 %v1045, %v1037
    %v1350 = vpack.c.b16 %v1046, %v1038
    %v1351 = vpack.c.b16 %v1055, %v1047
    %v1352 = vpack.c.b16 %v1056, %v1048
    %v1353 = vpack.c.b16 %v1057, %v1049
    %v1354 = vpack.c.b16 %v1058, %v1050
    %v1355 = vpack.c.b16 %v1059, %v1051
    %v1356 = vpack.c.b16 %v1060, %v1052
    %v1357 = vpack.c.b16 %v1061, %v1053
    %v1358 = vpack.c.b16 %v1062, %v1054
    %v1359 = vpack.c.b16 %v1071, %v1063
    %v1360 = vpack.c.b16 %v1072, %v1064
    %v1361 = vpack.c.b16 %v1073, %v1065
    %v1362 = vpack.c.b16 %v1074, %v1066
    %v1363 = vpack.c.b16 %v1075, %v1067
    %v1364 = vpack.c.b16 %v1076, %v1068
    %v1365 = vpack.c.b16 %v1077, %v1069
    %v1366 = vpack.c.b16 %v1078, %v1070
    %v1367 = vpack.c.b16 %v1087, %v1079
    %v1368 = vpack.c.b16 %v1088, %v1080
    %v1369 = vpack.c.b16 %v1089, %v1081
    %v1370 = vpack.c.b16 %v1090, %v1082
    %v1371 = vpack.c.b16 %v1091, %v1083
    %v1372 = vpack.c.b16 %v1092, %v1084
    %v1373 = vpack.c.b16 %v1093, %v1085
    %v1374 = vpack.c.b16 %v1094, %v1086
    %v1375 = vpack.c.b16 %v1103, %v1095
    %v1376 = vpack.c.b16 %v1104, %v1096
    %v1377 = vpack.c.b16 %v1105, %v1097
    %v1378 = vpack.c.b16 %v1106, %v1098
    %v1379 = vpack.c.b16 %v1107, %v1099
    %v1380 = vpack.c.b16 %v1108, %v1100
    %v1381 = vpack.c.b16 %v1109, %v1101
    %v1382 = vpack.c.b16 %v1110, %v1102
    %v1383 = vpack.c.b16 %v1119, %v1111
    %v1384 = vpack.c.b16 %v1120, %v1112
    %v1385 = vpack.c.b16 %v1121, %v1113
    %v1386 = vpack.c.b16 %v1122, %v1114
    %v1387 = vpack.c.b16 %v1123, %v1115
    %v1388 = vpack.c.b16 %v1124, %v1116
    %v1389 = vpack.c.b16 %v1125, %v1117
    %v1390 = vpack.c.b16 %v1126, %v1118
    %v1391 = vpack.c.b16 %v1135, %v1127
    %v1392 = vpack.c.b16 %v1136, %v1128
    %v1393 = vpack.c.b16 %v1137, %v1129
    %v1394 = vpack.c.b16 %v1138, %v1130
    %v1395 = vpack.c.b16 %v1139, %v1131
    %v1396 = vpack.c.b16 %v1140, %v1132
    %v1397 = vpack.c.b16 %v1141, %v1133
    %v1398 = vpack.c.b16 %v1142, %v1134
    %1655 = vmatpush.bf16.msra.mxu0 %v1199
    %1656 = vmatpush.bf16.msra.mxu0 %v1191
    %1657 = vmatpush.bf16.msra.mxu0 %v1183
    %1658 = vmatpush.bf16.msra.mxu0 %v1175
    %1659 = vmatpush.bf16.msra.mxu0 %v1167
    %1660 = vmatpush.bf16.msra.mxu0 %v1159
    %1661 = vmatpush.bf16.msra.mxu0 %v1151
    %1662 = vmatpush.bf16.msra.mxu0 %v1143
    %1663 = vmatmul.bf16.gmra.mxu0 %v97
    %v1664 = vpop.f32.mrf.mxu0
    %v1665 = vadd.f32 %v359, %v1664
    %v1666 = vpop.f32.mrf.mxu0
    %1667 = vdwg.mxu0
    %1668 = vmatpush.bf16.msra.mxu0 %v1263
    %1669 = vmatpush.bf16.msra.mxu0 %v1255
    %1670 = vmatpush.bf16.msra.mxu0 %v1247
    %1671 = vmatpush.bf16.msra.mxu0 %v1239
    %1672 = vmatpush.bf16.msra.mxu0 %v1231
    %1673 = vmatpush.bf16.msra.mxu0 %v1223
    %1674 = vmatpush.bf16.msra.mxu0 %v1215
    %1675 = vmatpush.bf16.msra.mxu0 %v1207
    %1676 = vmatmul.bf16.gmra.mxu0 %v98
    %v1677 = vpop.f32.mrf.mxu0
    %v1678 = vadd.f32 %v1665, %v1677
    %v1679 = vpop.f32.mrf.mxu0
    %1680 = vdwg.mxu0
    %1681 = vmatpush.bf16.msra.mxu0 %v1327
    %1682 = vmatpush.bf16.msra.mxu0 %v1319
    %1683 = vmatpush.bf16.msra.mxu0 %v1311
    %1684 = vmatpush.bf16.msra.mxu0 %v1303
    %1685 = vmatpush.bf16.msra.mxu0 %v1295
    %1686 = vmatpush.bf16.msra.mxu0 %v1287
    %1687 = vmatpush.bf16.msra.mxu0 %v1279
    %1688 = vmatpush.bf16.msra.mxu0 %v1271
    %1689 = vmatmul.bf16.gmra.mxu0 %v99
    %v1690 = vpop.f32.mrf.mxu0
    %v1691 = vadd.f32 %v1678, %v1690
    %v1692 = vpop.f32.mrf.mxu0
    %1693 = vdwg.mxu0
    %1694 = vmatpush.bf16.msra.mxu0 %v1391
    %1695 = vmatpush.bf16.msra.mxu0 %v1383
    %1696 = vmatpush.bf16.msra.mxu0 %v1375
    %1697 = vmatpush.bf16.msra.mxu0 %v1367
    %1698 = vmatpush.bf16.msra.mxu0 %v1359
    %1699 = vmatpush.bf16.msra.mxu0 %v1351
    %1700 = vmatpush.bf16.msra.mxu0 %v1343
    %1701 = vmatpush.bf16.msra.mxu0 %v1335
    %1702 = vmatmul.bf16.gmra.mxu0 %v100
    %v1703 = vpop.f32.mrf.mxu0
    %v1704 = vadd.f32 %v1691, %v1703
    %v1705 = vpop.f32.mrf.mxu0
    %1706 = vdwg.mxu0
    %1707 = vmatpush.bf16.msra.mxu0 %v1200
    %1708 = vmatpush.bf16.msra.mxu0 %v1192
    %1709 = vmatpush.bf16.msra.mxu0 %v1184
    %1710 = vmatpush.bf16.msra.mxu0 %v1176
    %1711 = vmatpush.bf16.msra.mxu0 %v1168
    %1712 = vmatpush.bf16.msra.mxu0 %v1160
    %1713 = vmatpush.bf16.msra.mxu0 %v1152
    %1714 = vmatpush.bf16.msra.mxu0 %v1144
    %1715 = vmatmul.bf16.gmra.mxu0 %v97
    %v1716 = vpop.f32.mrf.mxu0
    %v1717 = vadd.f32 %v360, %v1716
    %v1718 = vpop.f32.mrf.mxu0
    %1719 = vdwg.mxu0
    %1720 = vmatpush.bf16.msra.mxu0 %v1264
    %1721 = vmatpush.bf16.msra.mxu0 %v1256
    %1722 = vmatpush.bf16.msra.mxu0 %v1248
    %1723 = vmatpush.bf16.msra.mxu0 %v1240
    %1724 = vmatpush.bf16.msra.mxu0 %v1232
    %1725 = vmatpush.bf16.msra.mxu0 %v1224
    %1726 = vmatpush.bf16.msra.mxu0 %v1216
    %1727 = vmatpush.bf16.msra.mxu0 %v1208
    %1728 = vmatmul.bf16.gmra.mxu0 %v98
    %v1729 = vpop.f32.mrf.mxu0
    %v1730 = vadd.f32 %v1717, %v1729
    %v1731 = vpop.f32.mrf.mxu0
    %1732 = vdwg.mxu0
    %1733 = vmatpush.bf16.msra.mxu0 %v1328
    %1734 = vmatpush.bf16.msra.mxu0 %v1320
    %1735 = vmatpush.bf16.msra.mxu0 %v1312
    %1736 = vmatpush.bf16.msra.mxu0 %v1304
    %1737 = vmatpush.bf16.msra.mxu0 %v1296
    %1738 = vmatpush.bf16.msra.mxu0 %v1288
    %1739 = vmatpush.bf16.msra.mxu0 %v1280
    %1740 = vmatpush.bf16.msra.mxu0 %v1272
    %1741 = vmatmul.bf16.gmra.mxu0 %v99
    %v1742 = vpop.f32.mrf.mxu0
    %v1743 = vadd.f32 %v1730, %v1742
    %v1744 = vpop.f32.mrf.mxu0
    %1745 = vdwg.mxu0
    %1746 = vmatpush.bf16.msra.mxu0 %v1392
    %1747 = vmatpush.bf16.msra.mxu0 %v1384
    %1748 = vmatpush.bf16.msra.mxu0 %v1376
    %1749 = vmatpush.bf16.msra.mxu0 %v1368
    %1750 = vmatpush.bf16.msra.mxu0 %v1360
    %1751 = vmatpush.bf16.msra.mxu0 %v1352
    %1752 = vmatpush.bf16.msra.mxu0 %v1344
    %1753 = vmatpush.bf16.msra.mxu0 %v1336
    %1754 = vmatmul.bf16.gmra.mxu0 %v100
    %v1755 = vpop.f32.mrf.mxu0
    %v1756 = vadd.f32 %v1743, %v1755
    %v1757 = vpop.f32.mrf.mxu0
    %1758 = vdwg.mxu0
    %1759 = vmatpush.bf16.msra.mxu0 %v1201
    %1760 = vmatpush.bf16.msra.mxu0 %v1193
    %1761 = vmatpush.bf16.msra.mxu0 %v1185
    %1762 = vmatpush.bf16.msra.mxu0 %v1177
    %1763 = vmatpush.bf16.msra.mxu0 %v1169
    %1764 = vmatpush.bf16.msra.mxu0 %v1161
    %1765 = vmatpush.bf16.msra.mxu0 %v1153
    %1766 = vmatpush.bf16.msra.mxu0 %v1145
    %1767 = vmatmul.bf16.gmra.mxu0 %v97
    %v1768 = vpop.f32.mrf.mxu0
    %v1769 = vadd.f32 %v361, %v1768
    %v1770 = vpop.f32.mrf.mxu0
    %1771 = vdwg.mxu0
    %1772 = vmatpush.bf16.msra.mxu0 %v1265
    %1773 = vmatpush.bf16.msra.mxu0 %v1257
    %1774 = vmatpush.bf16.msra.mxu0 %v1249
    %1775 = vmatpush.bf16.msra.mxu0 %v1241
    %1776 = vmatpush.bf16.msra.mxu0 %v1233
    %1777 = vmatpush.bf16.msra.mxu0 %v1225
    %1778 = vmatpush.bf16.msra.mxu0 %v1217
    %1779 = vmatpush.bf16.msra.mxu0 %v1209
    %1780 = vmatmul.bf16.gmra.mxu0 %v98
    %v1781 = vpop.f32.mrf.mxu0
    %v1782 = vadd.f32 %v1769, %v1781
    %v1783 = vpop.f32.mrf.mxu0
    %1784 = vdwg.mxu0
    %1785 = vmatpush.bf16.msra.mxu0 %v1329
    %1786 = vmatpush.bf16.msra.mxu0 %v1321
    %1787 = vmatpush.bf16.msra.mxu0 %v1313
    %1788 = vmatpush.bf16.msra.mxu0 %v1305
    %1789 = vmatpush.bf16.msra.mxu0 %v1297
    %1790 = vmatpush.bf16.msra.mxu0 %v1289
    %1791 = vmatpush.bf16.msra.mxu0 %v1281
    %1792 = vmatpush.bf16.msra.mxu0 %v1273
    %1793 = vmatmul.bf16.gmra.mxu0 %v99
    %v1794 = vpop.f32.mrf.mxu0
    %v1795 = vadd.f32 %v1782, %v1794
    %v1796 = vpop.f32.mrf.mxu0
    %1797 = vdwg.mxu0
    %1798 = vmatpush.bf16.msra.mxu0 %v1393
    %1799 = vmatpush.bf16.msra.mxu0 %v1385
    %1800 = vmatpush.bf16.msra.mxu0 %v1377
    %1801 = vmatpush.bf16.msra.mxu0 %v1369
    %1802 = vmatpush.bf16.msra.mxu0 %v1361
    %1803 = vmatpush.bf16.msra.mxu0 %v1353
    %1804 = vmatpush.bf16.msra.mxu0 %v1345
    %1805 = vmatpush.bf16.msra.mxu0 %v1337
    %1806 = vmatmul.bf16.gmra.mxu0 %v100
    %v1807 = vpop.f32.mrf.mxu0
    %v1808 = vadd.f32 %v1795, %v1807
    %v1809 = vpop.f32.mrf.mxu0
    %1810 = vdwg.mxu0
    %1811 = vmatpush.bf16.msra.mxu0 %v1202
    %1812 = vmatpush.bf16.msra.mxu0 %v1194
    %1813 = vmatpush.bf16.msra.mxu0 %v1186
    %1814 = vmatpush.bf16.msra.mxu0 %v1178
    %1815 = vmatpush.bf16.msra.mxu0 %v1170
    %1816 = vmatpush.bf16.msra.mxu0 %v1162
    %1817 = vmatpush.bf16.msra.mxu0 %v1154
    %1818 = vmatpush.bf16.msra.mxu0 %v1146
    %1819 = vmatmul.bf16.gmra.mxu0 %v97
    %v1820 = vpop.f32.mrf.mxu0
    %v1821 = vadd.f32 %v362, %v1820
    %v1822 = vpop.f32.mrf.mxu0
    %1823 = vdwg.mxu0
    %1824 = vmatpush.bf16.msra.mxu0 %v1266
    %1825 = vmatpush.bf16.msra.mxu0 %v1258
    %1826 = vmatpush.bf16.msra.mxu0 %v1250
    %1827 = vmatpush.bf16.msra.mxu0 %v1242
    %1828 = vmatpush.bf16.msra.mxu0 %v1234
    %1829 = vmatpush.bf16.msra.mxu0 %v1226
    %1830 = vmatpush.bf16.msra.mxu0 %v1218
    %1831 = vmatpush.bf16.msra.mxu0 %v1210
    %1832 = vmatmul.bf16.gmra.mxu0 %v98
    %v1833 = vpop.f32.mrf.mxu0
    %v1834 = vadd.f32 %v1821, %v1833
    %v1835 = vpop.f32.mrf.mxu0
    %1836 = vdwg.mxu0
    %1837 = vmatpush.bf16.msra.mxu0 %v1330
    %1838 = vmatpush.bf16.msra.mxu0 %v1322
    %1839 = vmatpush.bf16.msra.mxu0 %v1314
    %1840 = vmatpush.bf16.msra.mxu0 %v1306
    %1841 = vmatpush.bf16.msra.mxu0 %v1298
    %1842 = vmatpush.bf16.msra.mxu0 %v1290
    %1843 = vmatpush.bf16.msra.mxu0 %v1282
    %1844 = vmatpush.bf16.msra.mxu0 %v1274
    %1845 = vmatmul.bf16.gmra.mxu0 %v99
    %v1846 = vpop.f32.mrf.mxu0
    %v1847 = vadd.f32 %v1834, %v1846
    %v1848 = vpop.f32.mrf.mxu0
    %1849 = vdwg.mxu0
    %1850 = vmatpush.bf16.msra.mxu0 %v1394
    %1851 = vmatpush.bf16.msra.mxu0 %v1386
    %1852 = vmatpush.bf16.msra.mxu0 %v1378
    %1853 = vmatpush.bf16.msra.mxu0 %v1370
    %1854 = vmatpush.bf16.msra.mxu0 %v1362
    %1855 = vmatpush.bf16.msra.mxu0 %v1354
    %1856 = vmatpush.bf16.msra.mxu0 %v1346
    %1857 = vmatpush.bf16.msra.mxu0 %v1338
    %1858 = vmatmul.bf16.gmra.mxu0 %v100
    %v1859 = vpop.f32.mrf.mxu0
    %v1860 = vadd.f32 %v1847, %v1859
    %v1861 = vpop.f32.mrf.mxu0
    %1862 = vdwg.mxu0
    %1863 = vmatpush.bf16.msra.mxu0 %v1203
    %1864 = vmatpush.bf16.msra.mxu0 %v1195
    %1865 = vmatpush.bf16.msra.mxu0 %v1187
    %1866 = vmatpush.bf16.msra.mxu0 %v1179
    %1867 = vmatpush.bf16.msra.mxu0 %v1171
    %1868 = vmatpush.bf16.msra.mxu0 %v1163
    %1869 = vmatpush.bf16.msra.mxu0 %v1155
    %1870 = vmatpush.bf16.msra.mxu0 %v1147
    %1871 = vmatmul.bf16.gmra.mxu0 %v97
    %v1872 = vpop.f32.mrf.mxu0
    %v1873 = vadd.f32 %v363, %v1872
    %v1874 = vpop.f32.mrf.mxu0
    %1875 = vdwg.mxu0
    %1876 = vmatpush.bf16.msra.mxu0 %v1267
    %1877 = vmatpush.bf16.msra.mxu0 %v1259
    %1878 = vmatpush.bf16.msra.mxu0 %v1251
    %1879 = vmatpush.bf16.msra.mxu0 %v1243
    %1880 = vmatpush.bf16.msra.mxu0 %v1235
    %1881 = vmatpush.bf16.msra.mxu0 %v1227
    %1882 = vmatpush.bf16.msra.mxu0 %v1219
    %1883 = vmatpush.bf16.msra.mxu0 %v1211
    %1884 = vmatmul.bf16.gmra.mxu0 %v98
    %v1885 = vpop.f32.mrf.mxu0
    %v1886 = vadd.f32 %v1873, %v1885
    %v1887 = vpop.f32.mrf.mxu0
    %1888 = vdwg.mxu0
    %1889 = vmatpush.bf16.msra.mxu0 %v1331
    %1890 = vmatpush.bf16.msra.mxu0 %v1323
    %1891 = vmatpush.bf16.msra.mxu0 %v1315
    %1892 = vmatpush.bf16.msra.mxu0 %v1307
    %1893 = vmatpush.bf16.msra.mxu0 %v1299
    %1894 = vmatpush.bf16.msra.mxu0 %v1291
    %1895 = vmatpush.bf16.msra.mxu0 %v1283
    %1896 = vmatpush.bf16.msra.mxu0 %v1275
    %1897 = vmatmul.bf16.gmra.mxu0 %v99
    %v1898 = vpop.f32.mrf.mxu0
    %v1899 = vadd.f32 %v1886, %v1898
    %v1900 = vpop.f32.mrf.mxu0
    %1901 = vdwg.mxu0
    %1902 = vmatpush.bf16.msra.mxu0 %v1395
    %1903 = vmatpush.bf16.msra.mxu0 %v1387
    %1904 = vmatpush.bf16.msra.mxu0 %v1379
    %1905 = vmatpush.bf16.msra.mxu0 %v1371
    %1906 = vmatpush.bf16.msra.mxu0 %v1363
    %1907 = vmatpush.bf16.msra.mxu0 %v1355
    %1908 = vmatpush.bf16.msra.mxu0 %v1347
    %1909 = vmatpush.bf16.msra.mxu0 %v1339
    %1910 = vmatmul.bf16.gmra.mxu0 %v100
    %v1911 = vpop.f32.mrf.mxu0
    %v1912 = vadd.f32 %v1899, %v1911
    %v1913 = vpop.f32.mrf.mxu0
    %1914 = vdwg.mxu0
    %1915 = vmatpush.bf16.msra.mxu0 %v1204
    %1916 = vmatpush.bf16.msra.mxu0 %v1196
    %1917 = vmatpush.bf16.msra.mxu0 %v1188
    %1918 = vmatpush.bf16.msra.mxu0 %v1180
    %1919 = vmatpush.bf16.msra.mxu0 %v1172
    %1920 = vmatpush.bf16.msra.mxu0 %v1164
    %1921 = vmatpush.bf16.msra.mxu0 %v1156
    %1922 = vmatpush.bf16.msra.mxu0 %v1148
    %1923 = vmatmul.bf16.gmra.mxu0 %v97
    %v1924 = vpop.f32.mrf.mxu0
    %v1925 = vadd.f32 %v364, %v1924
    %v1926 = vpop.f32.mrf.mxu0
    %1927 = vdwg.mxu0
    %1928 = vmatpush.bf16.msra.mxu0 %v1268
    %1929 = vmatpush.bf16.msra.mxu0 %v1260
    %1930 = vmatpush.bf16.msra.mxu0 %v1252
    %1931 = vmatpush.bf16.msra.mxu0 %v1244
    %1932 = vmatpush.bf16.msra.mxu0 %v1236
    %1933 = vmatpush.bf16.msra.mxu0 %v1228
    %1934 = vmatpush.bf16.msra.mxu0 %v1220
    %1935 = vmatpush.bf16.msra.mxu0 %v1212
    %1936 = vmatmul.bf16.gmra.mxu0 %v98
    %v1937 = vpop.f32.mrf.mxu0
    %v1938 = vadd.f32 %v1925, %v1937
    %v1939 = vpop.f32.mrf.mxu0
    %1940 = vdwg.mxu0
    %1941 = vmatpush.bf16.msra.mxu0 %v1332
    %1942 = vmatpush.bf16.msra.mxu0 %v1324
    %1943 = vmatpush.bf16.msra.mxu0 %v1316
    %1944 = vmatpush.bf16.msra.mxu0 %v1308
    %1945 = vmatpush.bf16.msra.mxu0 %v1300
    %1946 = vmatpush.bf16.msra.mxu0 %v1292
    %1947 = vmatpush.bf16.msra.mxu0 %v1284
    %1948 = vmatpush.bf16.msra.mxu0 %v1276
    %1949 = vmatmul.bf16.gmra.mxu0 %v99
    %v1950 = vpop.f32.mrf.mxu0
    %v1951 = vadd.f32 %v1938, %v1950
    %v1952 = vpop.f32.mrf.mxu0
    %1953 = vdwg.mxu0
    %1954 = vmatpush.bf16.msra.mxu0 %v1396
    %1955 = vmatpush.bf16.msra.mxu0 %v1388
    %1956 = vmatpush.bf16.msra.mxu0 %v1380
    %1957 = vmatpush.bf16.msra.mxu0 %v1372
    %1958 = vmatpush.bf16.msra.mxu0 %v1364
    %1959 = vmatpush.bf16.msra.mxu0 %v1356
    %1960 = vmatpush.bf16.msra.mxu0 %v1348
    %1961 = vmatpush.bf16.msra.mxu0 %v1340
    %1962 = vmatmul.bf16.gmra.mxu0 %v100
    %v1963 = vpop.f32.mrf.mxu0
    %v1964 = vadd.f32 %v1951, %v1963
    %v1965 = vpop.f32.mrf.mxu0
    %1966 = vdwg.mxu0
    %1967 = vmatpush.bf16.msra.mxu0 %v1205
    %1968 = vmatpush.bf16.msra.mxu0 %v1197
    %1969 = vmatpush.bf16.msra.mxu0 %v1189
    %1970 = vmatpush.bf16.msra.mxu0 %v1181
    %1971 = vmatpush.bf16.msra.mxu0 %v1173
    %1972 = vmatpush.bf16.msra.mxu0 %v1165
    %1973 = vmatpush.bf16.msra.mxu0 %v1157
    %1974 = vmatpush.bf16.msra.mxu0 %v1149
    %1975 = vmatmul.bf16.gmra.mxu0 %v97
    %v1976 = vpop.f32.mrf.mxu0
    %v1977 = vadd.f32 %v365, %v1976
    %v1978 = vpop.f32.mrf.mxu0
    %1979 = vdwg.mxu0
    %1980 = vmatpush.bf16.msra.mxu0 %v1269
    %1981 = vmatpush.bf16.msra.mxu0 %v1261
    %1982 = vmatpush.bf16.msra.mxu0 %v1253
    %1983 = vmatpush.bf16.msra.mxu0 %v1245
    %1984 = vmatpush.bf16.msra.mxu0 %v1237
    %1985 = vmatpush.bf16.msra.mxu0 %v1229
    %1986 = vmatpush.bf16.msra.mxu0 %v1221
    %1987 = vmatpush.bf16.msra.mxu0 %v1213
    %1988 = vmatmul.bf16.gmra.mxu0 %v98
    %v1989 = vpop.f32.mrf.mxu0
    %v1990 = vadd.f32 %v1977, %v1989
    %v1991 = vpop.f32.mrf.mxu0
    %1992 = vdwg.mxu0
    %1993 = vmatpush.bf16.msra.mxu0 %v1333
    %1994 = vmatpush.bf16.msra.mxu0 %v1325
    %1995 = vmatpush.bf16.msra.mxu0 %v1317
    %1996 = vmatpush.bf16.msra.mxu0 %v1309
    %1997 = vmatpush.bf16.msra.mxu0 %v1301
    %1998 = vmatpush.bf16.msra.mxu0 %v1293
    %1999 = vmatpush.bf16.msra.mxu0 %v1285
    %2000 = vmatpush.bf16.msra.mxu0 %v1277
    %2001 = vmatmul.bf16.gmra.mxu0 %v99
    %v2002 = vpop.f32.mrf.mxu0
    %v2003 = vadd.f32 %v1990, %v2002
    %v2004 = vpop.f32.mrf.mxu0
    %2005 = vdwg.mxu0
    %2006 = vmatpush.bf16.msra.mxu0 %v1397
    %2007 = vmatpush.bf16.msra.mxu0 %v1389
    %2008 = vmatpush.bf16.msra.mxu0 %v1381
    %2009 = vmatpush.bf16.msra.mxu0 %v1373
    %2010 = vmatpush.bf16.msra.mxu0 %v1365
    %2011 = vmatpush.bf16.msra.mxu0 %v1357
    %2012 = vmatpush.bf16.msra.mxu0 %v1349
    %2013 = vmatpush.bf16.msra.mxu0 %v1341
    %2014 = vmatmul.bf16.gmra.mxu0 %v100
    %v2015 = vpop.f32.mrf.mxu0
    %v2016 = vadd.f32 %v2003, %v2015
    %v2017 = vpop.f32.mrf.mxu0
    %2018 = vdwg.mxu0
    %2019 = vmatpush.bf16.msra.mxu0 %v1206
    %2020 = vmatpush.bf16.msra.mxu0 %v1198
    %2021 = vmatpush.bf16.msra.mxu0 %v1190
    %2022 = vmatpush.bf16.msra.mxu0 %v1182
    %2023 = vmatpush.bf16.msra.mxu0 %v1174
    %2024 = vmatpush.bf16.msra.mxu0 %v1166
    %2025 = vmatpush.bf16.msra.mxu0 %v1158
    %2026 = vmatpush.bf16.msra.mxu0 %v1150
    %2027 = vmatmul.bf16.gmra.mxu0 %v97
    %v2028 = vpop.f32.mrf.mxu0
    %v2029 = vadd.f32 %v366, %v2028
    %v2030 = vpop.f32.mrf.mxu0
    %2031 = vdwg.mxu0
    %2032 = vmatpush.bf16.msra.mxu0 %v1270
    %2033 = vmatpush.bf16.msra.mxu0 %v1262
    %2034 = vmatpush.bf16.msra.mxu0 %v1254
    %2035 = vmatpush.bf16.msra.mxu0 %v1246
    %2036 = vmatpush.bf16.msra.mxu0 %v1238
    %2037 = vmatpush.bf16.msra.mxu0 %v1230
    %2038 = vmatpush.bf16.msra.mxu0 %v1222
    %2039 = vmatpush.bf16.msra.mxu0 %v1214
    %2040 = vmatmul.bf16.gmra.mxu0 %v98
    %v2041 = vpop.f32.mrf.mxu0
    %v2042 = vadd.f32 %v2029, %v2041
    %v2043 = vpop.f32.mrf.mxu0
    %2044 = vdwg.mxu0
    %2045 = vmatpush.bf16.msra.mxu0 %v1334
    %2046 = vmatpush.bf16.msra.mxu0 %v1326
    %2047 = vmatpush.bf16.msra.mxu0 %v1318
    %2048 = vmatpush.bf16.msra.mxu0 %v1310
    %2049 = vmatpush.bf16.msra.mxu0 %v1302
    %2050 = vmatpush.bf16.msra.mxu0 %v1294
    %2051 = vmatpush.bf16.msra.mxu0 %v1286
    %2052 = vmatpush.bf16.msra.mxu0 %v1278
    %2053 = vmatmul.bf16.gmra.mxu0 %v99
    %v2054 = vpop.f32.mrf.mxu0
    %v2055 = vadd.f32 %v2042, %v2054
    %v2056 = vpop.f32.mrf.mxu0
    %2057 = vdwg.mxu0
    %2058 = vmatpush.bf16.msra.mxu0 %v1398
    %2059 = vmatpush.bf16.msra.mxu0 %v1390
    %2060 = vmatpush.bf16.msra.mxu0 %v1382
    %2061 = vmatpush.bf16.msra.mxu0 %v1374
    %2062 = vmatpush.bf16.msra.mxu0 %v1366
    %2063 = vmatpush.bf16.msra.mxu0 %v1358
    %2064 = vmatpush.bf16.msra.mxu0 %v1350
    %2065 = vmatpush.bf16.msra.mxu0 %v1342
    %2066 = vmatmul.bf16.gmra.mxu0 %v100
    %v2067 = vpop.f32.mrf.mxu0
    %v2068 = vadd.f32 %v2055, %v2067
    %v2069 = vpop.f32.mrf.mxu0
    %2070 = vdwg.mxu0
    %v2071 = vmax.f32 %v1704, 0.0
    %v2072 = vmax.f32 %v1756, 0.0
    %v2073 = vmax.f32 %v1808, 0.0
    %v2074 = vmax.f32 %v1860, 0.0
    %v2075 = vmax.f32 %v1912, 0.0
    %v2076 = vmax.f32 %v1964, 0.0
    %v2077 = vmax.f32 %v2016, 0.0
    %v2078 = vmax.f32 %v2068, 0.0
    %v2079 = vpack.c.bf16 %v2071, %v2071
    %v2080 = vpack.c.bf16 %v2072, %v2072
    %v2081 = vpack.c.bf16 %v2073, %v2073
    %v2082 = vpack.c.bf16 %v2074, %v2074
    %v2083 = vpack.c.bf16 %v2075, %v2075
    %v2084 = vpack.c.bf16 %v2076, %v2076
    %v2085 = vpack.c.bf16 %v2077, %v2077
    %v2086 = vpack.c.bf16 %v2078, %v2078
    %v2087 = vld [vmem:[#allocation8] sm:$0xff]
    %v2088 = vld [vmem:[#allocation8 + $0x8] sm:$0xff]
    %v2089 = vld [vmem:[#allocation8 + $0x10] sm:$0xff]
    %v2090 = vld [vmem:[#allocation8 + $0x18] sm:$0xff]
    %v2091 = vld [vmem:[#allocation8 + $0x20] sm:$0xff]
    %v2092 = vld [vmem:[#allocation8 + $0x28] sm:$0xff]
    %v2093 = vld [vmem:[#allocation8 + $0x30] sm:$0xff]
    %v2094 = vld [vmem:[#allocation8 + $0x38] sm:$0xff]
    %v2095 = vld [vmem:[#allocation8 + $0x40] sm:$0xff]
    %v2096 = vld [vmem:[#allocation8 + $0x48] sm:$0xff]
    %v2097 = vld [vmem:[#allocation8 + $0x50] sm:$0xff]
    %v2098 = vld [vmem:[#allocation8 + $0x58] sm:$0xff]
    %v2099 = vld [vmem:[#allocation8 + $0x60] sm:$0xff]
    %v2100 = vld [vmem:[#allocation8 + $0x68] sm:$0xff]
    %v2101 = vld [vmem:[#allocation8 + $0x70] sm:$0xff]
    %v2102 = vld [vmem:[#allocation8 + $0x78] sm:$0xff]
    %v2103 = vld [vmem:[#allocation8 + $0x80] sm:$0xff]
    %v2104 = vld [vmem:[#allocation8 + $0x88] sm:$0xff]
    %v2105 = vld [vmem:[#allocation8 + $0x90] sm:$0xff]
    %v2106 = vld [vmem:[#allocation8 + $0x98] sm:$0xff]
    %v2107 = vld [vmem:[#allocation8 + $0xa0] sm:$0xff]
    %v2108 = vld [vmem:[#allocation8 + $0xa8] sm:$0xff]
    %v2109 = vld [vmem:[#allocation8 + $0xb0] sm:$0xff]
    %v2110 = vld [vmem:[#allocation8 + $0xb8] sm:$0xff]
    %v2111 = vld [vmem:[#allocation8 + $0xc0] sm:$0xff]
    %v2112 = vld [vmem:[#allocation8 + $0xc8] sm:$0xff]
    %v2113 = vld [vmem:[#allocation8 + $0xd0] sm:$0xff]
    %v2114 = vld [vmem:[#allocation8 + $0xd8] sm:$0xff]
    %v2115 = vld [vmem:[#allocation8 + $0xe0] sm:$0xff]
    %v2116 = vld [vmem:[#allocation8 + $0xe8] sm:$0xff]
    %v2117 = vld [vmem:[#allocation8 + $0xf0] sm:$0xff]
    %v2118 = vld [vmem:[#allocation8 + $0xf8] sm:$0xff]
    %v2119 = vld [vmem:[#allocation8 + $0x100] sm:$0xff]
    %v2120 = vld [vmem:[#allocation8 + $0x108] sm:$0xff]
    %v2121 = vld [vmem:[#allocation8 + $0x110] sm:$0xff]
    %v2122 = vld [vmem:[#allocation8 + $0x118] sm:$0xff]
    %v2123 = vld [vmem:[#allocation8 + $0x120] sm:$0xff]
    %v2124 = vld [vmem:[#allocation8 + $0x128] sm:$0xff]
    %v2125 = vld [vmem:[#allocation8 + $0x130] sm:$0xff]
    %v2126 = vld [vmem:[#allocation8 + $0x138] sm:$0xff]
    %v2127 = vld [vmem:[#allocation8 + $0x140] sm:$0xff]
    %v2128 = vld [vmem:[#allocation8 + $0x148] sm:$0xff]
    %v2129 = vld [vmem:[#allocation8 + $0x150] sm:$0xff]
    %v2130 = vld [vmem:[#allocation8 + $0x158] sm:$0xff]
    %v2131 = vld [vmem:[#allocation8 + $0x160] sm:$0xff]
    %v2132 = vld [vmem:[#allocation8 + $0x168] sm:$0xff]
    %v2133 = vld [vmem:[#allocation8 + $0x170] sm:$0xff]
    %v2134 = vld [vmem:[#allocation8 + $0x178] sm:$0xff]
    %v2135 = vld [vmem:[#allocation8 + $0x180] sm:$0xff]
    %v2136 = vld [vmem:[#allocation8 + $0x188] sm:$0xff]
    %v2137 = vld [vmem:[#allocation8 + $0x190] sm:$0xff]
    %v2138 = vld [vmem:[#allocation8 + $0x198] sm:$0xff]
    %v2139 = vld [vmem:[#allocation8 + $0x1a0] sm:$0xff]
    %v2140 = vld [vmem:[#allocation8 + $0x1a8] sm:$0xff]
    %v2141 = vld [vmem:[#allocation8 + $0x1b0] sm:$0xff]
    %v2142 = vld [vmem:[#allocation8 + $0x1b8] sm:$0xff]
    %v2143 = vld [vmem:[#allocation8 + $0x1c0] sm:$0xff]
    %v2144 = vld [vmem:[#allocation8 + $0x1c8] sm:$0xff]
    %v2145 = vld [vmem:[#allocation8 + $0x1d0] sm:$0xff]
    %v2146 = vld [vmem:[#allocation8 + $0x1d8] sm:$0xff]
    %v2147 = vld [vmem:[#allocation8 + $0x1e0] sm:$0xff]
    %v2148 = vld [vmem:[#allocation8 + $0x1e8] sm:$0xff]
    %v2149 = vld [vmem:[#allocation8 + $0x1f0] sm:$0xff]
    %v2150 = vld [vmem:[#allocation8 + $0x1f8] sm:$0xff]
    %v2151 = vld [vmem:[#allocation8 + $0x200] sm:$0xff]
    %v2152 = vld [vmem:[#allocation8 + $0x208] sm:$0xff]
    %v2153 = vld [vmem:[#allocation8 + $0x210] sm:$0xff]
    %v2154 = vld [vmem:[#allocation8 + $0x218] sm:$0xff]
    %v2155 = vld [vmem:[#allocation8 + $0x220] sm:$0xff]
    %v2156 = vld [vmem:[#allocation8 + $0x228] sm:$0xff]
    %v2157 = vld [vmem:[#allocation8 + $0x230] sm:$0xff]
    %v2158 = vld [vmem:[#allocation8 + $0x238] sm:$0xff]
    %v2159 = vld [vmem:[#allocation8 + $0x240] sm:$0xff]
    %v2160 = vld [vmem:[#allocation8 + $0x248] sm:$0xff]
    %v2161 = vld [vmem:[#allocation8 + $0x250] sm:$0xff]
    %v2162 = vld [vmem:[#allocation8 + $0x258] sm:$0xff]
    %v2163 = vld [vmem:[#allocation8 + $0x260] sm:$0xff]
    %v2164 = vld [vmem:[#allocation8 + $0x268] sm:$0xff]
    %v2165 = vld [vmem:[#allocation8 + $0x270] sm:$0xff]
    %v2166 = vld [vmem:[#allocation8 + $0x278] sm:$0xff]
    %v2167 = vld [vmem:[#allocation8 + $0x280] sm:$0xff]
    %v2168 = vld [vmem:[#allocation8 + $0x288] sm:$0xff]
    %v2169 = vld [vmem:[#allocation8 + $0x290] sm:$0xff]
    %v2170 = vld [vmem:[#allocation8 + $0x298] sm:$0xff]
    %v2171 = vld [vmem:[#allocation8 + $0x2a0] sm:$0xff]
    %v2172 = vld [vmem:[#allocation8 + $0x2a8] sm:$0xff]
    %v2173 = vld [vmem:[#allocation8 + $0x2b0] sm:$0xff]
    %v2174 = vld [vmem:[#allocation8 + $0x2b8] sm:$0xff]
    %v2175 = vld [vmem:[#allocation8 + $0x2c0] sm:$0xff]
    %v2176 = vld [vmem:[#allocation8 + $0x2c8] sm:$0xff]
    %v2177 = vld [vmem:[#allocation8 + $0x2d0] sm:$0xff]
    %v2178 = vld [vmem:[#allocation8 + $0x2d8] sm:$0xff]
    %v2179 = vld [vmem:[#allocation8 + $0x2e0] sm:$0xff]
    %v2180 = vld [vmem:[#allocation8 + $0x2e8] sm:$0xff]
    %v2181 = vld [vmem:[#allocation8 + $0x2f0] sm:$0xff]
    %v2182 = vld [vmem:[#allocation8 + $0x2f8] sm:$0xff]
    %v2183 = vld [vmem:[#allocation8 + $0x300] sm:$0xff]
    %v2184 = vld [vmem:[#allocation8 + $0x308] sm:$0xff]
    %v2185 = vld [vmem:[#allocation8 + $0x310] sm:$0xff]
    %v2186 = vld [vmem:[#allocation8 + $0x318] sm:$0xff]
    %v2187 = vld [vmem:[#allocation8 + $0x320] sm:$0xff]
    %v2188 = vld [vmem:[#allocation8 + $0x328] sm:$0xff]
    %v2189 = vld [vmem:[#allocation8 + $0x330] sm:$0xff]
    %v2190 = vld [vmem:[#allocation8 + $0x338] sm:$0xff]
    %v2191 = vld [vmem:[#allocation8 + $0x340] sm:$0xff]
    %v2192 = vld [vmem:[#allocation8 + $0x348] sm:$0xff]
    %v2193 = vld [vmem:[#allocation8 + $0x350] sm:$0xff]
    %v2194 = vld [vmem:[#allocation8 + $0x358] sm:$0xff]
    %v2195 = vld [vmem:[#allocation8 + $0x360] sm:$0xff]
    %v2196 = vld [vmem:[#allocation8 + $0x368] sm:$0xff]
    %v2197 = vld [vmem:[#allocation8 + $0x370] sm:$0xff]
    %v2198 = vld [vmem:[#allocation8 + $0x378] sm:$0xff]
    %v2199 = vld [vmem:[#allocation8 + $0x380] sm:$0xff]
    %v2200 = vld [vmem:[#allocation8 + $0x388] sm:$0xff]
    %v2201 = vld [vmem:[#allocation8 + $0x390] sm:$0xff]
    %v2202 = vld [vmem:[#allocation8 + $0x398] sm:$0xff]
    %v2203 = vld [vmem:[#allocation8 + $0x3a0] sm:$0xff]
    %v2204 = vld [vmem:[#allocation8 + $0x3a8] sm:$0xff]
    %v2205 = vld [vmem:[#allocation8 + $0x3b0] sm:$0xff]
    %v2206 = vld [vmem:[#allocation8 + $0x3b8] sm:$0xff]
    %v2207 = vld [vmem:[#allocation8 + $0x3c0] sm:$0xff]
    %v2208 = vld [vmem:[#allocation8 + $0x3c8] sm:$0xff]
    %v2209 = vld [vmem:[#allocation8 + $0x3d0] sm:$0xff]
    %v2210 = vld [vmem:[#allocation8 + $0x3d8] sm:$0xff]
    %v2211 = vld [vmem:[#allocation8 + $0x3e0] sm:$0xff]
    %v2212 = vld [vmem:[#allocation8 + $0x3e8] sm:$0xff]
    %v2213 = vld [vmem:[#allocation8 + $0x3f0] sm:$0xff]
    %v2214 = vld [vmem:[#allocation8 + $0x3f8] sm:$0xff]
    %v2215 = vld [vmem:[#allocation8 + $0x400] sm:$0xff]
    %v2216 = vld [vmem:[#allocation8 + $0x408] sm:$0xff]
    %v2217 = vld [vmem:[#allocation8 + $0x410] sm:$0xff]
    %v2218 = vld [vmem:[#allocation8 + $0x418] sm:$0xff]
    %v2219 = vld [vmem:[#allocation8 + $0x420] sm:$0xff]
    %v2220 = vld [vmem:[#allocation8 + $0x428] sm:$0xff]
    %v2221 = vld [vmem:[#allocation8 + $0x430] sm:$0xff]
    %v2222 = vld [vmem:[#allocation8 + $0x438] sm:$0xff]
    %v2223 = vld [vmem:[#allocation8 + $0x440] sm:$0xff]
    %v2224 = vld [vmem:[#allocation8 + $0x448] sm:$0xff]
    %v2225 = vld [vmem:[#allocation8 + $0x450] sm:$0xff]
    %v2226 = vld [vmem:[#allocation8 + $0x458] sm:$0xff]
    %v2227 = vld [vmem:[#allocation8 + $0x460] sm:$0xff]
    %v2228 = vld [vmem:[#allocation8 + $0x468] sm:$0xff]
    %v2229 = vld [vmem:[#allocation8 + $0x470] sm:$0xff]
    %v2230 = vld [vmem:[#allocation8 + $0x478] sm:$0xff]
    %v2231 = vld [vmem:[#allocation8 + $0x480] sm:$0xff]
    %v2232 = vld [vmem:[#allocation8 + $0x488] sm:$0xff]
    %v2233 = vld [vmem:[#allocation8 + $0x490] sm:$0xff]
    %v2234 = vld [vmem:[#allocation8 + $0x498] sm:$0xff]
    %v2235 = vld [vmem:[#allocation8 + $0x4a0] sm:$0xff]
    %v2236 = vld [vmem:[#allocation8 + $0x4a8] sm:$0xff]
    %v2237 = vld [vmem:[#allocation8 + $0x4b0] sm:$0xff]
    %v2238 = vld [vmem:[#allocation8 + $0x4b8] sm:$0xff]
    %v2239 = vld [vmem:[#allocation8 + $0x4c0] sm:$0xff]
    %v2240 = vld [vmem:[#allocation8 + $0x4c8] sm:$0xff]
    %v2241 = vld [vmem:[#allocation8 + $0x4d0] sm:$0xff]
    %v2242 = vld [vmem:[#allocation8 + $0x4d8] sm:$0xff]
    %v2243 = vld [vmem:[#allocation8 + $0x4e0] sm:$0xff]
    %v2244 = vld [vmem:[#allocation8 + $0x4e8] sm:$0xff]
    %v2245 = vld [vmem:[#allocation8 + $0x4f0] sm:$0xff]
    %v2246 = vld [vmem:[#allocation8 + $0x4f8] sm:$0xff]
    %v2247 = vld [vmem:[#allocation8 + $0x500] sm:$0xff]
    %v2248 = vld [vmem:[#allocation8 + $0x508] sm:$0xff]
    %v2249 = vld [vmem:[#allocation8 + $0x510] sm:$0xff]
    %v2250 = vld [vmem:[#allocation8 + $0x518] sm:$0xff]
    %v2251 = vld [vmem:[#allocation8 + $0x520] sm:$0xff]
    %v2252 = vld [vmem:[#allocation8 + $0x528] sm:$0xff]
    %v2253 = vld [vmem:[#allocation8 + $0x530] sm:$0xff]
    %v2254 = vld [vmem:[#allocation8 + $0x538] sm:$0xff]
    %v2255 = vld [vmem:[#allocation8 + $0x540] sm:$0xff]
    %v2256 = vld [vmem:[#allocation8 + $0x548] sm:$0xff]
    %v2257 = vld [vmem:[#allocation8 + $0x550] sm:$0xff]
    %v2258 = vld [vmem:[#allocation8 + $0x558] sm:$0xff]
    %v2259 = vld [vmem:[#allocation8 + $0x560] sm:$0xff]
    %v2260 = vld [vmem:[#allocation8 + $0x568] sm:$0xff]
    %v2261 = vld [vmem:[#allocation8 + $0x570] sm:$0xff]
    %v2262 = vld [vmem:[#allocation8 + $0x578] sm:$0xff]
    %v2263 = vld [vmem:[#allocation8 + $0x580] sm:$0xff]
    %v2264 = vld [vmem:[#allocation8 + $0x588] sm:$0xff]
    %v2265 = vld [vmem:[#allocation8 + $0x590] sm:$0xff]
    %v2266 = vld [vmem:[#allocation8 + $0x598] sm:$0xff]
    %v2267 = vld [vmem:[#allocation8 + $0x5a0] sm:$0xff]
    %v2268 = vld [vmem:[#allocation8 + $0x5a8] sm:$0xff]
    %v2269 = vld [vmem:[#allocation8 + $0x5b0] sm:$0xff]
    %v2270 = vld [vmem:[#allocation8 + $0x5b8] sm:$0xff]
    %v2271 = vld [vmem:[#allocation8 + $0x5c0] sm:$0xff]
    %v2272 = vld [vmem:[#allocation8 + $0x5c8] sm:$0xff]
    %v2273 = vld [vmem:[#allocation8 + $0x5d0] sm:$0xff]
    %v2274 = vld [vmem:[#allocation8 + $0x5d8] sm:$0xff]
    %v2275 = vld [vmem:[#allocation8 + $0x5e0] sm:$0xff]
    %v2276 = vld [vmem:[#allocation8 + $0x5e8] sm:$0xff]
    %v2277 = vld [vmem:[#allocation8 + $0x5f0] sm:$0xff]
    %v2278 = vld [vmem:[#allocation8 + $0x5f8] sm:$0xff]
    %v2279 = vld [vmem:[#allocation8 + $0x600] sm:$0xff]
    %v2280 = vld [vmem:[#allocation8 + $0x608] sm:$0xff]
    %v2281 = vld [vmem:[#allocation8 + $0x610] sm:$0xff]
    %v2282 = vld [vmem:[#allocation8 + $0x618] sm:$0xff]
    %v2283 = vld [vmem:[#allocation8 + $0x620] sm:$0xff]
    %v2284 = vld [vmem:[#allocation8 + $0x628] sm:$0xff]
    %v2285 = vld [vmem:[#allocation8 + $0x630] sm:$0xff]
    %v2286 = vld [vmem:[#allocation8 + $0x638] sm:$0xff]
    %v2287 = vld [vmem:[#allocation8 + $0x640] sm:$0xff]
    %v2288 = vld [vmem:[#allocation8 + $0x648] sm:$0xff]
    %v2289 = vld [vmem:[#allocation8 + $0x650] sm:$0xff]
    %v2290 = vld [vmem:[#allocation8 + $0x658] sm:$0xff]
    %v2291 = vld [vmem:[#allocation8 + $0x660] sm:$0xff]
    %v2292 = vld [vmem:[#allocation8 + $0x668] sm:$0xff]
    %v2293 = vld [vmem:[#allocation8 + $0x670] sm:$0xff]
    %v2294 = vld [vmem:[#allocation8 + $0x678] sm:$0xff]
    %v2295 = vld [vmem:[#allocation8 + $0x680] sm:$0xff]
    %v2296 = vld [vmem:[#allocation8 + $0x688] sm:$0xff]
    %v2297 = vld [vmem:[#allocation8 + $0x690] sm:$0xff]
    %v2298 = vld [vmem:[#allocation8 + $0x698] sm:$0xff]
    %v2299 = vld [vmem:[#allocation8 + $0x6a0] sm:$0xff]
    %v2300 = vld [vmem:[#allocation8 + $0x6a8] sm:$0xff]
    %v2301 = vld [vmem:[#allocation8 + $0x6b0] sm:$0xff]
    %v2302 = vld [vmem:[#allocation8 + $0x6b8] sm:$0xff]
    %v2303 = vld [vmem:[#allocation8 + $0x6c0] sm:$0xff]
    %v2304 = vld [vmem:[#allocation8 + $0x6c8] sm:$0xff]
    %v2305 = vld [vmem:[#allocation8 + $0x6d0] sm:$0xff]
    %v2306 = vld [vmem:[#allocation8 + $0x6d8] sm:$0xff]
    %v2307 = vld [vmem:[#allocation8 + $0x6e0] sm:$0xff]
    %v2308 = vld [vmem:[#allocation8 + $0x6e8] sm:$0xff]
    %v2309 = vld [vmem:[#allocation8 + $0x6f0] sm:$0xff]
    %v2310 = vld [vmem:[#allocation8 + $0x6f8] sm:$0xff]
    %v2311 = vld [vmem:[#allocation8 + $0x700] sm:$0xff]
    %v2312 = vld [vmem:[#allocation8 + $0x708] sm:$0xff]
    %v2313 = vld [vmem:[#allocation8 + $0x710] sm:$0xff]
    %v2314 = vld [vmem:[#allocation8 + $0x718] sm:$0xff]
    %v2315 = vld [vmem:[#allocation8 + $0x720] sm:$0xff]
    %v2316 = vld [vmem:[#allocation8 + $0x728] sm:$0xff]
    %v2317 = vld [vmem:[#allocation8 + $0x730] sm:$0xff]
    %v2318 = vld [vmem:[#allocation8 + $0x738] sm:$0xff]
    %v2319 = vld [vmem:[#allocation8 + $0x740] sm:$0xff]
    %v2320 = vld [vmem:[#allocation8 + $0x748] sm:$0xff]
    %v2321 = vld [vmem:[#allocation8 + $0x750] sm:$0xff]
    %v2322 = vld [vmem:[#allocation8 + $0x758] sm:$0xff]
    %v2323 = vld [vmem:[#allocation8 + $0x760] sm:$0xff]
    %v2324 = vld [vmem:[#allocation8 + $0x768] sm:$0xff]
    %v2325 = vld [vmem:[#allocation8 + $0x770] sm:$0xff]
    %v2326 = vld [vmem:[#allocation8 + $0x778] sm:$0xff]
    %v2327 = vld [vmem:[#allocation8 + $0x780] sm:$0xff]
    %v2328 = vld [vmem:[#allocation8 + $0x788] sm:$0xff]
    %v2329 = vld [vmem:[#allocation8 + $0x790] sm:$0xff]
    %v2330 = vld [vmem:[#allocation8 + $0x798] sm:$0xff]
    %v2331 = vld [vmem:[#allocation8 + $0x7a0] sm:$0xff]
    %v2332 = vld [vmem:[#allocation8 + $0x7a8] sm:$0xff]
    %v2333 = vld [vmem:[#allocation8 + $0x7b0] sm:$0xff]
    %v2334 = vld [vmem:[#allocation8 + $0x7b8] sm:$0xff]
    %v2335 = vld [vmem:[#allocation8 + $0x7c0] sm:$0xff]
    %v2336 = vld [vmem:[#allocation8 + $0x7c8] sm:$0xff]
    %v2337 = vld [vmem:[#allocation8 + $0x7d0] sm:$0xff]
    %v2338 = vld [vmem:[#allocation8 + $0x7d8] sm:$0xff]
    %v2339 = vld [vmem:[#allocation8 + $0x7e0] sm:$0xff]
    %v2340 = vld [vmem:[#allocation8 + $0x7e8] sm:$0xff]
    %v2341 = vld [vmem:[#allocation8 + $0x7f0] sm:$0xff]
    %v2342 = vld [vmem:[#allocation8 + $0x7f8] sm:$0xff]
    %v2343 = vld [vmem:[#allocation10] sm:$0xf]
    %v2345 = vperm.slane %v2343, 0
    %v2346 = vperm.slane %v2343, 1
    %v2347 = vperm.slane %v2343, 2
    %v2348 = vperm.slane %v2343, 3
    %v2609 = vunpack.c.l.b16 %v2087
    %v2610 = vunpack.c.h.b16 %v2087
    %v2611 = vunpack.c.l.b16 %v2088
    %v2612 = vunpack.c.h.b16 %v2088
    %v2613 = vunpack.c.l.b16 %v2089
    %v2614 = vunpack.c.h.b16 %v2089
    %v2615 = vunpack.c.l.b16 %v2090
    %v2616 = vunpack.c.h.b16 %v2090
    %v2617 = vunpack.c.l.b16 %v2091
    %v2618 = vunpack.c.h.b16 %v2091
    %v2619 = vunpack.c.l.b16 %v2092
    %v2620 = vunpack.c.h.b16 %v2092
    %v2621 = vunpack.c.l.b16 %v2093
    %v2622 = vunpack.c.h.b16 %v2093
    %v2623 = vunpack.c.l.b16 %v2094
    %v2624 = vunpack.c.h.b16 %v2094
    %v2625 = vunpack.c.l.b16 %v2095
    %v2626 = vunpack.c.h.b16 %v2095
    %v2627 = vunpack.c.l.b16 %v2096
    %v2628 = vunpack.c.h.b16 %v2096
    %v2629 = vunpack.c.l.b16 %v2097
    %v2630 = vunpack.c.h.b16 %v2097
    %v2631 = vunpack.c.l.b16 %v2098
    %v2632 = vunpack.c.h.b16 %v2098
    %v2633 = vunpack.c.l.b16 %v2099
    %v2634 = vunpack.c.h.b16 %v2099
    %v2635 = vunpack.c.l.b16 %v2100
    %v2636 = vunpack.c.h.b16 %v2100
    %v2637 = vunpack.c.l.b16 %v2101
    %v2638 = vunpack.c.h.b16 %v2101
    %v2639 = vunpack.c.l.b16 %v2102
    %v2640 = vunpack.c.h.b16 %v2102
    %v2641 = vunpack.c.l.b16 %v2103
    %v2642 = vunpack.c.h.b16 %v2103
    %v2643 = vunpack.c.l.b16 %v2104
    %v2644 = vunpack.c.h.b16 %v2104
    %v2645 = vunpack.c.l.b16 %v2105
    %v2646 = vunpack.c.h.b16 %v2105
    %v2647 = vunpack.c.l.b16 %v2106
    %v2648 = vunpack.c.h.b16 %v2106
    %v2649 = vunpack.c.l.b16 %v2107
    %v2650 = vunpack.c.h.b16 %v2107
    %v2651 = vunpack.c.l.b16 %v2108
    %v2652 = vunpack.c.h.b16 %v2108
    %v2653 = vunpack.c.l.b16 %v2109
    %v2654 = vunpack.c.h.b16 %v2109
    %v2655 = vunpack.c.l.b16 %v2110
    %v2656 = vunpack.c.h.b16 %v2110
    %v2657 = vunpack.c.l.b16 %v2111
    %v2658 = vunpack.c.h.b16 %v2111
    %v2659 = vunpack.c.l.b16 %v2112
    %v2660 = vunpack.c.h.b16 %v2112
    %v2661 = vunpack.c.l.b16 %v2113
    %v2662 = vunpack.c.h.b16 %v2113
    %v2663 = vunpack.c.l.b16 %v2114
    %v2664 = vunpack.c.h.b16 %v2114
    %v2665 = vunpack.c.l.b16 %v2115
    %v2666 = vunpack.c.h.b16 %v2115
    %v2667 = vunpack.c.l.b16 %v2116
    %v2668 = vunpack.c.h.b16 %v2116
    %v2669 = vunpack.c.l.b16 %v2117
    %v2670 = vunpack.c.h.b16 %v2117
    %v2671 = vunpack.c.l.b16 %v2118
    %v2672 = vunpack.c.h.b16 %v2118
    %v2673 = vunpack.c.l.b16 %v2119
    %v2674 = vunpack.c.h.b16 %v2119
    %v2675 = vunpack.c.l.b16 %v2120
    %v2676 = vunpack.c.h.b16 %v2120
    %v2677 = vunpack.c.l.b16 %v2121
    %v2678 = vunpack.c.h.b16 %v2121
    %v2679 = vunpack.c.l.b16 %v2122
    %v2680 = vunpack.c.h.b16 %v2122
    %v2681 = vunpack.c.l.b16 %v2123
    %v2682 = vunpack.c.h.b16 %v2123
    %v2683 = vunpack.c.l.b16 %v2124
    %v2684 = vunpack.c.h.b16 %v2124
    %v2685 = vunpack.c.l.b16 %v2125
    %v2686 = vunpack.c.h.b16 %v2125
    %v2687 = vunpack.c.l.b16 %v2126
    %v2688 = vunpack.c.h.b16 %v2126
    %v2689 = vunpack.c.l.b16 %v2127
    %v2690 = vunpack.c.h.b16 %v2127
    %v2691 = vunpack.c.l.b16 %v2128
    %v2692 = vunpack.c.h.b16 %v2128
    %v2693 = vunpack.c.l.b16 %v2129
    %v2694 = vunpack.c.h.b16 %v2129
    %v2695 = vunpack.c.l.b16 %v2130
    %v2696 = vunpack.c.h.b16 %v2130
    %v2697 = vunpack.c.l.b16 %v2131
    %v2698 = vunpack.c.h.b16 %v2131
    %v2699 = vunpack.c.l.b16 %v2132
    %v2700 = vunpack.c.h.b16 %v2132
    %v2701 = vunpack.c.l.b16 %v2133
    %v2702 = vunpack.c.h.b16 %v2133
    %v2703 = vunpack.c.l.b16 %v2134
    %v2704 = vunpack.c.h.b16 %v2134
    %v2705 = vunpack.c.l.b16 %v2135
    %v2706 = vunpack.c.h.b16 %v2135
    %v2707 = vunpack.c.l.b16 %v2136
    %v2708 = vunpack.c.h.b16 %v2136
    %v2709 = vunpack.c.l.b16 %v2137
    %v2710 = vunpack.c.h.b16 %v2137
    %v2711 = vunpack.c.l.b16 %v2138
    %v2712 = vunpack.c.h.b16 %v2138
    %v2713 = vunpack.c.l.b16 %v2139
    %v2714 = vunpack.c.h.b16 %v2139
    %v2715 = vunpack.c.l.b16 %v2140
    %v2716 = vunpack.c.h.b16 %v2140
    %v2717 = vunpack.c.l.b16 %v2141
    %v2718 = vunpack.c.h.b16 %v2141
    %v2719 = vunpack.c.l.b16 %v2142
    %v2720 = vunpack.c.h.b16 %v2142
    %v2721 = vunpack.c.l.b16 %v2143
    %v2722 = vunpack.c.h.b16 %v2143
    %v2723 = vunpack.c.l.b16 %v2144
    %v2724 = vunpack.c.h.b16 %v2144
    %v2725 = vunpack.c.l.b16 %v2145
    %v2726 = vunpack.c.h.b16 %v2145
    %v2727 = vunpack.c.l.b16 %v2146
    %v2728 = vunpack.c.h.b16 %v2146
    %v2729 = vunpack.c.l.b16 %v2147
    %v2730 = vunpack.c.h.b16 %v2147
    %v2731 = vunpack.c.l.b16 %v2148
    %v2732 = vunpack.c.h.b16 %v2148
    %v2733 = vunpack.c.l.b16 %v2149
    %v2734 = vunpack.c.h.b16 %v2149
    %v2735 = vunpack.c.l.b16 %v2150
    %v2736 = vunpack.c.h.b16 %v2150
    %v2737 = vunpack.c.l.b16 %v2151
    %v2738 = vunpack.c.h.b16 %v2151
    %v2739 = vunpack.c.l.b16 %v2152
    %v2740 = vunpack.c.h.b16 %v2152
    %v2741 = vunpack.c.l.b16 %v2153
    %v2742 = vunpack.c.h.b16 %v2153
    %v2743 = vunpack.c.l.b16 %v2154
    %v2744 = vunpack.c.h.b16 %v2154
    %v2745 = vunpack.c.l.b16 %v2155
    %v2746 = vunpack.c.h.b16 %v2155
    %v2747 = vunpack.c.l.b16 %v2156
    %v2748 = vunpack.c.h.b16 %v2156
    %v2749 = vunpack.c.l.b16 %v2157
    %v2750 = vunpack.c.h.b16 %v2157
    %v2751 = vunpack.c.l.b16 %v2158
    %v2752 = vunpack.c.h.b16 %v2158
    %v2753 = vunpack.c.l.b16 %v2159
    %v2754 = vunpack.c.h.b16 %v2159
    %v2755 = vunpack.c.l.b16 %v2160
    %v2756 = vunpack.c.h.b16 %v2160
    %v2757 = vunpack.c.l.b16 %v2161
    %v2758 = vunpack.c.h.b16 %v2161
    %v2759 = vunpack.c.l.b16 %v2162
    %v2760 = vunpack.c.h.b16 %v2162
    %v2761 = vunpack.c.l.b16 %v2163
    %v2762 = vunpack.c.h.b16 %v2163
    %v2763 = vunpack.c.l.b16 %v2164
    %v2764 = vunpack.c.h.b16 %v2164
    %v2765 = vunpack.c.l.b16 %v2165
    %v2766 = vunpack.c.h.b16 %v2165
    %v2767 = vunpack.c.l.b16 %v2166
    %v2768 = vunpack.c.h.b16 %v2166
    %v2769 = vunpack.c.l.b16 %v2167
    %v2770 = vunpack.c.h.b16 %v2167
    %v2771 = vunpack.c.l.b16 %v2168
    %v2772 = vunpack.c.h.b16 %v2168
    %v2773 = vunpack.c.l.b16 %v2169
    %v2774 = vunpack.c.h.b16 %v2169
    %v2775 = vunpack.c.l.b16 %v2170
    %v2776 = vunpack.c.h.b16 %v2170
    %v2777 = vunpack.c.l.b16 %v2171
    %v2778 = vunpack.c.h.b16 %v2171
    %v2779 = vunpack.c.l.b16 %v2172
    %v2780 = vunpack.c.h.b16 %v2172
    %v2781 = vunpack.c.l.b16 %v2173
    %v2782 = vunpack.c.h.b16 %v2173
    %v2783 = vunpack.c.l.b16 %v2174
    %v2784 = vunpack.c.h.b16 %v2174
    %v2785 = vunpack.c.l.b16 %v2175
    %v2786 = vunpack.c.h.b16 %v2175
    %v2787 = vunpack.c.l.b16 %v2176
    %v2788 = vunpack.c.h.b16 %v2176
    %v2789 = vunpack.c.l.b16 %v2177
    %v2790 = vunpack.c.h.b16 %v2177
    %v2791 = vunpack.c.l.b16 %v2178
    %v2792 = vunpack.c.h.b16 %v2178
    %v2793 = vunpack.c.l.b16 %v2179
    %v2794 = vunpack.c.h.b16 %v2179
    %v2795 = vunpack.c.l.b16 %v2180
    %v2796 = vunpack.c.h.b16 %v2180
    %v2797 = vunpack.c.l.b16 %v2181
    %v2798 = vunpack.c.h.b16 %v2181
    %v2799 = vunpack.c.l.b16 %v2182
    %v2800 = vunpack.c.h.b16 %v2182
    %v2801 = vunpack.c.l.b16 %v2183
    %v2802 = vunpack.c.h.b16 %v2183
    %v2803 = vunpack.c.l.b16 %v2184
    %v2804 = vunpack.c.h.b16 %v2184
    %v2805 = vunpack.c.l.b16 %v2185
    %v2806 = vunpack.c.h.b16 %v2185
    %v2807 = vunpack.c.l.b16 %v2186
    %v2808 = vunpack.c.h.b16 %v2186
    %v2809 = vunpack.c.l.b16 %v2187
    %v2810 = vunpack.c.h.b16 %v2187
    %v2811 = vunpack.c.l.b16 %v2188
    %v2812 = vunpack.c.h.b16 %v2188
    %v2813 = vunpack.c.l.b16 %v2189
    %v2814 = vunpack.c.h.b16 %v2189
    %v2815 = vunpack.c.l.b16 %v2190
    %v2816 = vunpack.c.h.b16 %v2190
    %v2817 = vunpack.c.l.b16 %v2191
    %v2818 = vunpack.c.h.b16 %v2191
    %v2819 = vunpack.c.l.b16 %v2192
    %v2820 = vunpack.c.h.b16 %v2192
    %v2821 = vunpack.c.l.b16 %v2193
    %v2822 = vunpack.c.h.b16 %v2193
    %v2823 = vunpack.c.l.b16 %v2194
    %v2824 = vunpack.c.h.b16 %v2194
    %v2825 = vunpack.c.l.b16 %v2195
    %v2826 = vunpack.c.h.b16 %v2195
    %v2827 = vunpack.c.l.b16 %v2196
    %v2828 = vunpack.c.h.b16 %v2196
    %v2829 = vunpack.c.l.b16 %v2197
    %v2830 = vunpack.c.h.b16 %v2197
    %v2831 = vunpack.c.l.b16 %v2198
    %v2832 = vunpack.c.h.b16 %v2198
    %v2833 = vunpack.c.l.b16 %v2199
    %v2834 = vunpack.c.h.b16 %v2199
    %v2835 = vunpack.c.l.b16 %v2200
    %v2836 = vunpack.c.h.b16 %v2200
    %v2837 = vunpack.c.l.b16 %v2201
    %v2838 = vunpack.c.h.b16 %v2201
    %v2839 = vunpack.c.l.b16 %v2202
    %v2840 = vunpack.c.h.b16 %v2202
    %v2841 = vunpack.c.l.b16 %v2203
    %v2842 = vunpack.c.h.b16 %v2203
    %v2843 = vunpack.c.l.b16 %v2204
    %v2844 = vunpack.c.h.b16 %v2204
    %v2845 = vunpack.c.l.b16 %v2205
    %v2846 = vunpack.c.h.b16 %v2205
    %v2847 = vunpack.c.l.b16 %v2206
    %v2848 = vunpack.c.h.b16 %v2206
    %v2849 = vunpack.c.l.b16 %v2207
    %v2850 = vunpack.c.h.b16 %v2207
    %v2851 = vunpack.c.l.b16 %v2208
    %v2852 = vunpack.c.h.b16 %v2208
    %v2853 = vunpack.c.l.b16 %v2209
    %v2854 = vunpack.c.h.b16 %v2209
    %v2855 = vunpack.c.l.b16 %v2210
    %v2856 = vunpack.c.h.b16 %v2210
    %v2857 = vunpack.c.l.b16 %v2211
    %v2858 = vunpack.c.h.b16 %v2211
    %v2859 = vunpack.c.l.b16 %v2212
    %v2860 = vunpack.c.h.b16 %v2212
    %v2861 = vunpack.c.l.b16 %v2213
    %v2862 = vunpack.c.h.b16 %v2213
    %v2863 = vunpack.c.l.b16 %v2214
    %v2864 = vunpack.c.h.b16 %v2214
    %v2865 = vunpack.c.l.b16 %v2215
    %v2866 = vunpack.c.h.b16 %v2215
    %v2867 = vunpack.c.l.b16 %v2216
    %v2868 = vunpack.c.h.b16 %v2216
    %v2869 = vunpack.c.l.b16 %v2217
    %v2870 = vunpack.c.h.b16 %v2217
    %v2871 = vunpack.c.l.b16 %v2218
    %v2872 = vunpack.c.h.b16 %v2218
    %v2873 = vunpack.c.l.b16 %v2219
    %v2874 = vunpack.c.h.b16 %v2219
    %v2875 = vunpack.c.l.b16 %v2220
    %v2876 = vunpack.c.h.b16 %v2220
    %v2877 = vunpack.c.l.b16 %v2221
    %v2878 = vunpack.c.h.b16 %v2221
    %v2879 = vunpack.c.l.b16 %v2222
    %v2880 = vunpack.c.h.b16 %v2222
    %v2881 = vunpack.c.l.b16 %v2223
    %v2882 = vunpack.c.h.b16 %v2223
    %v2883 = vunpack.c.l.b16 %v2224
    %v2884 = vunpack.c.h.b16 %v2224
    %v2885 = vunpack.c.l.b16 %v2225
    %v2886 = vunpack.c.h.b16 %v2225
    %v2887 = vunpack.c.l.b16 %v2226
    %v2888 = vunpack.c.h.b16 %v2226
    %v2889 = vunpack.c.l.b16 %v2227
    %v2890 = vunpack.c.h.b16 %v2227
    %v2891 = vunpack.c.l.b16 %v2228
    %v2892 = vunpack.c.h.b16 %v2228
    %v2893 = vunpack.c.l.b16 %v2229
    %v2894 = vunpack.c.h.b16 %v2229
    %v2895 = vunpack.c.l.b16 %v2230
    %v2896 = vunpack.c.h.b16 %v2230
    %v2897 = vunpack.c.l.b16 %v2231
    %v2898 = vunpack.c.h.b16 %v2231
    %v2899 = vunpack.c.l.b16 %v2232
    %v2900 = vunpack.c.h.b16 %v2232
    %v2901 = vunpack.c.l.b16 %v2233
    %v2902 = vunpack.c.h.b16 %v2233
    %v2903 = vunpack.c.l.b16 %v2234
    %v2904 = vunpack.c.h.b16 %v2234
    %v2905 = vunpack.c.l.b16 %v2235
    %v2906 = vunpack.c.h.b16 %v2235
    %v2907 = vunpack.c.l.b16 %v2236
    %v2908 = vunpack.c.h.b16 %v2236
    %v2909 = vunpack.c.l.b16 %v2237
    %v2910 = vunpack.c.h.b16 %v2237
    %v2911 = vunpack.c.l.b16 %v2238
    %v2912 = vunpack.c.h.b16 %v2238
    %v2913 = vunpack.c.l.b16 %v2239
    %v2914 = vunpack.c.h.b16 %v2239
    %v2915 = vunpack.c.l.b16 %v2240
    %v2916 = vunpack.c.h.b16 %v2240
    %v2917 = vunpack.c.l.b16 %v2241
    %v2918 = vunpack.c.h.b16 %v2241
    %v2919 = vunpack.c.l.b16 %v2242
    %v2920 = vunpack.c.h.b16 %v2242
    %v2921 = vunpack.c.l.b16 %v2243
    %v2922 = vunpack.c.h.b16 %v2243
    %v2923 = vunpack.c.l.b16 %v2244
    %v2924 = vunpack.c.h.b16 %v2244
    %v2925 = vunpack.c.l.b16 %v2245
    %v2926 = vunpack.c.h.b16 %v2245
    %v2927 = vunpack.c.l.b16 %v2246
    %v2928 = vunpack.c.h.b16 %v2246
    %v2929 = vunpack.c.l.b16 %v2247
    %v2930 = vunpack.c.h.b16 %v2247
    %v2931 = vunpack.c.l.b16 %v2248
    %v2932 = vunpack.c.h.b16 %v2248
    %v2933 = vunpack.c.l.b16 %v2249
    %v2934 = vunpack.c.h.b16 %v2249
    %v2935 = vunpack.c.l.b16 %v2250
    %v2936 = vunpack.c.h.b16 %v2250
    %v2937 = vunpack.c.l.b16 %v2251
    %v2938 = vunpack.c.h.b16 %v2251
    %v2939 = vunpack.c.l.b16 %v2252
    %v2940 = vunpack.c.h.b16 %v2252
    %v2941 = vunpack.c.l.b16 %v2253
    %v2942 = vunpack.c.h.b16 %v2253
    %v2943 = vunpack.c.l.b16 %v2254
    %v2944 = vunpack.c.h.b16 %v2254
    %v2945 = vunpack.c.l.b16 %v2255
    %v2946 = vunpack.c.h.b16 %v2255
    %v2947 = vunpack.c.l.b16 %v2256
    %v2948 = vunpack.c.h.b16 %v2256
    %v2949 = vunpack.c.l.b16 %v2257
    %v2950 = vunpack.c.h.b16 %v2257
    %v2951 = vunpack.c.l.b16 %v2258
    %v2952 = vunpack.c.h.b16 %v2258
    %v2953 = vunpack.c.l.b16 %v2259
    %v2954 = vunpack.c.h.b16 %v2259
    %v2955 = vunpack.c.l.b16 %v2260
    %v2956 = vunpack.c.h.b16 %v2260
    %v2957 = vunpack.c.l.b16 %v2261
    %v2958 = vunpack.c.h.b16 %v2261
    %v2959 = vunpack.c.l.b16 %v2262
    %v2960 = vunpack.c.h.b16 %v2262
    %v2961 = vunpack.c.l.b16 %v2263
    %v2962 = vunpack.c.h.b16 %v2263
    %v2963 = vunpack.c.l.b16 %v2264
    %v2964 = vunpack.c.h.b16 %v2264
    %v2965 = vunpack.c.l.b16 %v2265
    %v2966 = vunpack.c.h.b16 %v2265
    %v2967 = vunpack.c.l.b16 %v2266
    %v2968 = vunpack.c.h.b16 %v2266
    %v2969 = vunpack.c.l.b16 %v2267
    %v2970 = vunpack.c.h.b16 %v2267
    %v2971 = vunpack.c.l.b16 %v2268
    %v2972 = vunpack.c.h.b16 %v2268
    %v2973 = vunpack.c.l.b16 %v2269
    %v2974 = vunpack.c.h.b16 %v2269
    %v2975 = vunpack.c.l.b16 %v2270
    %v2976 = vunpack.c.h.b16 %v2270
    %v2977 = vunpack.c.l.b16 %v2271
    %v2978 = vunpack.c.h.b16 %v2271
    %v2979 = vunpack.c.l.b16 %v2272
    %v2980 = vunpack.c.h.b16 %v2272
    %v2981 = vunpack.c.l.b16 %v2273
    %v2982 = vunpack.c.h.b16 %v2273
    %v2983 = vunpack.c.l.b16 %v2274
    %v2984 = vunpack.c.h.b16 %v2274
    %v2985 = vunpack.c.l.b16 %v2275
    %v2986 = vunpack.c.h.b16 %v2275
    %v2987 = vunpack.c.l.b16 %v2276
    %v2988 = vunpack.c.h.b16 %v2276
    %v2989 = vunpack.c.l.b16 %v2277
    %v2990 = vunpack.c.h.b16 %v2277
    %v2991 = vunpack.c.l.b16 %v2278
    %v2992 = vunpack.c.h.b16 %v2278
    %v2993 = vunpack.c.l.b16 %v2279
    %v2994 = vunpack.c.h.b16 %v2279
    %v2995 = vunpack.c.l.b16 %v2280
    %v2996 = vunpack.c.h.b16 %v2280
    %v2997 = vunpack.c.l.b16 %v2281
    %v2998 = vunpack.c.h.b16 %v2281
    %v2999 = vunpack.c.l.b16 %v2282
    %v3000 = vunpack.c.h.b16 %v2282
    %v3001 = vunpack.c.l.b16 %v2283
    %v3002 = vunpack.c.h.b16 %v2283
    %v3003 = vunpack.c.l.b16 %v2284
    %v3004 = vunpack.c.h.b16 %v2284
    %v3005 = vunpack.c.l.b16 %v2285
    %v3006 = vunpack.c.h.b16 %v2285
    %v3007 = vunpack.c.l.b16 %v2286
    %v3008 = vunpack.c.h.b16 %v2286
    %v3009 = vunpack.c.l.b16 %v2287
    %v3010 = vunpack.c.h.b16 %v2287
    %v3011 = vunpack.c.l.b16 %v2288
    %v3012 = vunpack.c.h.b16 %v2288
    %v3013 = vunpack.c.l.b16 %v2289
    %v3014 = vunpack.c.h.b16 %v2289
    %v3015 = vunpack.c.l.b16 %v2290
    %v3016 = vunpack.c.h.b16 %v2290
    %v3017 = vunpack.c.l.b16 %v2291
    %v3018 = vunpack.c.h.b16 %v2291
    %v3019 = vunpack.c.l.b16 %v2292
    %v3020 = vunpack.c.h.b16 %v2292
    %v3021 = vunpack.c.l.b16 %v2293
    %v3022 = vunpack.c.h.b16 %v2293
    %v3023 = vunpack.c.l.b16 %v2294
    %v3024 = vunpack.c.h.b16 %v2294
    %v3025 = vunpack.c.l.b16 %v2295
    %v3026 = vunpack.c.h.b16 %v2295
    %v3027 = vunpack.c.l.b16 %v2296
    %v3028 = vunpack.c.h.b16 %v2296
    %v3029 = vunpack.c.l.b16 %v2297
    %v3030 = vunpack.c.h.b16 %v2297
    %v3031 = vunpack.c.l.b16 %v2298
    %v3032 = vunpack.c.h.b16 %v2298
    %v3033 = vunpack.c.l.b16 %v2299
    %v3034 = vunpack.c.h.b16 %v2299
    %v3035 = vunpack.c.l.b16 %v2300
    %v3036 = vunpack.c.h.b16 %v2300
    %v3037 = vunpack.c.l.b16 %v2301
    %v3038 = vunpack.c.h.b16 %v2301
    %v3039 = vunpack.c.l.b16 %v2302
    %v3040 = vunpack.c.h.b16 %v2302
    %v3041 = vunpack.c.l.b16 %v2303
    %v3042 = vunpack.c.h.b16 %v2303
    %v3043 = vunpack.c.l.b16 %v2304
    %v3044 = vunpack.c.h.b16 %v2304
    %v3045 = vunpack.c.l.b16 %v2305
    %v3046 = vunpack.c.h.b16 %v2305
    %v3047 = vunpack.c.l.b16 %v2306
    %v3048 = vunpack.c.h.b16 %v2306
    %v3049 = vunpack.c.l.b16 %v2307
    %v3050 = vunpack.c.h.b16 %v2307
    %v3051 = vunpack.c.l.b16 %v2308
    %v3052 = vunpack.c.h.b16 %v2308
    %v3053 = vunpack.c.l.b16 %v2309
    %v3054 = vunpack.c.h.b16 %v2309
    %v3055 = vunpack.c.l.b16 %v2310
    %v3056 = vunpack.c.h.b16 %v2310
    %v3057 = vunpack.c.l.b16 %v2311
    %v3058 = vunpack.c.h.b16 %v2311
    %v3059 = vunpack.c.l.b16 %v2312
    %v3060 = vunpack.c.h.b16 %v2312
    %v3061 = vunpack.c.l.b16 %v2313
    %v3062 = vunpack.c.h.b16 %v2313
    %v3063 = vunpack.c.l.b16 %v2314
    %v3064 = vunpack.c.h.b16 %v2314
    %v3065 = vunpack.c.l.b16 %v2315
    %v3066 = vunpack.c.h.b16 %v2315
    %v3067 = vunpack.c.l.b16 %v2316
    %v3068 = vunpack.c.h.b16 %v2316
    %v3069 = vunpack.c.l.b16 %v2317
    %v3070 = vunpack.c.h.b16 %v2317
    %v3071 = vunpack.c.l.b16 %v2318
    %v3072 = vunpack.c.h.b16 %v2318
    %v3073 = vunpack.c.l.b16 %v2319
    %v3074 = vunpack.c.h.b16 %v2319
    %v3075 = vunpack.c.l.b16 %v2320
    %v3076 = vunpack.c.h.b16 %v2320
    %v3077 = vunpack.c.l.b16 %v2321
    %v3078 = vunpack.c.h.b16 %v2321
    %v3079 = vunpack.c.l.b16 %v2322
    %v3080 = vunpack.c.h.b16 %v2322
    %v3081 = vunpack.c.l.b16 %v2323
    %v3082 = vunpack.c.h.b16 %v2323
    %v3083 = vunpack.c.l.b16 %v2324
    %v3084 = vunpack.c.h.b16 %v2324
    %v3085 = vunpack.c.l.b16 %v2325
    %v3086 = vunpack.c.h.b16 %v2325
    %v3087 = vunpack.c.l.b16 %v2326
    %v3088 = vunpack.c.h.b16 %v2326
    %v3089 = vunpack.c.l.b16 %v2327
    %v3090 = vunpack.c.h.b16 %v2327
    %v3091 = vunpack.c.l.b16 %v2328
    %v3092 = vunpack.c.h.b16 %v2328
    %v3093 = vunpack.c.l.b16 %v2329
    %v3094 = vunpack.c.h.b16 %v2329
    %v3095 = vunpack.c.l.b16 %v2330
    %v3096 = vunpack.c.h.b16 %v2330
    %v3097 = vunpack.c.l.b16 %v2331
    %v3098 = vunpack.c.h.b16 %v2331
    %v3099 = vunpack.c.l.b16 %v2332
    %v3100 = vunpack.c.h.b16 %v2332
    %v3101 = vunpack.c.l.b16 %v2333
    %v3102 = vunpack.c.h.b16 %v2333
    %v3103 = vunpack.c.l.b16 %v2334
    %v3104 = vunpack.c.h.b16 %v2334
    %v3105 = vunpack.c.l.b16 %v2335
    %v3106 = vunpack.c.h.b16 %v2335
    %v3107 = vunpack.c.l.b16 %v2336
    %v3108 = vunpack.c.h.b16 %v2336
    %v3109 = vunpack.c.l.b16 %v2337
    %v3110 = vunpack.c.h.b16 %v2337
    %v3111 = vunpack.c.l.b16 %v2338
    %v3112 = vunpack.c.h.b16 %v2338
    %v3113 = vunpack.c.l.b16 %v2339
    %v3114 = vunpack.c.h.b16 %v2339
    %v3115 = vunpack.c.l.b16 %v2340
    %v3116 = vunpack.c.h.b16 %v2340
    %v3117 = vunpack.c.l.b16 %v2341
    %v3118 = vunpack.c.h.b16 %v2341
    %v3119 = vunpack.c.l.b16 %v2342
    %v3120 = vunpack.c.h.b16 %v2342
    %v3121 = vpack.c.b16 %v2613, %v2609
    %v3122 = vpack.c.b16 %v2614, %v2610
    %v3123 = vpack.c.b16 %v2615, %v2611
    %v3124 = vpack.c.b16 %v2616, %v2612
    %v3125 = vpack.c.b16 %v2621, %v2617
    %v3126 = vpack.c.b16 %v2622, %v2618
    %v3127 = vpack.c.b16 %v2623, %v2619
    %v3128 = vpack.c.b16 %v2624, %v2620
    %v3129 = vpack.c.b16 %v2629, %v2625
    %v3130 = vpack.c.b16 %v2630, %v2626
    %v3131 = vpack.c.b16 %v2631, %v2627
    %v3132 = vpack.c.b16 %v2632, %v2628
    %v3133 = vpack.c.b16 %v2637, %v2633
    %v3134 = vpack.c.b16 %v2638, %v2634
    %v3135 = vpack.c.b16 %v2639, %v2635
    %v3136 = vpack.c.b16 %v2640, %v2636
    %v3137 = vpack.c.b16 %v2645, %v2641
    %v3138 = vpack.c.b16 %v2646, %v2642
    %v3139 = vpack.c.b16 %v2647, %v2643
    %v3140 = vpack.c.b16 %v2648, %v2644
    %v3141 = vpack.c.b16 %v2653, %v2649
    %v3142 = vpack.c.b16 %v2654, %v2650
    %v3143 = vpack.c.b16 %v2655, %v2651
    %v3144 = vpack.c.b16 %v2656, %v2652
    %v3145 = vpack.c.b16 %v2661, %v2657
    %v3146 = vpack.c.b16 %v2662, %v2658
    %v3147 = vpack.c.b16 %v2663, %v2659
    %v3148 = vpack.c.b16 %v2664, %v2660
    %v3149 = vpack.c.b16 %v2669, %v2665
    %v3150 = vpack.c.b16 %v2670, %v2666
    %v3151 = vpack.c.b16 %v2671, %v2667
    %v3152 = vpack.c.b16 %v2672, %v2668
    %v3153 = vpack.c.b16 %v2677, %v2673
    %v3154 = vpack.c.b16 %v2678, %v2674
    %v3155 = vpack.c.b16 %v2679, %v2675
    %v3156 = vpack.c.b16 %v2680, %v2676
    %v3157 = vpack.c.b16 %v2685, %v2681
    %v3158 = vpack.c.b16 %v2686, %v2682
    %v3159 = vpack.c.b16 %v2687, %v2683
    %v3160 = vpack.c.b16 %v2688, %v2684
    %v3161 = vpack.c.b16 %v2693, %v2689
    %v3162 = vpack.c.b16 %v2694, %v2690
    %v3163 = vpack.c.b16 %v2695, %v2691
    %v3164 = vpack.c.b16 %v2696, %v2692
    %v3165 = vpack.c.b16 %v2701, %v2697
    %v3166 = vpack.c.b16 %v2702, %v2698
    %v3167 = vpack.c.b16 %v2703, %v2699
    %v3168 = vpack.c.b16 %v2704, %v2700
    %v3169 = vpack.c.b16 %v2709, %v2705
    %v3170 = vpack.c.b16 %v2710, %v2706
    %v3171 = vpack.c.b16 %v2711, %v2707
    %v3172 = vpack.c.b16 %v2712, %v2708
    %v3173 = vpack.c.b16 %v2717, %v2713
    %v3174 = vpack.c.b16 %v2718, %v2714
    %v3175 = vpack.c.b16 %v2719, %v2715
    %v3176 = vpack.c.b16 %v2720, %v2716
    %v3177 = vpack.c.b16 %v2725, %v2721
    %v3178 = vpack.c.b16 %v2726, %v2722
    %v3179 = vpack.c.b16 %v2727, %v2723
    %v3180 = vpack.c.b16 %v2728, %v2724
    %v3181 = vpack.c.b16 %v2733, %v2729
    %v3182 = vpack.c.b16 %v2734, %v2730
    %v3183 = vpack.c.b16 %v2735, %v2731
    %v3184 = vpack.c.b16 %v2736, %v2732
    %v3185 = vpack.c.b16 %v2741, %v2737
    %v3186 = vpack.c.b16 %v2742, %v2738
    %v3187 = vpack.c.b16 %v2743, %v2739
    %v3188 = vpack.c.b16 %v2744, %v2740
    %v3189 = vpack.c.b16 %v2749, %v2745
    %v3190 = vpack.c.b16 %v2750, %v2746
    %v3191 = vpack.c.b16 %v2751, %v2747
    %v3192 = vpack.c.b16 %v2752, %v2748
    %v3193 = vpack.c.b16 %v2757, %v2753
    %v3194 = vpack.c.b16 %v2758, %v2754
    %v3195 = vpack.c.b16 %v2759, %v2755
    %v3196 = vpack.c.b16 %v2760, %v2756
    %v3197 = vpack.c.b16 %v2765, %v2761
    %v3198 = vpack.c.b16 %v2766, %v2762
    %v3199 = vpack.c.b16 %v2767, %v2763
    %v3200 = vpack.c.b16 %v2768, %v2764
    %v3201 = vpack.c.b16 %v2773, %v2769
    %v3202 = vpack.c.b16 %v2774, %v2770
    %v3203 = vpack.c.b16 %v2775, %v2771
    %v3204 = vpack.c.b16 %v2776, %v2772
    %v3205 = vpack.c.b16 %v2781, %v2777
    %v3206 = vpack.c.b16 %v2782, %v2778
    %v3207 = vpack.c.b16 %v2783, %v2779
    %v3208 = vpack.c.b16 %v2784, %v2780
    %v3209 = vpack.c.b16 %v2789, %v2785
    %v3210 = vpack.c.b16 %v2790, %v2786
    %v3211 = vpack.c.b16 %v2791, %v2787
    %v3212 = vpack.c.b16 %v2792, %v2788
    %v3213 = vpack.c.b16 %v2797, %v2793
    %v3214 = vpack.c.b16 %v2798, %v2794
    %v3215 = vpack.c.b16 %v2799, %v2795
    %v3216 = vpack.c.b16 %v2800, %v2796
    %v3217 = vpack.c.b16 %v2805, %v2801
    %v3218 = vpack.c.b16 %v2806, %v2802
    %v3219 = vpack.c.b16 %v2807, %v2803
    %v3220 = vpack.c.b16 %v2808, %v2804
    %v3221 = vpack.c.b16 %v2813, %v2809
    %v3222 = vpack.c.b16 %v2814, %v2810
    %v3223 = vpack.c.b16 %v2815, %v2811
    %v3224 = vpack.c.b16 %v2816, %v2812
    %v3225 = vpack.c.b16 %v2821, %v2817
    %v3226 = vpack.c.b16 %v2822, %v2818
    %v3227 = vpack.c.b16 %v2823, %v2819
    %v3228 = vpack.c.b16 %v2824, %v2820
    %v3229 = vpack.c.b16 %v2829, %v2825
    %v3230 = vpack.c.b16 %v2830, %v2826
    %v3231 = vpack.c.b16 %v2831, %v2827
    %v3232 = vpack.c.b16 %v2832, %v2828
    %v3233 = vpack.c.b16 %v2837, %v2833
    %v3234 = vpack.c.b16 %v2838, %v2834
    %v3235 = vpack.c.b16 %v2839, %v2835
    %v3236 = vpack.c.b16 %v2840, %v2836
    %v3237 = vpack.c.b16 %v2845, %v2841
    %v3238 = vpack.c.b16 %v2846, %v2842
    %v3239 = vpack.c.b16 %v2847, %v2843
    %v3240 = vpack.c.b16 %v2848, %v2844
    %v3241 = vpack.c.b16 %v2853, %v2849
    %v3242 = vpack.c.b16 %v2854, %v2850
    %v3243 = vpack.c.b16 %v2855, %v2851
    %v3244 = vpack.c.b16 %v2856, %v2852
    %v3245 = vpack.c.b16 %v2861, %v2857
    %v3246 = vpack.c.b16 %v2862, %v2858
    %v3247 = vpack.c.b16 %v2863, %v2859
    %v3248 = vpack.c.b16 %v2864, %v2860
    %v3249 = vpack.c.b16 %v2869, %v2865
    %v3250 = vpack.c.b16 %v2870, %v2866
    %v3251 = vpack.c.b16 %v2871, %v2867
    %v3252 = vpack.c.b16 %v2872, %v2868
    %v3253 = vpack.c.b16 %v2877, %v2873
    %v3254 = vpack.c.b16 %v2878, %v2874
    %v3255 = vpack.c.b16 %v2879, %v2875
    %v3256 = vpack.c.b16 %v2880, %v2876
    %v3257 = vpack.c.b16 %v2885, %v2881
    %v3258 = vpack.c.b16 %v2886, %v2882
    %v3259 = vpack.c.b16 %v2887, %v2883
    %v3260 = vpack.c.b16 %v2888, %v2884
    %v3261 = vpack.c.b16 %v2893, %v2889
    %v3262 = vpack.c.b16 %v2894, %v2890
    %v3263 = vpack.c.b16 %v2895, %v2891
    %v3264 = vpack.c.b16 %v2896, %v2892
    %v3265 = vpack.c.b16 %v2901, %v2897
    %v3266 = vpack.c.b16 %v2902, %v2898
    %v3267 = vpack.c.b16 %v2903, %v2899
    %v3268 = vpack.c.b16 %v2904, %v2900
    %v3269 = vpack.c.b16 %v2909, %v2905
    %v3270 = vpack.c.b16 %v2910, %v2906
    %v3271 = vpack.c.b16 %v2911, %v2907
    %v3272 = vpack.c.b16 %v2912, %v2908
    %v3273 = vpack.c.b16 %v2917, %v2913
    %v3274 = vpack.c.b16 %v2918, %v2914
    %v3275 = vpack.c.b16 %v2919, %v2915
    %v3276 = vpack.c.b16 %v2920, %v2916
    %v3277 = vpack.c.b16 %v2925, %v2921
    %v3278 = vpack.c.b16 %v2926, %v2922
    %v3279 = vpack.c.b16 %v2927, %v2923
    %v3280 = vpack.c.b16 %v2928, %v2924
    %v3281 = vpack.c.b16 %v2933, %v2929
    %v3282 = vpack.c.b16 %v2934, %v2930
    %v3283 = vpack.c.b16 %v2935, %v2931
    %v3284 = vpack.c.b16 %v2936, %v2932
    %v3285 = vpack.c.b16 %v2941, %v2937
    %v3286 = vpack.c.b16 %v2942, %v2938
    %v3287 = vpack.c.b16 %v2943, %v2939
    %v3288 = vpack.c.b16 %v2944, %v2940
    %v3289 = vpack.c.b16 %v2949, %v2945
    %v3290 = vpack.c.b16 %v2950, %v2946
    %v3291 = vpack.c.b16 %v2951, %v2947
    %v3292 = vpack.c.b16 %v2952, %v2948
    %v3293 = vpack.c.b16 %v2957, %v2953
    %v3294 = vpack.c.b16 %v2958, %v2954
    %v3295 = vpack.c.b16 %v2959, %v2955
    %v3296 = vpack.c.b16 %v2960, %v2956
    %v3297 = vpack.c.b16 %v2965, %v2961
    %v3298 = vpack.c.b16 %v2966, %v2962
    %v3299 = vpack.c.b16 %v2967, %v2963
    %v3300 = vpack.c.b16 %v2968, %v2964
    %v3301 = vpack.c.b16 %v2973, %v2969
    %v3302 = vpack.c.b16 %v2974, %v2970
    %v3303 = vpack.c.b16 %v2975, %v2971
    %v3304 = vpack.c.b16 %v2976, %v2972
    %v3305 = vpack.c.b16 %v2981, %v2977
    %v3306 = vpack.c.b16 %v2982, %v2978
    %v3307 = vpack.c.b16 %v2983, %v2979
    %v3308 = vpack.c.b16 %v2984, %v2980
    %v3309 = vpack.c.b16 %v2989, %v2985
    %v3310 = vpack.c.b16 %v2990, %v2986
    %v3311 = vpack.c.b16 %v2991, %v2987
    %v3312 = vpack.c.b16 %v2992, %v2988
    %v3313 = vpack.c.b16 %v2997, %v2993
    %v3314 = vpack.c.b16 %v2998, %v2994
    %v3315 = vpack.c.b16 %v2999, %v2995
    %v3316 = vpack.c.b16 %v3000, %v2996
    %v3317 = vpack.c.b16 %v3005, %v3001
    %v3318 = vpack.c.b16 %v3006, %v3002
    %v3319 = vpack.c.b16 %v3007, %v3003
    %v3320 = vpack.c.b16 %v3008, %v3004
    %v3321 = vpack.c.b16 %v3013, %v3009
    %v3322 = vpack.c.b16 %v3014, %v3010
    %v3323 = vpack.c.b16 %v3015, %v3011
    %v3324 = vpack.c.b16 %v3016, %v3012
    %v3325 = vpack.c.b16 %v3021, %v3017
    %v3326 = vpack.c.b16 %v3022, %v3018
    %v3327 = vpack.c.b16 %v3023, %v3019
    %v3328 = vpack.c.b16 %v3024, %v3020
    %v3329 = vpack.c.b16 %v3029, %v3025
    %v3330 = vpack.c.b16 %v3030, %v3026
    %v3331 = vpack.c.b16 %v3031, %v3027
    %v3332 = vpack.c.b16 %v3032, %v3028
    %v3333 = vpack.c.b16 %v3037, %v3033
    %v3334 = vpack.c.b16 %v3038, %v3034
    %v3335 = vpack.c.b16 %v3039, %v3035
    %v3336 = vpack.c.b16 %v3040, %v3036
    %v3337 = vpack.c.b16 %v3045, %v3041
    %v3338 = vpack.c.b16 %v3046, %v3042
    %v3339 = vpack.c.b16 %v3047, %v3043
    %v3340 = vpack.c.b16 %v3048, %v3044
    %v3341 = vpack.c.b16 %v3053, %v3049
    %v3342 = vpack.c.b16 %v3054, %v3050
    %v3343 = vpack.c.b16 %v3055, %v3051
    %v3344 = vpack.c.b16 %v3056, %v3052
    %v3345 = vpack.c.b16 %v3061, %v3057
    %v3346 = vpack.c.b16 %v3062, %v3058
    %v3347 = vpack.c.b16 %v3063, %v3059
    %v3348 = vpack.c.b16 %v3064, %v3060
    %v3349 = vpack.c.b16 %v3069, %v3065
    %v3350 = vpack.c.b16 %v3070, %v3066
    %v3351 = vpack.c.b16 %v3071, %v3067
    %v3352 = vpack.c.b16 %v3072, %v3068
    %v3353 = vpack.c.b16 %v3077, %v3073
    %v3354 = vpack.c.b16 %v3078, %v3074
    %v3355 = vpack.c.b16 %v3079, %v3075
    %v3356 = vpack.c.b16 %v3080, %v3076
    %v3357 = vpack.c.b16 %v3085, %v3081
    %v3358 = vpack.c.b16 %v3086, %v3082
    %v3359 = vpack.c.b16 %v3087, %v3083
    %v3360 = vpack.c.b16 %v3088, %v3084
    %v3361 = vpack.c.b16 %v3093, %v3089
    %v3362 = vpack.c.b16 %v3094, %v3090
    %v3363 = vpack.c.b16 %v3095, %v3091
    %v3364 = vpack.c.b16 %v3096, %v3092
    %v3365 = vpack.c.b16 %v3101, %v3097
    %v3366 = vpack.c.b16 %v3102, %v3098
    %v3367 = vpack.c.b16 %v3103, %v3099
    %v3368 = vpack.c.b16 %v3104, %v3100
    %v3369 = vpack.c.b16 %v3109, %v3105
    %v3370 = vpack.c.b16 %v3110, %v3106
    %v3371 = vpack.c.b16 %v3111, %v3107
    %v3372 = vpack.c.b16 %v3112, %v3108
    %v3373 = vpack.c.b16 %v3117, %v3113
    %v3374 = vpack.c.b16 %v3118, %v3114
    %v3375 = vpack.c.b16 %v3119, %v3115
    %v3376 = vpack.c.b16 %v3120, %v3116
    %3633 = vmatpush.bf16.msra.mxu0 %v3149
    %3634 = vmatpush.bf16.msra.mxu0 %v3145
    %3635 = vmatpush.bf16.msra.mxu0 %v3141
    %3636 = vmatpush.bf16.msra.mxu0 %v3137
    %3637 = vmatpush.bf16.msra.mxu0 %v3133
    %3638 = vmatpush.bf16.msra.mxu0 %v3129
    %3639 = vmatpush.bf16.msra.mxu0 %v3125
    %3640 = vmatpush.bf16.msra.mxu0 %v3121
    %3641 = vmatmul.bf16.gmra.mxu0 %v2079
    %v3642 = vpop.f32.mrf.mxu0
    %v3643 = vadd.f32 %v2345, %v3642
    %v3644 = vpop.f32.mrf.mxu0
    %3645 = vdwg.mxu0
    %3646 = vmatpush.bf16.msra.mxu0 %v3181
    %3647 = vmatpush.bf16.msra.mxu0 %v3177
    %3648 = vmatpush.bf16.msra.mxu0 %v3173
    %3649 = vmatpush.bf16.msra.mxu0 %v3169
    %3650 = vmatpush.bf16.msra.mxu0 %v3165
    %3651 = vmatpush.bf16.msra.mxu0 %v3161
    %3652 = vmatpush.bf16.msra.mxu0 %v3157
    %3653 = vmatpush.bf16.msra.mxu0 %v3153
    %3654 = vmatmul.bf16.gmra.mxu0 %v2080
    %v3655 = vpop.f32.mrf.mxu0
    %v3656 = vadd.f32 %v3643, %v3655
    %v3657 = vpop.f32.mrf.mxu0
    %3658 = vdwg.mxu0
    %3659 = vmatpush.bf16.msra.mxu0 %v3213
    %3660 = vmatpush.bf16.msra.mxu0 %v3209
    %3661 = vmatpush.bf16.msra.mxu0 %v3205
    %3662 = vmatpush.bf16.msra.mxu0 %v3201
    %3663 = vmatpush.bf16.msra.mxu0 %v3197
    %3664 = vmatpush.bf16.msra.mxu0 %v3193
    %3665 = vmatpush.bf16.msra.mxu0 %v3189
    %3666 = vmatpush.bf16.msra.mxu0 %v3185
    %3667 = vmatmul.bf16.gmra.mxu0 %v2081
    %v3668 = vpop.f32.mrf.mxu0
    %v3669 = vadd.f32 %v3656, %v3668
    %v3670 = vpop.f32.mrf.mxu0
    %3671 = vdwg.mxu0
    %3672 = vmatpush.bf16.msra.mxu0 %v3245
    %3673 = vmatpush.bf16.msra.mxu0 %v3241
    %3674 = vmatpush.bf16.msra.mxu0 %v3237
    %3675 = vmatpush.bf16.msra.mxu0 %v3233
    %3676 = vmatpush.bf16.msra.mxu0 %v3229
    %3677 = vmatpush.bf16.msra.mxu0 %v3225
    %3678 = vmatpush.bf16.msra.mxu0 %v3221
    %3679 = vmatpush.bf16.msra.mxu0 %v3217
    %3680 = vmatmul.bf16.gmra.mxu0 %v2082
    %v3681 = vpop.f32.mrf.mxu0
    %v3682 = vadd.f32 %v3669, %v3681
    %v3683 = vpop.f32.mrf.mxu0
    %3684 = vdwg.mxu0
    %3685 = vmatpush.bf16.msra.mxu0 %v3277
    %3686 = vmatpush.bf16.msra.mxu0 %v3273
    %3687 = vmatpush.bf16.msra.mxu0 %v3269
    %3688 = vmatpush.bf16.msra.mxu0 %v3265
    %3689 = vmatpush.bf16.msra.mxu0 %v3261
    %3690 = vmatpush.bf16.msra.mxu0 %v3257
    %3691 = vmatpush.bf16.msra.mxu0 %v3253
    %3692 = vmatpush.bf16.msra.mxu0 %v3249
    %3693 = vmatmul.bf16.gmra.mxu0 %v2083
    %v3694 = vpop.f32.mrf.mxu0
    %v3695 = vadd.f32 %v3682, %v3694
    %v3696 = vpop.f32.mrf.mxu0
    %3697 = vdwg.mxu0
    %3698 = vmatpush.bf16.msra.mxu0 %v3309
    %3699 = vmatpush.bf16.msra.mxu0 %v3305
    %3700 = vmatpush.bf16.msra.mxu0 %v3301
    %3701 = vmatpush.bf16.msra.mxu0 %v3297
    %3702 = vmatpush.bf16.msra.mxu0 %v3293
    %3703 = vmatpush.bf16.msra.mxu0 %v3289
    %3704 = vmatpush.bf16.msra.mxu0 %v3285
    %3705 = vmatpush.bf16.msra.mxu0 %v3281
    %3706 = vmatmul.bf16.gmra.mxu0 %v2084
    %v3707 = vpop.f32.mrf.mxu0
    %v3708 = vadd.f32 %v3695, %v3707
    %v3709 = vpop.f32.mrf.mxu0
    %3710 = vdwg.mxu0
    %3711 = vmatpush.bf16.msra.mxu0 %v3341
    %3712 = vmatpush.bf16.msra.mxu0 %v3337
    %3713 = vmatpush.bf16.msra.mxu0 %v3333
    %3714 = vmatpush.bf16.msra.mxu0 %v3329
    %3715 = vmatpush.bf16.msra.mxu0 %v3325
    %3716 = vmatpush.bf16.msra.mxu0 %v3321
    %3717 = vmatpush.bf16.msra.mxu0 %v3317
    %3718 = vmatpush.bf16.msra.mxu0 %v3313
    %3719 = vmatmul.bf16.gmra.mxu0 %v2085
    %v3720 = vpop.f32.mrf.mxu0
    %v3721 = vadd.f32 %v3708, %v3720
    %v3722 = vpop.f32.mrf.mxu0
    %3723 = vdwg.mxu0
    %3724 = vmatpush.bf16.msra.mxu0 %v3373
    %3725 = vmatpush.bf16.msra.mxu0 %v3369
    %3726 = vmatpush.bf16.msra.mxu0 %v3365
    %3727 = vmatpush.bf16.msra.mxu0 %v3361
    %3728 = vmatpush.bf16.msra.mxu0 %v3357
    %3729 = vmatpush.bf16.msra.mxu0 %v3353
    %3730 = vmatpush.bf16.msra.mxu0 %v3349
    %3731 = vmatpush.bf16.msra.mxu0 %v3345
    %3732 = vmatmul.bf16.gmra.mxu0 %v2086
    %v3733 = vpop.f32.mrf.mxu0
    %v3734 = vadd.f32 %v3721, %v3733
    %v3735 = vpop.f32.mrf.mxu0
    %3736 = vdwg.mxu0
    %3737 = vmatpush.bf16.msra.mxu0 %v3150
    %3738 = vmatpush.bf16.msra.mxu0 %v3146
    %3739 = vmatpush.bf16.msra.mxu0 %v3142
    %3740 = vmatpush.bf16.msra.mxu0 %v3138
    %3741 = vmatpush.bf16.msra.mxu0 %v3134
    %3742 = vmatpush.bf16.msra.mxu0 %v3130
    %3743 = vmatpush.bf16.msra.mxu0 %v3126
    %3744 = vmatpush.bf16.msra.mxu0 %v3122
    %3745 = vmatmul.bf16.gmra.mxu0 %v2079
    %v3746 = vpop.f32.mrf.mxu0
    %v3747 = vadd.f32 %v2346, %v3746
    %v3748 = vpop.f32.mrf.mxu0
    %3749 = vdwg.mxu0
    %3750 = vmatpush.bf16.msra.mxu0 %v3182
    %3751 = vmatpush.bf16.msra.mxu0 %v3178
    %3752 = vmatpush.bf16.msra.mxu0 %v3174
    %3753 = vmatpush.bf16.msra.mxu0 %v3170
    %3754 = vmatpush.bf16.msra.mxu0 %v3166
    %3755 = vmatpush.bf16.msra.mxu0 %v3162
    %3756 = vmatpush.bf16.msra.mxu0 %v3158
    %3757 = vmatpush.bf16.msra.mxu0 %v3154
    %3758 = vmatmul.bf16.gmra.mxu0 %v2080
    %v3759 = vpop.f32.mrf.mxu0
    %v3760 = vadd.f32 %v3747, %v3759
    %v3761 = vpop.f32.mrf.mxu0
    %3762 = vdwg.mxu0
    %3763 = vmatpush.bf16.msra.mxu0 %v3214
    %3764 = vmatpush.bf16.msra.mxu0 %v3210
    %3765 = vmatpush.bf16.msra.mxu0 %v3206
    %3766 = vmatpush.bf16.msra.mxu0 %v3202
    %3767 = vmatpush.bf16.msra.mxu0 %v3198
    %3768 = vmatpush.bf16.msra.mxu0 %v3194
    %3769 = vmatpush.bf16.msra.mxu0 %v3190
    %3770 = vmatpush.bf16.msra.mxu0 %v3186
    %3771 = vmatmul.bf16.gmra.mxu0 %v2081
    %v3772 = vpop.f32.mrf.mxu0
    %v3773 = vadd.f32 %v3760, %v3772
    %v3774 = vpop.f32.mrf.mxu0
    %3775 = vdwg.mxu0
    %3776 = vmatpush.bf16.msra.mxu0 %v3246
    %3777 = vmatpush.bf16.msra.mxu0 %v3242
    %3778 = vmatpush.bf16.msra.mxu0 %v3238
    %3779 = vmatpush.bf16.msra.mxu0 %v3234
    %3780 = vmatpush.bf16.msra.mxu0 %v3230
    %3781 = vmatpush.bf16.msra.mxu0 %v3226
    %3782 = vmatpush.bf16.msra.mxu0 %v3222
    %3783 = vmatpush.bf16.msra.mxu0 %v3218
    %3784 = vmatmul.bf16.gmra.mxu0 %v2082
    %v3785 = vpop.f32.mrf.mxu0
    %v3786 = vadd.f32 %v3773, %v3785
    %v3787 = vpop.f32.mrf.mxu0
    %3788 = vdwg.mxu0
    %3789 = vmatpush.bf16.msra.mxu0 %v3278
    %3790 = vmatpush.bf16.msra.mxu0 %v3274
    %3791 = vmatpush.bf16.msra.mxu0 %v3270
    %3792 = vmatpush.bf16.msra.mxu0 %v3266
    %3793 = vmatpush.bf16.msra.mxu0 %v3262
    %3794 = vmatpush.bf16.msra.mxu0 %v3258
    %3795 = vmatpush.bf16.msra.mxu0 %v3254
    %3796 = vmatpush.bf16.msra.mxu0 %v3250
    %3797 = vmatmul.bf16.gmra.mxu0 %v2083
    %v3798 = vpop.f32.mrf.mxu0
    %v3799 = vadd.f32 %v3786, %v3798
    %v3800 = vpop.f32.mrf.mxu0
    %3801 = vdwg.mxu0
    %3802 = vmatpush.bf16.msra.mxu0 %v3310
    %3803 = vmatpush.bf16.msra.mxu0 %v3306
    %3804 = vmatpush.bf16.msra.mxu0 %v3302
    %3805 = vmatpush.bf16.msra.mxu0 %v3298
    %3806 = vmatpush.bf16.msra.mxu0 %v3294
    %3807 = vmatpush.bf16.msra.mxu0 %v3290
    %3808 = vmatpush.bf16.msra.mxu0 %v3286
    %3809 = vmatpush.bf16.msra.mxu0 %v3282
    %3810 = vmatmul.bf16.gmra.mxu0 %v2084
    %v3811 = vpop.f32.mrf.mxu0
    %v3812 = vadd.f32 %v3799, %v3811
    %v3813 = vpop.f32.mrf.mxu0
    %3814 = vdwg.mxu0
    %3815 = vmatpush.bf16.msra.mxu0 %v3342
    %3816 = vmatpush.bf16.msra.mxu0 %v3338
    %3817 = vmatpush.bf16.msra.mxu0 %v3334
    %3818 = vmatpush.bf16.msra.mxu0 %v3330
    %3819 = vmatpush.bf16.msra.mxu0 %v3326
    %3820 = vmatpush.bf16.msra.mxu0 %v3322
    %3821 = vmatpush.bf16.msra.mxu0 %v3318
    %3822 = vmatpush.bf16.msra.mxu0 %v3314
    %3823 = vmatmul.bf16.gmra.mxu0 %v2085
    %v3824 = vpop.f32.mrf.mxu0
    %v3825 = vadd.f32 %v3812, %v3824
    %v3826 = vpop.f32.mrf.mxu0
    %3827 = vdwg.mxu0
    %3828 = vmatpush.bf16.msra.mxu0 %v3374
    %3829 = vmatpush.bf16.msra.mxu0 %v3370
    %3830 = vmatpush.bf16.msra.mxu0 %v3366
    %3831 = vmatpush.bf16.msra.mxu0 %v3362
    %3832 = vmatpush.bf16.msra.mxu0 %v3358
    %3833 = vmatpush.bf16.msra.mxu0 %v3354
    %3834 = vmatpush.bf16.msra.mxu0 %v3350
    %3835 = vmatpush.bf16.msra.mxu0 %v3346
    %3836 = vmatmul.bf16.gmra.mxu0 %v2086
    %v3837 = vpop.f32.mrf.mxu0
    %v3838 = vadd.f32 %v3825, %v3837
    %v3839 = vpop.f32.mrf.mxu0
    %3840 = vdwg.mxu0
    %3841 = vmatpush.bf16.msra.mxu0 %v3151
    %3842 = vmatpush.bf16.msra.mxu0 %v3147
    %3843 = vmatpush.bf16.msra.mxu0 %v3143
    %3844 = vmatpush.bf16.msra.mxu0 %v3139
    %3845 = vmatpush.bf16.msra.mxu0 %v3135
    %3846 = vmatpush.bf16.msra.mxu0 %v3131
    %3847 = vmatpush.bf16.msra.mxu0 %v3127
    %3848 = vmatpush.bf16.msra.mxu0 %v3123
    %3849 = vmatmul.bf16.gmra.mxu0 %v2079
    %v3850 = vpop.f32.mrf.mxu0
    %v3851 = vadd.f32 %v2347, %v3850
    %v3852 = vpop.f32.mrf.mxu0
    %3853 = vdwg.mxu0
    %3854 = vmatpush.bf16.msra.mxu0 %v3183
    %3855 = vmatpush.bf16.msra.mxu0 %v3179
    %3856 = vmatpush.bf16.msra.mxu0 %v3175
    %3857 = vmatpush.bf16.msra.mxu0 %v3171
    %3858 = vmatpush.bf16.msra.mxu0 %v3167
    %3859 = vmatpush.bf16.msra.mxu0 %v3163
    %3860 = vmatpush.bf16.msra.mxu0 %v3159
    %3861 = vmatpush.bf16.msra.mxu0 %v3155
    %3862 = vmatmul.bf16.gmra.mxu0 %v2080
    %v3863 = vpop.f32.mrf.mxu0
    %v3864 = vadd.f32 %v3851, %v3863
    %v3865 = vpop.f32.mrf.mxu0
    %3866 = vdwg.mxu0
    %3867 = vmatpush.bf16.msra.mxu0 %v3215
    %3868 = vmatpush.bf16.msra.mxu0 %v3211
    %3869 = vmatpush.bf16.msra.mxu0 %v3207
    %3870 = vmatpush.bf16.msra.mxu0 %v3203
    %3871 = vmatpush.bf16.msra.mxu0 %v3199
    %3872 = vmatpush.bf16.msra.mxu0 %v3195
    %3873 = vmatpush.bf16.msra.mxu0 %v3191
    %3874 = vmatpush.bf16.msra.mxu0 %v3187
    %3875 = vmatmul.bf16.gmra.mxu0 %v2081
    %v3876 = vpop.f32.mrf.mxu0
    %v3877 = vadd.f32 %v3864, %v3876
    %v3878 = vpop.f32.mrf.mxu0
    %3879 = vdwg.mxu0
    %3880 = vmatpush.bf16.msra.mxu0 %v3247
    %3881 = vmatpush.bf16.msra.mxu0 %v3243
    %3882 = vmatpush.bf16.msra.mxu0 %v3239
    %3883 = vmatpush.bf16.msra.mxu0 %v3235
    %3884 = vmatpush.bf16.msra.mxu0 %v3231
    %3885 = vmatpush.bf16.msra.mxu0 %v3227
    %3886 = vmatpush.bf16.msra.mxu0 %v3223
    %3887 = vmatpush.bf16.msra.mxu0 %v3219
    %3888 = vmatmul.bf16.gmra.mxu0 %v2082
    %v3889 = vpop.f32.mrf.mxu0
    %v3890 = vadd.f32 %v3877, %v3889
    %v3891 = vpop.f32.mrf.mxu0
    %3892 = vdwg.mxu0
    %3893 = vmatpush.bf16.msra.mxu0 %v3279
    %3894 = vmatpush.bf16.msra.mxu0 %v3275
    %3895 = vmatpush.bf16.msra.mxu0 %v3271
    %3896 = vmatpush.bf16.msra.mxu0 %v3267
    %3897 = vmatpush.bf16.msra.mxu0 %v3263
    %3898 = vmatpush.bf16.msra.mxu0 %v3259
    %3899 = vmatpush.bf16.msra.mxu0 %v3255
    %3900 = vmatpush.bf16.msra.mxu0 %v3251
    %3901 = vmatmul.bf16.gmra.mxu0 %v2083
    %v3902 = vpop.f32.mrf.mxu0
    %v3903 = vadd.f32 %v3890, %v3902
    %v3904 = vpop.f32.mrf.mxu0
    %3905 = vdwg.mxu0
    %3906 = vmatpush.bf16.msra.mxu0 %v3311
    %3907 = vmatpush.bf16.msra.mxu0 %v3307
    %3908 = vmatpush.bf16.msra.mxu0 %v3303
    %3909 = vmatpush.bf16.msra.mxu0 %v3299
    %3910 = vmatpush.bf16.msra.mxu0 %v3295
    %3911 = vmatpush.bf16.msra.mxu0 %v3291
    %3912 = vmatpush.bf16.msra.mxu0 %v3287
    %3913 = vmatpush.bf16.msra.mxu0 %v3283
    %3914 = vmatmul.bf16.gmra.mxu0 %v2084
    %v3915 = vpop.f32.mrf.mxu0
    %v3916 = vadd.f32 %v3903, %v3915
    %v3917 = vpop.f32.mrf.mxu0
    %3918 = vdwg.mxu0
    %3919 = vmatpush.bf16.msra.mxu0 %v3343
    %3920 = vmatpush.bf16.msra.mxu0 %v3339
    %3921 = vmatpush.bf16.msra.mxu0 %v3335
    %3922 = vmatpush.bf16.msra.mxu0 %v3331
    %3923 = vmatpush.bf16.msra.mxu0 %v3327
    %3924 = vmatpush.bf16.msra.mxu0 %v3323
    %3925 = vmatpush.bf16.msra.mxu0 %v3319
    %3926 = vmatpush.bf16.msra.mxu0 %v3315
    %3927 = vmatmul.bf16.gmra.mxu0 %v2085
    %v3928 = vpop.f32.mrf.mxu0
    %v3929 = vadd.f32 %v3916, %v3928
    %v3930 = vpop.f32.mrf.mxu0
    %3931 = vdwg.mxu0
    %3932 = vmatpush.bf16.msra.mxu0 %v3375
    %3933 = vmatpush.bf16.msra.mxu0 %v3371
    %3934 = vmatpush.bf16.msra.mxu0 %v3367
    %3935 = vmatpush.bf16.msra.mxu0 %v3363
    %3936 = vmatpush.bf16.msra.mxu0 %v3359
    %3937 = vmatpush.bf16.msra.mxu0 %v3355
    %3938 = vmatpush.bf16.msra.mxu0 %v3351
    %3939 = vmatpush.bf16.msra.mxu0 %v3347
    %3940 = vmatmul.bf16.gmra.mxu0 %v2086
    %v3941 = vpop.f32.mrf.mxu0
    %v3942 = vadd.f32 %v3929, %v3941
    %v3943 = vpop.f32.mrf.mxu0
    %3944 = vdwg.mxu0
    %3945 = vmatpush.bf16.msra.mxu0 %v3152
    %3946 = vmatpush.bf16.msra.mxu0 %v3148
    %3947 = vmatpush.bf16.msra.mxu0 %v3144
    %3948 = vmatpush.bf16.msra.mxu0 %v3140
    %3949 = vmatpush.bf16.msra.mxu0 %v3136
    %3950 = vmatpush.bf16.msra.mxu0 %v3132
    %3951 = vmatpush.bf16.msra.mxu0 %v3128
    %3952 = vmatpush.bf16.msra.mxu0 %v3124
    %3953 = vmatmul.bf16.gmra.mxu0 %v2079
    %v3954 = vpop.f32.mrf.mxu0
    %v3955 = vadd.f32 %v2348, %v3954
    %v3956 = vpop.f32.mrf.mxu0
    %3957 = vdwg.mxu0
    %3958 = vmatpush.bf16.msra.mxu0 %v3184
    %3959 = vmatpush.bf16.msra.mxu0 %v3180
    %3960 = vmatpush.bf16.msra.mxu0 %v3176
    %3961 = vmatpush.bf16.msra.mxu0 %v3172
    %3962 = vmatpush.bf16.msra.mxu0 %v3168
    %3963 = vmatpush.bf16.msra.mxu0 %v3164
    %3964 = vmatpush.bf16.msra.mxu0 %v3160
    %3965 = vmatpush.bf16.msra.mxu0 %v3156
    %3966 = vmatmul.bf16.gmra.mxu0 %v2080
    %v3967 = vpop.f32.mrf.mxu0
    %v3968 = vadd.f32 %v3955, %v3967
    %v3969 = vpop.f32.mrf.mxu0
    %3970 = vdwg.mxu0
    %3971 = vmatpush.bf16.msra.mxu0 %v3216
    %3972 = vmatpush.bf16.msra.mxu0 %v3212
    %3973 = vmatpush.bf16.msra.mxu0 %v3208
    %3974 = vmatpush.bf16.msra.mxu0 %v3204
    %3975 = vmatpush.bf16.msra.mxu0 %v3200
    %3976 = vmatpush.bf16.msra.mxu0 %v3196
    %3977 = vmatpush.bf16.msra.mxu0 %v3192
    %3978 = vmatpush.bf16.msra.mxu0 %v3188
    %3979 = vmatmul.bf16.gmra.mxu0 %v2081
    %v3980 = vpop.f32.mrf.mxu0
    %v3981 = vadd.f32 %v3968, %v3980
    %v3982 = vpop.f32.mrf.mxu0
    %3983 = vdwg.mxu0
    %3984 = vmatpush.bf16.msra.mxu0 %v3248
    %3985 = vmatpush.bf16.msra.mxu0 %v3244
    %3986 = vmatpush.bf16.msra.mxu0 %v3240
    %3987 = vmatpush.bf16.msra.mxu0 %v3236
    %3988 = vmatpush.bf16.msra.mxu0 %v3232
    %3989 = vmatpush.bf16.msra.mxu0 %v3228
    %3990 = vmatpush.bf16.msra.mxu0 %v3224
    %3991 = vmatpush.bf16.msra.mxu0 %v3220
    %3992 = vmatmul.bf16.gmra.mxu0 %v2082
    %v3993 = vpop.f32.mrf.mxu0
    %v3994 = vadd.f32 %v3981, %v3993
    %v3995 = vpop.f32.mrf.mxu0
    %3996 = vdwg.mxu0
    %3997 = vmatpush.bf16.msra.mxu0 %v3280
    %3998 = vmatpush.bf16.msra.mxu0 %v3276
    %3999 = vmatpush.bf16.msra.mxu0 %v3272
    %4000 = vmatpush.bf16.msra.mxu0 %v3268
    %4001 = vmatpush.bf16.msra.mxu0 %v3264
    %4002 = vmatpush.bf16.msra.mxu0 %v3260
    %4003 = vmatpush.bf16.msra.mxu0 %v3256
    %4004 = vmatpush.bf16.msra.mxu0 %v3252
    %4005 = vmatmul.bf16.gmra.mxu0 %v2083
    %v4006 = vpop.f32.mrf.mxu0
    %v4007 = vadd.f32 %v3994, %v4006
    %v4008 = vpop.f32.mrf.mxu0
    %4009 = vdwg.mxu0
    %4010 = vmatpush.bf16.msra.mxu0 %v3312
    %4011 = vmatpush.bf16.msra.mxu0 %v3308
    %4012 = vmatpush.bf16.msra.mxu0 %v3304
    %4013 = vmatpush.bf16.msra.mxu0 %v3300
    %4014 = vmatpush.bf16.msra.mxu0 %v3296
    %4015 = vmatpush.bf16.msra.mxu0 %v3292
    %4016 = vmatpush.bf16.msra.mxu0 %v3288
    %4017 = vmatpush.bf16.msra.mxu0 %v3284
    %4018 = vmatmul.bf16.gmra.mxu0 %v2084
    %v4019 = vpop.f32.mrf.mxu0
    %v4020 = vadd.f32 %v4007, %v4019
    %v4021 = vpop.f32.mrf.mxu0
    %4022 = vdwg.mxu0
    %4023 = vmatpush.bf16.msra.mxu0 %v3344
    %4024 = vmatpush.bf16.msra.mxu0 %v3340
    %4025 = vmatpush.bf16.msra.mxu0 %v3336
    %4026 = vmatpush.bf16.msra.mxu0 %v3332
    %4027 = vmatpush.bf16.msra.mxu0 %v3328
    %4028 = vmatpush.bf16.msra.mxu0 %v3324
    %4029 = vmatpush.bf16.msra.mxu0 %v3320
    %4030 = vmatpush.bf16.msra.mxu0 %v3316
    %4031 = vmatmul.bf16.gmra.mxu0 %v2085
    %v4032 = vpop.f32.mrf.mxu0
    %v4033 = vadd.f32 %v4020, %v4032
    %v4034 = vpop.f32.mrf.mxu0
    %4035 = vdwg.mxu0
    %4036 = vmatpush.bf16.msra.mxu0 %v3376
    %4037 = vmatpush.bf16.msra.mxu0 %v3372
    %4038 = vmatpush.bf16.msra.mxu0 %v3368
    %4039 = vmatpush.bf16.msra.mxu0 %v3364
    %4040 = vmatpush.bf16.msra.mxu0 %v3360
    %4041 = vmatpush.bf16.msra.mxu0 %v3356
    %4042 = vmatpush.bf16.msra.mxu0 %v3352
    %4043 = vmatpush.bf16.msra.mxu0 %v3348
    %4044 = vmatmul.bf16.gmra.mxu0 %v2086
    %v4045 = vpop.f32.mrf.mxu0
    %v4046 = vadd.f32 %v4033, %v4045
    %v4047 = vpop.f32.mrf.mxu0
    %4048 = vdwg.mxu0
    %v4049 = vmax.f32 %v3734, 0.0
    %v4050 = vmax.f32 %v3838, 0.0
    %v4051 = vmax.f32 %v3942, 0.0
    %v4052 = vmax.f32 %v4046, 0.0
    %v4053 = vadd.f32 %v93, %v4049
    %v4054 = vadd.f32 %v94, %v4050
    %v4055 = vadd.f32 %v95, %v4051
    %v4056 = vadd.f32 %v96, %v4052
    %4057 = vst [vmem:[#allocation11] sm:$0xff] %v4053
    %4058 = vst [vmem:[#allocation11 + $0x8] sm:$0xff] %v4054
    %4059 = vst [vmem:[#allocation11 + $0x10] sm:$0xff] %v4055
    %4060 = vst [vmem:[#allocation11 + $0x18] sm:$0xff] %v4056
    // Predicated region
    $region42: #{tpu_custom_call.1} parent=1 // pred_check
      _
    $region43: #{tpu_custom_call.1} parent=1 // pred_check_branch
      %4062 = sbr.rel (0) target = $region45
    $region44: #{tpu_custom_call.1} parent=1 // pred_region
      %4064 = vsyncadd [#allocation4], 0
      %s4066 = sshll.u32 [#allocation11], 4
      %s4067 = int_to_ptr.vmem [resolvable:$true] %s4066
      %s4068 = sshll.u32 %s5, 4
      %s4069 = int_to_ptr.hbm [resolvable:$true] %s4068
      %4071 = dma.vmem_to_hbm [thread:$0]  %s4067, 512, %s4069, [#allocation4]
    $region45: #{tpu_custom_call.1} parent=1 // pred_fallthru
      _
    // Predicated region
    $region46: #{tpu_custom_call.1} parent=1 // pred_check
      _
    $region47: #{tpu_custom_call.1} parent=1 // pred_check_branch
      %4073 = sbr.rel (0) target = $region49
    $region48: #{tpu_custom_call.1} parent=1 // pred_region
      %4075 = dma.done [#allocation4], 512
    $region49: #{tpu_custom_call.1} parent=1 // pred_fallthru
      _
    %4076 = vsyncpa [#allocation3], 1
    %4077 = vsyncpa [#allocation6], 1
    %4078 = vsyncpa [#allocation9], 1
    %4079 = vsyncpa [#allocation4], 1

</llo_original>
